<compile_context>
chip_gen: v7x
topology: tpu7x:2x2x1
jax: 0.10.0
libtpu: 0.0.40
codegen_flags: <defaults>
</compile_context>

<pallas_src>
import functools
import math

import jax
import jax.numpy as jnp
from jax.experimental import pallas as pl
from jax.experimental.pallas import tpu as pltpu

EPS = 1e-5
# MXU operand dtype; accumulation is f32 via preferred_element_type.
COMPUTE_DTYPE = jnp.bfloat16


def _mx(a):
    return a.astype(COMPUTE_DTYPE)


def _full_spec(shape):
    """BlockSpec for an operand that is identical for every grid step."""
    zero = (0,) * len(shape)
    return pl.BlockSpec(shape, lambda i: zero)


# ---------------------------------------------------------------------------
# Fused encoder -> GCNx2 -> temporal-conv x2 -> aggregator kernel
# ---------------------------------------------------------------------------
def _graph_temporal_kernel(
    x_ref, adj_ref,
    ew1_ref, ebs_ref, ebb_ref, ew2_ref, eb2_ref,
    g1rel_ref, g1root_ref, bn1s_ref, bn1b_ref,
    g2rel_ref, g2root_ref, bn2s_ref, bn2b_ref,
    c1w_ref, c1b_ref, bn3s_ref, bn3b_ref,
    c2w_ref, c2b_ref, bn4s_ref, bn4b_ref,
    aggw_ref, aggb_ref,
    out_ref,
    pad_ref,                       # VMEM scratch (s + K - 1, n, c)
    *, s, n, c, K):
    """Processes one batch element end-to-end (rows ordered (seq, node))."""
    f32 = jnp.float32
    P = K // 2
    nd = x_ref.shape[-1]

    # -------- NodeEncoder: Linear(no bias) -> ReLU -> BN -> Linear(+bias) ----
    xe = x_ref[0].reshape(s * n, nd)
    h = jnp.dot(_mx(xe), _mx(ew1_ref[...]), preferred_element_type=f32)
    h = jnp.maximum(h, 0.0) * ebs_ref[...] + ebb_ref[...]
    h = jnp.dot(_mx(h), _mx(ew2_ref[...]), preferred_element_type=f32) + eb2_ref[...]
    # h: (s*n, c)

    # -------- DenseGraphConv(mean, bias=False) x2 + ReLU + BN(node_cnt) ------
    adj = adj_ref[0]                                          # (s, n, n)
    adj_c = _mx(adj)
    # degree computed once, shared by both GCN layers (clamp(min=1))
    inv_deg = 1.0 / jnp.maximum(jnp.sum(adj, axis=-1, keepdims=True), 1.0)

    def gcn(hf, wrel_ref, wroot_ref, bns_ref, bnb_ref):
        agg = jnp.einsum('gij,gjc->gic', adj_c, _mx(hf.reshape(s, n, c)),
                         preferred_element_type=f32) * inv_deg
        out = (jnp.dot(_mx(agg.reshape(s * n, c)), _mx(wrel_ref[...]),
                       preferred_element_type=f32)
               + jnp.dot(_mx(hf), _mx(wroot_ref[...]),
                         preferred_element_type=f32))
        out = jnp.maximum(out, 0.0)                           # ReLU
        return out * bns_ref[...] + bnb_ref[...]              # BN over nodes (rows)

    h = gcn(h, g1rel_ref, g1root_ref, bn1s_ref, bn1b_ref)
    h = gcn(h, g2rel_ref, g2root_ref, bn2s_ref, bn2b_ref)

    # -------- temporal Conv1d(k=K, same padding) x2, channels-last -----------
    pad_ref[...] = jnp.zeros_like(pad_ref)                    # zero "same" pad

    def conv(hf, w_ref, b_ref, bns_ref, bnb_ref):
        pad_ref[P:P + s] = hf.reshape(s, n, c)
        acc = jnp.zeros((s * n, c), f32)
        for k in range(K):                                    # static unrolled taps
            acc = acc + jnp.dot(_mx(pad_ref[k:k + s].reshape(s * n, c)),
                                _mx(w_ref[k]),
                                preferred_element_type=f32)
        acc = jnp.maximum(acc + b_ref[...], 0.0)              # bias + ReLU
        return acc * bns_ref[...] + bnb_ref[...]              # BN over channels

    h = conv(h, c1w_ref, c1b_ref, bn3s_ref, bn3b_ref)
    h = conv(h, c2w_ref, c2b_ref, bn4s_ref, bn4b_ref)

    # -------- aggregator Conv1d(seq_len -> pred_len, kernel=1) ---------------
    # folded into one matmul with kron(W_agg, I_n): (pred*n, s*n) @ (s*n, c)
    out = jnp.dot(_mx(aggw_ref[...]), _mx(h), preferred_element_type=f32) + aggb_ref[...]
    out_ref[0] = out                                          # (pred*n, c)


def graph_temporal_fused(x, adj, p, *, kernel_size):
    b, s, n, nd = x.shape
    c = p["enc_w2_t"].shape[1]
    pred_n = p["agg_w_big"].shape[0]

    weights = [
        p["enc_w1_t"], p["enc_bn_scale"], p["enc_bn_shift"], p["enc_w2_t"], p["enc_b2"],
        p["gcn1_wrel_t"], p["gcn1_wroot_t"], p["bn1_scale_rows"], p["bn1_shift_rows"],
        p["gcn2_wrel_t"], p["gcn2_wroot_t"], p["bn2_scale_rows"], p["bn2_shift_rows"],
        p["conv1_w"], p["conv1_b"], p["bn3_scale"], p["bn3_shift"],
        p["conv2_w"], p["conv2_b"], p["bn4_scale"], p["bn4_shift"],
        p["agg_w_big"], p["agg_b_big"],
    ]
    in_specs = ([pl.BlockSpec((1, s, n, nd), lambda i: (i, 0, 0, 0)),
                 pl.BlockSpec((1, s, n, n), lambda i: (i, 0, 0, 0))]
                + [_full_spec(w.shape) for w in weights])

    return pl.pallas_call(
        functools.partial(_graph_temporal_kernel, s=s, n=n, c=c, K=kernel_size),
        grid=(b,),
        in_specs=in_specs,
        out_specs=pl.BlockSpec((1, pred_n, c), lambda i: (i, 0, 0)),
        out_shape=jax.ShapeDtypeStruct((b, pred_n, c), jnp.float32),
        scratch_shapes=[pltpu.VMEM((s + kernel_size - 1, n, c), jnp.float32)],
        compiler_params=pltpu.CompilerParams(dimension_semantics=("parallel",)),
    )(x, adj, *weights)


# ---------------------------------------------------------------------------
# NodeDecoder: fused Linear(no bias) -> ReLU -> BN -> Linear(+bias)
# ---------------------------------------------------------------------------
def _mlp2_kernel(x_ref, w1_ref, bns_ref, bnb_ref, w2_ref, b2_ref, o_ref):
    f32 = jnp.float32
    h = jnp.dot(_mx(x_ref[...]), _mx(w1_ref[...]), preferred_element_type=f32)
    h = jnp.maximum(h, 0.0) * bns_ref[...] + bnb_ref[...]
    o_ref[...] = (jnp.dot(_mx(h), _mx(w2_ref[...]), preferred_element_type=f32)
                  + b2_ref[...])


def mlp2_fused(x, w1, bn_scale, bn_shift, w2, b2, *, block_rows=512):
    M, Kin = x.shape
    N = w2.shape[1]
    tm = M if M <= block_rows else block_rows       # row-tiled when scaled up
    Mp = -(-M // tm) * tm
    xp = x if Mp == M else jnp.pad(x, ((0, Mp - M), (0, 0)))
    out = pl.pallas_call(
        _mlp2_kernel,
        grid=(Mp // tm,),
        in_specs=[pl.BlockSpec((tm, Kin), lambda i: (i, 0)),
                  _full_spec(w1.shape), _full_spec(bn_scale.shape),
                  _full_spec(bn_shift.shape), _full_spec(w2.shape),
                  _full_spec(b2.shape)],
        out_specs=pl.BlockSpec((tm, N), lambda i: (i, 0)),
        out_shape=jax.ShapeDtypeStruct((Mp, N), jnp.float32),
        compiler_params=pltpu.CompilerParams(dimension_semantics=("parallel",)),
    )(xp, w1, bn_scale, bn_shift, w2, b2)
    return out if Mp == M else out[:M]


# ---------------------------------------------------------------------------
# Parameter initialization (deterministic, PyTorch-style uniform fan-in init)
# ---------------------------------------------------------------------------
def _uinit(key, shape, fan_in):
    bound = 1.0 / math.sqrt(fan_in)
    return jax.random.uniform(key, shape, jnp.float32, -bound, bound)


def _bn_eval(num_feat):
    # PyTorch-default eval-mode BN: gamma=1, beta=0, running_mean=0, running_var=1
    scale = jnp.full((1, num_feat), 1.0 / math.sqrt(1.0 + EPS), jnp.float32)
    shift = jnp.zeros((1, num_feat), jnp.float32)
    return scale, shift


def init_params(key, *, node_dim, node_hidden_dim, node_latent_dim,
                node_cnt, seq_len, pred_len, kernel_size=5):
    ks = list(jax.random.split(key, 16))
    c, n, s = node_latent_dim, node_cnt, seq_len
    p = {}

    # NodeEncoder (num_layers=2)
    p["enc_w1_t"] = _uinit(ks[0], (node_dim, node_hidden_dim), node_dim)
    p["enc_bn_scale"], p["enc_bn_shift"] = _bn_eval(node_hidden_dim)
    p["enc_w2_t"] = _uinit(ks[1], (node_hidden_dim, c), node_hidden_dim)
    p["enc_b2"] = _uinit(ks[2], (1, c), node_hidden_dim)

    # GraphTemporalConv: DenseGraphConv x2 (no bias) + BatchNorm1d(node_cnt) x2
    p["gcn1_wrel_t"] = _uinit(ks[3], (c, c), c)
    p["gcn1_wroot_t"] = _uinit(ks[4], (c, c), c)
    bns, bnb = _bn_eval(n)
    p["bn1_scale_rows"] = jnp.tile(bns[0], (s,))[:, None]       # (s*n, 1)
    p["bn1_shift_rows"] = jnp.tile(bnb[0], (s,))[:, None]
    p["gcn2_wrel_t"] = _uinit(ks[5], (c, c), c)
    p["gcn2_wroot_t"] = _uinit(ks[6], (c, c), c)
    bns, bnb = _bn_eval(n)
    p["bn2_scale_rows"] = jnp.tile(bns[0], (s,))[:, None]
    p["bn2_shift_rows"] = jnp.tile(bnb[0], (s,))[:, None]

    # Temporal convs: Conv1d(c, c, k, pad=k//2) x2 + BatchNorm1d(c) x2
    fan = c * kernel_size
    p["conv1_w"] = _uinit(ks[7], (kernel_size, c, c), fan)       # (K, c_in, c_out)
    p["conv1_b"] = _uinit(ks[8], (1, c), fan)
    p["bn3_scale"], p["bn3_shift"] = _bn_eval(c)
    p["conv2_w"] = _uinit(ks[9], (kernel_size, c, c), fan)
    p["conv2_b"] = _uinit(ks[10], (1, c), fan)
    p["bn4_scale"], p["bn4_shift"] = _bn_eval(c)

    # Aggregator Conv1d(seq_len -> pred_len, kernel=1), folded with kron(W, I_n)
    agg_w = _uinit(ks[11], (pred_len, s), s)
    agg_b = _uinit(ks[12], (pred_len,), s)
    p["agg_w_big"] = jnp.kron(agg_w, jnp.eye(n, dtype=jnp.float32))  # (pred*n, s*n)
    p["agg_b_big"] = jnp.repeat(agg_b, n)[:, None]                   # (pred*n, 1)

    # NodeDecoder (num_layers=2)
    p["dec_w1_t"] = _uinit(ks[13], (c, node_hidden_dim), c)
    p["dec_bn_scale"], p["dec_bn_shift"] = _bn_eval(node_hidden_dim)
    p["dec_w2_t"] = _uinit(ks[14], (node_hidden_dim, node_dim), node_hidden_dim)
    p["dec_b2"] = _uinit(ks[15], (1, node_dim), node_hidden_dim)
    return p


# ---------------------------------------------------------------------------
# Forward pass
# ---------------------------------------------------------------------------
def weighted_graph_model_forward(params, x, adj, *, kernel_size=5):
    b, s, n, node_dim = x.shape
    p = params
    c = p["enc_w2_t"].shape[1]
    pred = p["agg_w_big"].shape[0] // n

    # encoder + GCNx2 + temporal-conv x2 + aggregator, one fused kernel
    agg = graph_temporal_fused(x, adj, p, kernel_size=kernel_size)  # (b, pred*n, c)

    # PyTorch: x = aggregator_out.permute(0, 2, 1).contiguous().view(b, -1, n, c)
    x8 = agg.reshape(b, pred, n, c).transpose(0, 2, 3, 1).reshape(b, pred, n, c)

    # NodeDecoder
    h = x8.reshape(b * pred * n, c)
    recon = mlp2_fused(h, p["dec_w1_t"], p["dec_bn_scale"], p["dec_bn_shift"],
                       p["dec_w2_t"], p["dec_b2"])
    return x8, recon.reshape(b, pred, n, node_dim)


# ---------------------------------------------------------------------------
if __name__ == "__main__":
    b, s, n = 2, 8, 8
    node_dim, node_hidden_dim, node_latent_dim, pred_len = 16, 32, 32, 4

    key = jax.random.PRNGKey(0)
    kx, kadj, kp = jax.random.split(key, 3)

    x = jax.random.normal(kx, (b, s, n, node_dim), jnp.float32)
    # TODO(synk): AdjacencyModel source is not provided in the reference; a
    # deterministic synthetic weighted adjacency (b, s, n, n) is used instead.
    adj = jax.random.uniform(kadj, (b, s, n, n), jnp.float32)

    params = init_params(
        kp, node_dim=node_dim, node_hidden_dim=node_hidden_dim,
        node_latent_dim=node_latent_dim, node_cnt=n,
        seq_len=s, pred_len=pred_len)

    fwd = jax.jit(functools.partial(weighted_graph_model_forward, params))
    out, recon = fwd(x, adj)
    jax.block_until_ready((out, recon))

    assert out.shape == (b, pred_len, n, node_latent_dim), out.shape
    assert recon.shape == (b, pred_len, n, node_dim), recon.shape
    assert bool(jnp.all(jnp.isfinite(out))) and bool(jnp.all(jnp.isfinite(recon)))
    print("KERNEL_OK")
</pallas_src>

<mosaic_0001>
module attributes {stable_mosaic.version = 11 : i64} {
  func.func @_graph_temporal_kernel(%arg0: i32, %arg1: memref<1x8x8x16xf32, #tpu.memory_space<vmem>>, %arg2: memref<1x8x8x8xf32, #tpu.memory_space<vmem>>, %arg3: memref<16x32xf32, #tpu.memory_space<vmem>>, %arg4: memref<1x32xf32, #tpu.memory_space<vmem>>, %arg5: memref<1x32xf32, #tpu.memory_space<vmem>>, %arg6: memref<32x32xf32, #tpu.memory_space<vmem>>, %arg7: memref<1x32xf32, #tpu.memory_space<vmem>>, %arg8: memref<32x32xf32, #tpu.memory_space<vmem>>, %arg9: memref<32x32xf32, #tpu.memory_space<vmem>>, %arg10: memref<64x1xf32, #tpu.memory_space<vmem>>, %arg11: memref<64x1xf32, #tpu.memory_space<vmem>>, %arg12: memref<32x32xf32, #tpu.memory_space<vmem>>, %arg13: memref<32x32xf32, #tpu.memory_space<vmem>>, %arg14: memref<64x1xf32, #tpu.memory_space<vmem>>, %arg15: memref<64x1xf32, #tpu.memory_space<vmem>>, %arg16: memref<5x32x32xf32, #tpu.memory_space<vmem>>, %arg17: memref<1x32xf32, #tpu.memory_space<vmem>>, %arg18: memref<1x32xf32, #tpu.memory_space<vmem>>, %arg19: memref<1x32xf32, #tpu.memory_space<vmem>>, %arg20: memref<5x32x32xf32, #tpu.memory_space<vmem>>, %arg21: memref<1x32xf32, #tpu.memory_space<vmem>>, %arg22: memref<1x32xf32, #tpu.memory_space<vmem>>, %arg23: memref<1x32xf32, #tpu.memory_space<vmem>>, %arg24: memref<32x64xf32, #tpu.memory_space<vmem>>, %arg25: memref<32x1xf32, #tpu.memory_space<vmem>>, %arg26: memref<1x32x32xf32, #tpu.memory_space<vmem>>, %arg27: memref<12x8x32xf32, #tpu.memory_space<vmem>>) attributes {dimension_semantics = [#tpu.dimension_semantics<parallel>], iteration_bounds = array<i64: 2>, scalar_prefetch = 0 : i64, scratch_operands = 1 : i64, tpu.core_type = #tpu.core_type<tc>, window_params = [{transform_indices = @transform_0, window_bounds = array<i64: 1, 8, 8, 16>}, {transform_indices = @transform_1, window_bounds = array<i64: 1, 8, 8, 8>}, {pipeline_mode = #tpu.pipeline_mode<synchronous>, transform_indices = @transform_2, window_bounds = array<i64: 16, 32>}, {pipeline_mode = #tpu.pipeline_mode<synchronous>, transform_indices = @transform_3, window_bounds = array<i64: 1, 32>}, {pipeline_mode = #tpu.pipeline_mode<synchronous>, transform_indices = @transform_4, window_bounds = array<i64: 1, 32>}, {pipeline_mode = #tpu.pipeline_mode<synchronous>, transform_indices = @transform_5, window_bounds = array<i64: 32, 32>}, {pipeline_mode = #tpu.pipeline_mode<synchronous>, transform_indices = @transform_6, window_bounds = array<i64: 1, 32>}, {pipeline_mode = #tpu.pipeline_mode<synchronous>, transform_indices = @transform_7, window_bounds = array<i64: 32, 32>}, {pipeline_mode = #tpu.pipeline_mode<synchronous>, transform_indices = @transform_8, window_bounds = array<i64: 32, 32>}, {pipeline_mode = #tpu.pipeline_mode<synchronous>, transform_indices = @transform_9, window_bounds = array<i64: 64, 1>}, {pipeline_mode = #tpu.pipeline_mode<synchronous>, transform_indices = @transform_10, window_bounds = array<i64: 64, 1>}, {pipeline_mode = #tpu.pipeline_mode<synchronous>, transform_indices = @transform_11, window_bounds = array<i64: 32, 32>}, {pipeline_mode = #tpu.pipeline_mode<synchronous>, transform_indices = @transform_12, window_bounds = array<i64: 32, 32>}, {pipeline_mode = #tpu.pipeline_mode<synchronous>, transform_indices = @transform_13, window_bounds = array<i64: 64, 1>}, {pipeline_mode = #tpu.pipeline_mode<synchronous>, transform_indices = @transform_14, window_bounds = array<i64: 64, 1>}, {pipeline_mode = #tpu.pipeline_mode<synchronous>, transform_indices = @transform_15, window_bounds = array<i64: 5, 32, 32>}, {pipeline_mode = #tpu.pipeline_mode<synchronous>, transform_indices = @transform_16, window_bounds = array<i64: 1, 32>}, {pipeline_mode = #tpu.pipeline_mode<synchronous>, transform_indices = @transform_17, window_bounds = array<i64: 1, 32>}, {pipeline_mode = #tpu.pipeline_mode<synchronous>, transform_indices = @transform_18, window_bounds = array<i64: 1, 32>}, {pipeline_mode = #tpu.pipeline_mode<synchronous>, transform_indices = @transform_19, window_bounds = array<i64: 5, 32, 32>}, {pipeline_mode = #tpu.pipeline_mode<synchronous>, transform_indices = @transform_20, window_bounds = array<i64: 1, 32>}, {pipeline_mode = #tpu.pipeline_mode<synchronous>, transform_indices = @transform_21, window_bounds = array<i64: 1, 32>}, {pipeline_mode = #tpu.pipeline_mode<synchronous>, transform_indices = @transform_22, window_bounds = array<i64: 1, 32>}, {pipeline_mode = #tpu.pipeline_mode<synchronous>, transform_indices = @transform_23, window_bounds = array<i64: 32, 64>}, {pipeline_mode = #tpu.pipeline_mode<synchronous>, transform_indices = @transform_24, window_bounds = array<i64: 32, 1>}, {transform_indices = @transform_25, window_bounds = array<i64: 1, 32, 32>}]} {
    %c0 = arith.constant 0 : index
    %c0_0 = arith.constant 0 : index
    %c0_1 = arith.constant 0 : index
    %c0_2 = arith.constant 0 : index
    %0 = vector.load %arg1[%c0, %c0_0, %c0_1, %c0_2] : memref<1x8x8x16xf32, #tpu.memory_space<vmem>>, vector<1x8x8x16xf32>
    %1 = vector.shape_cast %0 : vector<1x8x8x16xf32> to vector<8x8x16xf32>
    %2 = vector.shape_cast %1 : vector<8x8x16xf32> to vector<64x16xf32>
    %3 = arith.truncf %2 : vector<64x16xf32> to vector<64x16xbf16>
    %c0_3 = arith.constant 0 : index
    %c0_4 = arith.constant 0 : index
    %4 = vector.load %arg3[%c0_3, %c0_4] : memref<16x32xf32, #tpu.memory_space<vmem>>, vector<16x32xf32>
    %5 = arith.truncf %4 : vector<16x32xf32> to vector<16x32xbf16>
    %cst = arith.constant dense<0.000000e+00> : vector<64x32xf32>
    %6 = tpu.matmul %3, %5, %cst {dimension_numbers = #tpu.dot_dimension_numbers<[1], [0], [0], [1], [0, 0, 1, 1], [], []>} : vector<64x16xbf16>, vector<16x32xbf16>, vector<64x32xf32> -> vector<64x32xf32>
    %cst_5 = arith.constant 0.000000e+00 : f32
    %7 = vector.broadcast %cst_5 : f32 to vector<64x32xf32>
    %8 = arith.maximumf %6, %7 : vector<64x32xf32>
    %c0_6 = arith.constant 0 : index
    %c0_7 = arith.constant 0 : index
    %9 = vector.load %arg4[%c0_6, %c0_7] : memref<1x32xf32, #tpu.memory_space<vmem>>, vector<1x32xf32>
    %10 = vector.broadcast %9 : vector<1x32xf32> to vector<64x32xf32>
    %11 = arith.mulf %8, %10 : vector<64x32xf32>
    %c0_8 = arith.constant 0 : index
    %c0_9 = arith.constant 0 : index
    %12 = vector.load %arg5[%c0_8, %c0_9] : memref<1x32xf32, #tpu.memory_space<vmem>>, vector<1x32xf32>
    %13 = vector.broadcast %12 : vector<1x32xf32> to vector<64x32xf32>
    %14 = arith.addf %11, %13 : vector<64x32xf32>
    %15 = arith.truncf %14 : vector<64x32xf32> to vector<64x32xbf16>
    %c0_10 = arith.constant 0 : index
    %c0_11 = arith.constant 0 : index
    %16 = vector.load %arg6[%c0_10, %c0_11] : memref<32x32xf32, #tpu.memory_space<vmem>>, vector<32x32xf32>
    %17 = arith.truncf %16 : vector<32x32xf32> to vector<32x32xbf16>
    %cst_12 = arith.constant dense<0.000000e+00> : vector<64x32xf32>
    %18 = tpu.matmul %15, %17, %cst_12 {dimension_numbers = #tpu.dot_dimension_numbers<[1], [0], [0], [1], [0, 0, 1, 1], [], []>} : vector<64x32xbf16>, vector<32x32xbf16>, vector<64x32xf32> -> vector<64x32xf32>
    %c0_13 = arith.constant 0 : index
    %c0_14 = arith.constant 0 : index
    %19 = vector.load %arg7[%c0_13, %c0_14] : memref<1x32xf32, #tpu.memory_space<vmem>>, vector<1x32xf32>
    %20 = vector.broadcast %19 : vector<1x32xf32> to vector<64x32xf32>
    %21 = arith.addf %18, %20 : vector<64x32xf32>
    %c0_15 = arith.constant 0 : index
    %c0_16 = arith.constant 0 : index
    %c0_17 = arith.constant 0 : index
    %c0_18 = arith.constant 0 : index
    %22 = vector.load %arg2[%c0_15, %c0_16, %c0_17, %c0_18] : memref<1x8x8x8xf32, #tpu.memory_space<vmem>>, vector<1x8x8x8xf32>
    %23 = vector.shape_cast %22 : vector<1x8x8x8xf32> to vector<8x8x8xf32>
    %24 = arith.truncf %23 : vector<8x8x8xf32> to vector<8x8x8xbf16>
    %cst_19 = arith.constant dense<0.000000e+00> : vector<8x8xf32>
    %25 = vector.multi_reduction <add>, %23, %cst_19 [2] : vector<8x8x8xf32> to vector<8x8xf32>
    %26 = vector.shape_cast %25 : vector<8x8xf32> to vector<8x8x1xf32>
    %cst_20 = arith.constant 1.000000e+00 : f32
    %27 = vector.broadcast %cst_20 : f32 to vector<8x8x1xf32>
    %28 = arith.maximumf %26, %27 : vector<8x8x1xf32>
    %cst_21 = arith.constant 1.000000e+00 : f32
    %29 = vector.broadcast %cst_21 : f32 to vector<8x8x1xf32>
    %30 = arith.divf %29, %28 : vector<8x8x1xf32>
    %31 = vector.shape_cast %21 : vector<64x32xf32> to vector<8x8x32xf32>
    %32 = arith.truncf %31 : vector<8x8x32xf32> to vector<8x8x32xbf16>
    "tpu.trace_start"() <{level = 10 : i32, message = "gij,gjc->gic"}> : () -> ()
    %cst_22 = arith.constant dense<0.000000e+00> : vector<8x8x32xf32>
    %33 = tpu.matmul %24, %32, %cst_22 {dimension_numbers = #tpu.dot_dimension_numbers<[2], [1], [1], [2], [0, 0, 0, 1, 1, 2], [0], [0]>} : vector<8x8x8xbf16>, vector<8x8x32xbf16>, vector<8x8x32xf32> -> vector<8x8x32xf32>
    "tpu.trace_stop"() : () -> ()
    %34 = vector.broadcast %30 : vector<8x8x1xf32> to vector<8x8x32xf32>
    %35 = arith.mulf %33, %34 : vector<8x8x32xf32>
    %36 = vector.shape_cast %35 : vector<8x8x32xf32> to vector<64x32xf32>
    %37 = arith.truncf %36 : vector<64x32xf32> to vector<64x32xbf16>
    %c0_23 = arith.constant 0 : index
    %c0_24 = arith.constant 0 : index
    %38 = vector.load %arg8[%c0_23, %c0_24] : memref<32x32xf32, #tpu.memory_space<vmem>>, vector<32x32xf32>
    %39 = arith.truncf %38 : vector<32x32xf32> to vector<32x32xbf16>
    %cst_25 = arith.constant dense<0.000000e+00> : vector<64x32xf32>
    %40 = tpu.matmul %37, %39, %cst_25 {dimension_numbers = #tpu.dot_dimension_numbers<[1], [0], [0], [1], [0, 0, 1, 1], [], []>} : vector<64x32xbf16>, vector<32x32xbf16>, vector<64x32xf32> -> vector<64x32xf32>
    %41 = arith.truncf %21 : vector<64x32xf32> to vector<64x32xbf16>
    %c0_26 = arith.constant 0 : index
    %c0_27 = arith.constant 0 : index
    %42 = vector.load %arg9[%c0_26, %c0_27] : memref<32x32xf32, #tpu.memory_space<vmem>>, vector<32x32xf32>
    %43 = arith.truncf %42 : vector<32x32xf32> to vector<32x32xbf16>
    %cst_28 = arith.constant dense<0.000000e+00> : vector<64x32xf32>
    %44 = tpu.matmul %41, %43, %cst_28 {dimension_numbers = #tpu.dot_dimension_numbers<[1], [0], [0], [1], [0, 0, 1, 1], [], []>} : vector<64x32xbf16>, vector<32x32xbf16>, vector<64x32xf32> -> vector<64x32xf32>
    %45 = arith.addf %40, %44 : vector<64x32xf32>
    %cst_29 = arith.constant 0.000000e+00 : f32
    %46 = vector.broadcast %cst_29 : f32 to vector<64x32xf32>
    %47 = arith.maximumf %45, %46 : vector<64x32xf32>
    %c0_30 = arith.constant 0 : index
    %c0_31 = arith.constant 0 : index
    %48 = vector.load %arg10[%c0_30, %c0_31] : memref<64x1xf32, #tpu.memory_space<vmem>>, vector<64x1xf32>
    %49 = vector.broadcast %48 : vector<64x1xf32> to vector<64x32xf32>
    %50 = arith.mulf %47, %49 : vector<64x32xf32>
    %c0_32 = arith.constant 0 : index
    %c0_33 = arith.constant 0 : index
    %51 = vector.load %arg11[%c0_32, %c0_33] : memref<64x1xf32, #tpu.memory_space<vmem>>, vector<64x1xf32>
    %52 = vector.broadcast %51 : vector<64x1xf32> to vector<64x32xf32>
    %53 = arith.addf %50, %52 : vector<64x32xf32>
    %54 = vector.shape_cast %53 : vector<64x32xf32> to vector<8x8x32xf32>
    %55 = arith.truncf %54 : vector<8x8x32xf32> to vector<8x8x32xbf16>
    "tpu.trace_start"() <{level = 10 : i32, message = "gij,gjc->gic"}> : () -> ()
    %cst_34 = arith.constant dense<0.000000e+00> : vector<8x8x32xf32>
    %56 = tpu.matmul %24, %55, %cst_34 {dimension_numbers = #tpu.dot_dimension_numbers<[2], [1], [1], [2], [0, 0, 0, 1, 1, 2], [0], [0]>} : vector<8x8x8xbf16>, vector<8x8x32xbf16>, vector<8x8x32xf32> -> vector<8x8x32xf32>
    "tpu.trace_stop"() : () -> ()
    %57 = vector.broadcast %30 : vector<8x8x1xf32> to vector<8x8x32xf32>
    %58 = arith.mulf %56, %57 : vector<8x8x32xf32>
    %59 = vector.shape_cast %58 : vector<8x8x32xf32> to vector<64x32xf32>
    %60 = arith.truncf %59 : vector<64x32xf32> to vector<64x32xbf16>
    %c0_35 = arith.constant 0 : index
    %c0_36 = arith.constant 0 : index
    %61 = vector.load %arg12[%c0_35, %c0_36] : memref<32x32xf32, #tpu.memory_space<vmem>>, vector<32x32xf32>
    %62 = arith.truncf %61 : vector<32x32xf32> to vector<32x32xbf16>
    %cst_37 = arith.constant dense<0.000000e+00> : vector<64x32xf32>
    %63 = tpu.matmul %60, %62, %cst_37 {dimension_numbers = #tpu.dot_dimension_numbers<[1], [0], [0], [1], [0, 0, 1, 1], [], []>} : vector<64x32xbf16>, vector<32x32xbf16>, vector<64x32xf32> -> vector<64x32xf32>
    %64 = arith.truncf %53 : vector<64x32xf32> to vector<64x32xbf16>
    %c0_38 = arith.constant 0 : index
    %c0_39 = arith.constant 0 : index
    %65 = vector.load %arg13[%c0_38, %c0_39] : memref<32x32xf32, #tpu.memory_space<vmem>>, vector<32x32xf32>
    %66 = arith.truncf %65 : vector<32x32xf32> to vector<32x32xbf16>
    %cst_40 = arith.constant dense<0.000000e+00> : vector<64x32xf32>
    %67 = tpu.matmul %64, %66, %cst_40 {dimension_numbers = #tpu.dot_dimension_numbers<[1], [0], [0], [1], [0, 0, 1, 1], [], []>} : vector<64x32xbf16>, vector<32x32xbf16>, vector<64x32xf32> -> vector<64x32xf32>
    %68 = arith.addf %63, %67 : vector<64x32xf32>
    %cst_41 = arith.constant 0.000000e+00 : f32
    %69 = vector.broadcast %cst_41 : f32 to vector<64x32xf32>
    %70 = arith.maximumf %68, %69 : vector<64x32xf32>
    %c0_42 = arith.constant 0 : index
    %c0_43 = arith.constant 0 : index
    %71 = vector.load %arg14[%c0_42, %c0_43] : memref<64x1xf32, #tpu.memory_space<vmem>>, vector<64x1xf32>
    %72 = vector.broadcast %71 : vector<64x1xf32> to vector<64x32xf32>
    %73 = arith.mulf %70, %72 : vector<64x32xf32>
    %c0_44 = arith.constant 0 : index
    %c0_45 = arith.constant 0 : index
    %74 = vector.load %arg15[%c0_44, %c0_45] : memref<64x1xf32, #tpu.memory_space<vmem>>, vector<64x1xf32>
    %75 = vector.broadcast %74 : vector<64x1xf32> to vector<64x32xf32>
    %76 = arith.addf %73, %75 : vector<64x32xf32>
    %cst_46 = arith.constant 0.000000e+00 : f32
    %77 = vector.broadcast %cst_46 : f32 to vector<12x8x32xf32>
    %c0_47 = arith.constant 0 : index
    %c0_48 = arith.constant 0 : index
    %c0_49 = arith.constant 0 : index
    %78 = vector.load %arg27[%c0_47, %c0_48, %c0_49] : memref<12x8x32xf32, #tpu.memory_space<vmem>>, vector<12x8x32xf32>
    tpu.vector_store %arg27[%c0_47, %c0_48, %c0_49], %77 {strides = array<i32>} : memref<12x8x32xf32, #tpu.memory_space<vmem>>, vector<12x8x32xf32>,
    %79 = vector.shape_cast %76 : vector<64x32xf32> to vector<8x8x32xf32>
    %c2 = arith.constant 2 : index
    %c0_50 = arith.constant 0 : index
    %c0_51 = arith.constant 0 : index
    %80 = vector.load %arg27[%c2, %c0_50, %c0_51] : memref<12x8x32xf32, #tpu.memory_space<vmem>>, vector<8x8x32xf32>
    tpu.vector_store %arg27[%c2, %c0_50, %c0_51], %79 {strides = array<i32>} : memref<12x8x32xf32, #tpu.memory_space<vmem>>, vector<8x8x32xf32>,
    %cst_52 = arith.constant 0.000000e+00 : f32
    %81 = vector.broadcast %cst_52 : f32 to vector<64x32xf32>
    %c0_53 = arith.constant 0 : index
    %c0_54 = arith.constant 0 : index
    %c0_55 = arith.constant 0 : index
    %82 = vector.load %arg27[%c0_53, %c0_54, %c0_55] : memref<12x8x32xf32, #tpu.memory_space<vmem>>, vector<8x8x32xf32>
    %83 = vector.shape_cast %82 : vector<8x8x32xf32> to vector<64x32xf32>
    %84 = arith.truncf %83 : vector<64x32xf32> to vector<64x32xbf16>
    %c0_56 = arith.constant 0 : index
    %c0_57 = arith.constant 0 : index
    %c0_58 = arith.constant 0 : index
    %85 = vector.load %arg16[%c0_56, %c0_57, %c0_58] : memref<5x32x32xf32, #tpu.memory_space<vmem>>, vector<1x32x32xf32>
    %86 = vector.shape_cast %85 : vector<1x32x32xf32> to vector<32x32xf32>
    %87 = arith.truncf %86 : vector<32x32xf32> to vector<32x32xbf16>
    %cst_59 = arith.constant dense<0.000000e+00> : vector<64x32xf32>
    %88 = tpu.matmul %84, %87, %cst_59 {dimension_numbers = #tpu.dot_dimension_numbers<[1], [0], [0], [1], [0, 0, 1, 1], [], []>} : vector<64x32xbf16>, vector<32x32xbf16>, vector<64x32xf32> -> vector<64x32xf32>
    %89 = arith.addf %81, %88 : vector<64x32xf32>
    %c1 = arith.constant 1 : index
    %c0_60 = arith.constant 0 : index
    %c0_61 = arith.constant 0 : index
    %90 = vector.load %arg27[%c1, %c0_60, %c0_61] : memref<12x8x32xf32, #tpu.memory_space<vmem>>, vector<8x8x32xf32>
    %91 = vector.shape_cast %90 : vector<8x8x32xf32> to vector<64x32xf32>
    %92 = arith.truncf %91 : vector<64x32xf32> to vector<64x32xbf16>
    %c1_62 = arith.constant 1 : index
    %c0_63 = arith.constant 0 : index
    %c0_64 = arith.constant 0 : index
    %93 = vector.load %arg16[%c1_62, %c0_63, %c0_64] : memref<5x32x32xf32, #tpu.memory_space<vmem>>, vector<1x32x32xf32>
    %94 = vector.shape_cast %93 : vector<1x32x32xf32> to vector<32x32xf32>
    %95 = arith.truncf %94 : vector<32x32xf32> to vector<32x32xbf16>
    %cst_65 = arith.constant dense<0.000000e+00> : vector<64x32xf32>
    %96 = tpu.matmul %92, %95, %cst_65 {dimension_numbers = #tpu.dot_dimension_numbers<[1], [0], [0], [1], [0, 0, 1, 1], [], []>} : vector<64x32xbf16>, vector<32x32xbf16>, vector<64x32xf32> -> vector<64x32xf32>
    %97 = arith.addf %89, %96 : vector<64x32xf32>
    %c2_66 = arith.constant 2 : index
    %c0_67 = arith.constant 0 : index
    %c0_68 = arith.constant 0 : index
    %98 = vector.load %arg27[%c2_66, %c0_67, %c0_68] : memref<12x8x32xf32, #tpu.memory_space<vmem>>, vector<8x8x32xf32>
    %99 = vector.shape_cast %98 : vector<8x8x32xf32> to vector<64x32xf32>
    %100 = arith.truncf %99 : vector<64x32xf32> to vector<64x32xbf16>
    %c2_69 = arith.constant 2 : index
    %c0_70 = arith.constant 0 : index
    %c0_71 = arith.constant 0 : index
    %101 = vector.load %arg16[%c2_69, %c0_70, %c0_71] : memref<5x32x32xf32, #tpu.memory_space<vmem>>, vector<1x32x32xf32>
    %102 = vector.shape_cast %101 : vector<1x32x32xf32> to vector<32x32xf32>
    %103 = arith.truncf %102 : vector<32x32xf32> to vector<32x32xbf16>
    %cst_72 = arith.constant dense<0.000000e+00> : vector<64x32xf32>
    %104 = tpu.matmul %100, %103, %cst_72 {dimension_numbers = #tpu.dot_dimension_numbers<[1], [0], [0], [1], [0, 0, 1, 1], [], []>} : vector<64x32xbf16>, vector<32x32xbf16>, vector<64x32xf32> -> vector<64x32xf32>
    %105 = arith.addf %97, %104 : vector<64x32xf32>
    %c3 = arith.constant 3 : index
    %c0_73 = arith.constant 0 : index
    %c0_74 = arith.constant 0 : index
    %106 = vector.load %arg27[%c3, %c0_73, %c0_74] : memref<12x8x32xf32, #tpu.memory_space<vmem>>, vector<8x8x32xf32>
    %107 = vector.shape_cast %106 : vector<8x8x32xf32> to vector<64x32xf32>
    %108 = arith.truncf %107 : vector<64x32xf32> to vector<64x32xbf16>
    %c3_75 = arith.constant 3 : index
    %c0_76 = arith.constant 0 : index
    %c0_77 = arith.constant 0 : index
    %109 = vector.load %arg16[%c3_75, %c0_76, %c0_77] : memref<5x32x32xf32, #tpu.memory_space<vmem>>, vector<1x32x32xf32>
    %110 = vector.shape_cast %109 : vector<1x32x32xf32> to vector<32x32xf32>
    %111 = arith.truncf %110 : vector<32x32xf32> to vector<32x32xbf16>
    %cst_78 = arith.constant dense<0.000000e+00> : vector<64x32xf32>
    %112 = tpu.matmul %108, %111, %cst_78 {dimension_numbers = #tpu.dot_dimension_numbers<[1], [0], [0], [1], [0, 0, 1, 1], [], []>} : vector<64x32xbf16>, vector<32x32xbf16>, vector<64x32xf32> -> vector<64x32xf32>
    %113 = arith.addf %105, %112 : vector<64x32xf32>
    %c4 = arith.constant 4 : index
    %c0_79 = arith.constant 0 : index
    %c0_80 = arith.constant 0 : index
    %114 = vector.load %arg27[%c4, %c0_79, %c0_80] : memref<12x8x32xf32, #tpu.memory_space<vmem>>, vector<8x8x32xf32>
    %115 = vector.shape_cast %114 : vector<8x8x32xf32> to vector<64x32xf32>
    %116 = arith.truncf %115 : vector<64x32xf32> to vector<64x32xbf16>
    %c4_81 = arith.constant 4 : index
    %c0_82 = arith.constant 0 : index
    %c0_83 = arith.constant 0 : index
    %117 = vector.load %arg16[%c4_81, %c0_82, %c0_83] : memref<5x32x32xf32, #tpu.memory_space<vmem>>, vector<1x32x32xf32>
    %118 = vector.shape_cast %117 : vector<1x32x32xf32> to vector<32x32xf32>
    %119 = arith.truncf %118 : vector<32x32xf32> to vector<32x32xbf16>
    %cst_84 = arith.constant dense<0.000000e+00> : vector<64x32xf32>
    %120 = tpu.matmul %116, %119, %cst_84 {dimension_numbers = #tpu.dot_dimension_numbers<[1], [0], [0], [1], [0, 0, 1, 1], [], []>} : vector<64x32xbf16>, vector<32x32xbf16>, vector<64x32xf32> -> vector<64x32xf32>
    %121 = arith.addf %113, %120 : vector<64x32xf32>
    %c0_85 = arith.constant 0 : index
    %c0_86 = arith.constant 0 : index
    %122 = vector.load %arg17[%c0_85, %c0_86] : memref<1x32xf32, #tpu.memory_space<vmem>>, vector<1x32xf32>
    %123 = vector.broadcast %122 : vector<1x32xf32> to vector<64x32xf32>
    %124 = arith.addf %121, %123 : vector<64x32xf32>
    %cst_87 = arith.constant 0.000000e+00 : f32
    %125 = vector.broadcast %cst_87 : f32 to vector<64x32xf32>
    %126 = arith.maximumf %124, %125 : vector<64x32xf32>
    %c0_88 = arith.constant 0 : index
    %c0_89 = arith.constant 0 : index
    %127 = vector.load %arg18[%c0_88, %c0_89] : memref<1x32xf32, #tpu.memory_space<vmem>>, vector<1x32xf32>
    %128 = vector.broadcast %127 : vector<1x32xf32> to vector<64x32xf32>
    %129 = arith.mulf %126, %128 : vector<64x32xf32>
    %c0_90 = arith.constant 0 : index
    %c0_91 = arith.constant 0 : index
    %130 = vector.load %arg19[%c0_90, %c0_91] : memref<1x32xf32, #tpu.memory_space<vmem>>, vector<1x32xf32>
    %131 = vector.broadcast %130 : vector<1x32xf32> to vector<64x32xf32>
    %132 = arith.addf %129, %131 : vector<64x32xf32>
    %133 = vector.shape_cast %132 : vector<64x32xf32> to vector<8x8x32xf32>
    %c2_92 = arith.constant 2 : index
    %c0_93 = arith.constant 0 : index
    %c0_94 = arith.constant 0 : index
    %134 = vector.load %arg27[%c2_92, %c0_93, %c0_94] : memref<12x8x32xf32, #tpu.memory_space<vmem>>, vector<8x8x32xf32>
    tpu.vector_store %arg27[%c2_92, %c0_93, %c0_94], %133 {strides = array<i32>} : memref<12x8x32xf32, #tpu.memory_space<vmem>>, vector<8x8x32xf32>,
    %cst_95 = arith.constant 0.000000e+00 : f32
    %135 = vector.broadcast %cst_95 : f32 to vector<64x32xf32>
    %c0_96 = arith.constant 0 : index
    %c0_97 = arith.constant 0 : index
    %c0_98 = arith.constant 0 : index
    %136 = vector.load %arg27[%c0_96, %c0_97, %c0_98] : memref<12x8x32xf32, #tpu.memory_space<vmem>>, vector<8x8x32xf32>
    %137 = vector.shape_cast %136 : vector<8x8x32xf32> to vector<64x32xf32>
    %138 = arith.truncf %137 : vector<64x32xf32> to vector<64x32xbf16>
    %c0_99 = arith.constant 0 : index
    %c0_100 = arith.constant 0 : index
    %c0_101 = arith.constant 0 : index
    %139 = vector.load %arg20[%c0_99, %c0_100, %c0_101] : memref<5x32x32xf32, #tpu.memory_space<vmem>>, vector<1x32x32xf32>
    %140 = vector.shape_cast %139 : vector<1x32x32xf32> to vector<32x32xf32>
    %141 = arith.truncf %140 : vector<32x32xf32> to vector<32x32xbf16>
    %cst_102 = arith.constant dense<0.000000e+00> : vector<64x32xf32>
    %142 = tpu.matmul %138, %141, %cst_102 {dimension_numbers = #tpu.dot_dimension_numbers<[1], [0], [0], [1], [0, 0, 1, 1], [], []>} : vector<64x32xbf16>, vector<32x32xbf16>, vector<64x32xf32> -> vector<64x32xf32>
    %143 = arith.addf %135, %142 : vector<64x32xf32>
    %c1_103 = arith.constant 1 : index
    %c0_104 = arith.constant 0 : index
    %c0_105 = arith.constant 0 : index
    %144 = vector.load %arg27[%c1_103, %c0_104, %c0_105] : memref<12x8x32xf32, #tpu.memory_space<vmem>>, vector<8x8x32xf32>
    %145 = vector.shape_cast %144 : vector<8x8x32xf32> to vector<64x32xf32>
    %146 = arith.truncf %145 : vector<64x32xf32> to vector<64x32xbf16>
    %c1_106 = arith.constant 1 : index
    %c0_107 = arith.constant 0 : index
    %c0_108 = arith.constant 0 : index
    %147 = vector.load %arg20[%c1_106, %c0_107, %c0_108] : memref<5x32x32xf32, #tpu.memory_space<vmem>>, vector<1x32x32xf32>
    %148 = vector.shape_cast %147 : vector<1x32x32xf32> to vector<32x32xf32>
    %149 = arith.truncf %148 : vector<32x32xf32> to vector<32x32xbf16>
    %cst_109 = arith.constant dense<0.000000e+00> : vector<64x32xf32>
    %150 = tpu.matmul %146, %149, %cst_109 {dimension_numbers = #tpu.dot_dimension_numbers<[1], [0], [0], [1], [0, 0, 1, 1], [], []>} : vector<64x32xbf16>, vector<32x32xbf16>, vector<64x32xf32> -> vector<64x32xf32>
    %151 = arith.addf %143, %150 : vector<64x32xf32>
    %c2_110 = arith.constant 2 : index
    %c0_111 = arith.constant 0 : index
    %c0_112 = arith.constant 0 : index
    %152 = vector.load %arg27[%c2_110, %c0_111, %c0_112] : memref<12x8x32xf32, #tpu.memory_space<vmem>>, vector<8x8x32xf32>
    %153 = vector.shape_cast %152 : vector<8x8x32xf32> to vector<64x32xf32>
    %154 = arith.truncf %153 : vector<64x32xf32> to vector<64x32xbf16>
    %c2_113 = arith.constant 2 : index
    %c0_114 = arith.constant 0 : index
    %c0_115 = arith.constant 0 : index
    %155 = vector.load %arg20[%c2_113, %c0_114, %c0_115] : memref<5x32x32xf32, #tpu.memory_space<vmem>>, vector<1x32x32xf32>
    %156 = vector.shape_cast %155 : vector<1x32x32xf32> to vector<32x32xf32>
    %157 = arith.truncf %156 : vector<32x32xf32> to vector<32x32xbf16>
    %cst_116 = arith.constant dense<0.000000e+00> : vector<64x32xf32>
    %158 = tpu.matmul %154, %157, %cst_116 {dimension_numbers = #tpu.dot_dimension_numbers<[1], [0], [0], [1], [0, 0, 1, 1], [], []>} : vector<64x32xbf16>, vector<32x32xbf16>, vector<64x32xf32> -> vector<64x32xf32>
    %159 = arith.addf %151, %158 : vector<64x32xf32>
    %c3_117 = arith.constant 3 : index
    %c0_118 = arith.constant 0 : index
    %c0_119 = arith.constant 0 : index
    %160 = vector.load %arg27[%c3_117, %c0_118, %c0_119] : memref<12x8x32xf32, #tpu.memory_space<vmem>>, vector<8x8x32xf32>
    %161 = vector.shape_cast %160 : vector<8x8x32xf32> to vector<64x32xf32>
    %162 = arith.truncf %161 : vector<64x32xf32> to vector<64x32xbf16>
    %c3_120 = arith.constant 3 : index
    %c0_121 = arith.constant 0 : index
    %c0_122 = arith.constant 0 : index
    %163 = vector.load %arg20[%c3_120, %c0_121, %c0_122] : memref<5x32x32xf32, #tpu.memory_space<vmem>>, vector<1x32x32xf32>
    %164 = vector.shape_cast %163 : vector<1x32x32xf32> to vector<32x32xf32>
    %165 = arith.truncf %164 : vector<32x32xf32> to vector<32x32xbf16>
    %cst_123 = arith.constant dense<0.000000e+00> : vector<64x32xf32>
    %166 = tpu.matmul %162, %165, %cst_123 {dimension_numbers = #tpu.dot_dimension_numbers<[1], [0], [0], [1], [0, 0, 1, 1], [], []>} : vector<64x32xbf16>, vector<32x32xbf16>, vector<64x32xf32> -> vector<64x32xf32>
    %167 = arith.addf %159, %166 : vector<64x32xf32>
    %c4_124 = arith.constant 4 : index
    %c0_125 = arith.constant 0 : index
    %c0_126 = arith.constant 0 : index
    %168 = vector.load %arg27[%c4_124, %c0_125, %c0_126] : memref<12x8x32xf32, #tpu.memory_space<vmem>>, vector<8x8x32xf32>
    %169 = vector.shape_cast %168 : vector<8x8x32xf32> to vector<64x32xf32>
    %170 = arith.truncf %169 : vector<64x32xf32> to vector<64x32xbf16>
    %c4_127 = arith.constant 4 : index
    %c0_128 = arith.constant 0 : index
    %c0_129 = arith.constant 0 : index
    %171 = vector.load %arg20[%c4_127, %c0_128, %c0_129] : memref<5x32x32xf32, #tpu.memory_space<vmem>>, vector<1x32x32xf32>
    %172 = vector.shape_cast %171 : vector<1x32x32xf32> to vector<32x32xf32>
    %173 = arith.truncf %172 : vector<32x32xf32> to vector<32x32xbf16>
    %cst_130 = arith.constant dense<0.000000e+00> : vector<64x32xf32>
    %174 = tpu.matmul %170, %173, %cst_130 {dimension_numbers = #tpu.dot_dimension_numbers<[1], [0], [0], [1], [0, 0, 1, 1], [], []>} : vector<64x32xbf16>, vector<32x32xbf16>, vector<64x32xf32> -> vector<64x32xf32>
    %175 = arith.addf %167, %174 : vector<64x32xf32>
    %c0_131 = arith.constant 0 : index
    %c0_132 = arith.constant 0 : index
    %176 = vector.load %arg21[%c0_131, %c0_132] : memref<1x32xf32, #tpu.memory_space<vmem>>, vector<1x32xf32>
    %177 = vector.broadcast %176 : vector<1x32xf32> to vector<64x32xf32>
    %178 = arith.addf %175, %177 : vector<64x32xf32>
    %cst_133 = arith.constant 0.000000e+00 : f32
    %179 = vector.broadcast %cst_133 : f32 to vector<64x32xf32>
    %180 = arith.maximumf %178, %179 : vector<64x32xf32>
    %c0_134 = arith.constant 0 : index
    %c0_135 = arith.constant 0 : index
    %181 = vector.load %arg22[%c0_134, %c0_135] : memref<1x32xf32, #tpu.memory_space<vmem>>, vector<1x32xf32>
    %182 = vector.broadcast %181 : vector<1x32xf32> to vector<64x32xf32>
    %183 = arith.mulf %180, %182 : vector<64x32xf32>
    %c0_136 = arith.constant 0 : index
    %c0_137 = arith.constant 0 : index
    %184 = vector.load %arg23[%c0_136, %c0_137] : memref<1x32xf32, #tpu.memory_space<vmem>>, vector<1x32xf32>
    %185 = vector.broadcast %184 : vector<1x32xf32> to vector<64x32xf32>
    %186 = arith.addf %183, %185 : vector<64x32xf32>
    %c0_138 = arith.constant 0 : index
    %c0_139 = arith.constant 0 : index
    %187 = vector.load %arg24[%c0_138, %c0_139] : memref<32x64xf32, #tpu.memory_space<vmem>>, vector<32x64xf32>
    %188 = arith.truncf %187 : vector<32x64xf32> to vector<32x64xbf16>
    %189 = arith.truncf %186 : vector<64x32xf32> to vector<64x32xbf16>
    %cst_140 = arith.constant dense<0.000000e+00> : vector<32x32xf32>
    %190 = tpu.matmul %188, %189, %cst_140 {dimension_numbers = #tpu.dot_dimension_numbers<[1], [0], [0], [1], [0, 0, 1, 1], [], []>} : vector<32x64xbf16>, vector<64x32xbf16>, vector<32x32xf32> -> vector<32x32xf32>
    %c0_141 = arith.constant 0 : index
    %c0_142 = arith.constant 0 : index
    %191 = vector.load %arg25[%c0_141, %c0_142] : memref<32x1xf32, #tpu.memory_space<vmem>>, vector<32x1xf32>
    %192 = vector.broadcast %191 : vector<32x1xf32> to vector<32x32xf32>
    %193 = arith.addf %190, %192 : vector<32x32xf32>
    %c0_143 = arith.constant 0 : index
    %c0_144 = arith.constant 0 : index
    %c0_145 = arith.constant 0 : index
    %194 = vector.load %arg26[%c0_143, %c0_144, %c0_145] : memref<1x32x32xf32, #tpu.memory_space<vmem>>, vector<1x32x32xf32>
    %195 = vector.shape_cast %194 : vector<1x32x32xf32> to vector<32x32xf32>
    %196 = vector.shape_cast %193 : vector<32x32xf32> to vector<1x32x32xf32>
    tpu.vector_store %arg26[%c0_143, %c0_144, %c0_145], %196 {strides = array<i32>} : memref<1x32x32xf32, #tpu.memory_space<vmem>>, vector<1x32x32xf32>,
    return
  }
  func.func @transform_0(%arg0: i32) -> (i32, i32, i32, i32) {
    %c0_i32 = arith.constant 0 : i32
    %c0_i32_0 = arith.constant 0 : i32
    %c0_i32_1 = arith.constant 0 : i32
    %c0_i32_2 = arith.constant 0 : i32
    return %arg0, %c0_i32, %c0_i32_0, %c0_i32_1 : i32, i32, i32, i32
  }
  func.func @transform_1(%arg0: i32) -> (i32, i32, i32, i32) {
    %c0_i32 = arith.constant 0 : i32
    %c0_i32_0 = arith.constant 0 : i32
    %c0_i32_1 = arith.constant 0 : i32
    %c0_i32_2 = arith.constant 0 : i32
    return %arg0, %c0_i32, %c0_i32_0, %c0_i32_1 : i32, i32, i32, i32
  }
  func.func @transform_2(%arg0: i32) -> (i32, i32) {
    %c0_i32 = arith.constant 0 : i32
    %c0_i32_0 = arith.constant 0 : i32
    %c0_i32_1 = arith.constant 0 : i32
    return %c0_i32, %c0_i32_0 : i32, i32
  }
  func.func @transform_3(%arg0: i32) -> (i32, i32) {
    %c0_i32 = arith.constant 0 : i32
    %c0_i32_0 = arith.constant 0 : i32
    %c0_i32_1 = arith.constant 0 : i32
    return %c0_i32, %c0_i32_0 : i32, i32
  }
  func.func @transform_4(%arg0: i32) -> (i32, i32) {
    %c0_i32 = arith.constant 0 : i32
    %c0_i32_0 = arith.constant 0 : i32
    %c0_i32_1 = arith.constant 0 : i32
    return %c0_i32, %c0_i32_0 : i32, i32
  }
  func.func @transform_5(%arg0: i32) -> (i32, i32) {
    %c0_i32 = arith.constant 0 : i32
    %c0_i32_0 = arith.constant 0 : i32
    %c0_i32_1 = arith.constant 0 : i32
    return %c0_i32, %c0_i32_0 : i32, i32
  }
  func.func @transform_6(%arg0: i32) -> (i32, i32) {
    %c0_i32 = arith.constant 0 : i32
    %c0_i32_0 = arith.constant 0 : i32
    %c0_i32_1 = arith.constant 0 : i32
    return %c0_i32, %c0_i32_0 : i32, i32
  }
  func.func @transform_7(%arg0: i32) -> (i32, i32) {
    %c0_i32 = arith.constant 0 : i32
    %c0_i32_0 = arith.constant 0 : i32
    %c0_i32_1 = arith.constant 0 : i32
    return %c0_i32, %c0_i32_0 : i32, i32
  }
  func.func @transform_8(%arg0: i32) -> (i32, i32) {
    %c0_i32 = arith.constant 0 : i32
    %c0_i32_0 = arith.constant 0 : i32
    %c0_i32_1 = arith.constant 0 : i32
    return %c0_i32, %c0_i32_0 : i32, i32
  }
  func.func @transform_9(%arg0: i32) -> (i32, i32) {
    %c0_i32 = arith.constant 0 : i32
    %c0_i32_0 = arith.constant 0 : i32
    %c0_i32_1 = arith.constant 0 : i32
    return %c0_i32, %c0_i32_0 : i32, i32
  }
  func.func @transform_10(%arg0: i32) -> (i32, i32) {
    %c0_i32 = arith.constant 0 : i32
    %c0_i32_0 = arith.constant 0 : i32
    %c0_i32_1 = arith.constant 0 : i32
    return %c0_i32, %c0_i32_0 : i32, i32
  }
  func.func @transform_11(%arg0: i32) -> (i32, i32) {
    %c0_i32 = arith.constant 0 : i32
    %c0_i32_0 = arith.constant 0 : i32
    %c0_i32_1 = arith.constant 0 : i32
    return %c0_i32, %c0_i32_0 : i32, i32
  }
  func.func @transform_12(%arg0: i32) -> (i32, i32) {
    %c0_i32 = arith.constant 0 : i32
    %c0_i32_0 = arith.constant 0 : i32
    %c0_i32_1 = arith.constant 0 : i32
    return %c0_i32, %c0_i32_0 : i32, i32
  }
  func.func @transform_13(%arg0: i32) -> (i32, i32) {
    %c0_i32 = arith.constant 0 : i32
    %c0_i32_0 = arith.constant 0 : i32
    %c0_i32_1 = arith.constant 0 : i32
    return %c0_i32, %c0_i32_0 : i32, i32
  }
  func.func @transform_14(%arg0: i32) -> (i32, i32) {
    %c0_i32 = arith.constant 0 : i32
    %c0_i32_0 = arith.constant 0 : i32
    %c0_i32_1 = arith.constant 0 : i32
    return %c0_i32, %c0_i32_0 : i32, i32
  }
  func.func @transform_15(%arg0: i32) -> (i32, i32, i32) {
    %c0_i32 = arith.constant 0 : i32
    %c0_i32_0 = arith.constant 0 : i32
    %c0_i32_1 = arith.constant 0 : i32
    %c0_i32_2 = arith.constant 0 : i32
    return %c0_i32, %c0_i32_0, %c0_i32_1 : i32, i32, i32
  }
  func.func @transform_16(%arg0: i32) -> (i32, i32) {
    %c0_i32 = arith.constant 0 : i32
    %c0_i32_0 = arith.constant 0 : i32
    %c0_i32_1 = arith.constant 0 : i32
    return %c0_i32, %c0_i32_0 : i32, i32
  }
  func.func @transform_17(%arg0: i32) -> (i32, i32) {
    %c0_i32 = arith.constant 0 : i32
    %c0_i32_0 = arith.constant 0 : i32
    %c0_i32_1 = arith.constant 0 : i32
    return %c0_i32, %c0_i32_0 : i32, i32
  }
  func.func @transform_18(%arg0: i32) -> (i32, i32) {
    %c0_i32 = arith.constant 0 : i32
    %c0_i32_0 = arith.constant 0 : i32
    %c0_i32_1 = arith.constant 0 : i32
    return %c0_i32, %c0_i32_0 : i32, i32
  }
  func.func @transform_19(%arg0: i32) -> (i32, i32, i32) {
    %c0_i32 = arith.constant 0 : i32
    %c0_i32_0 = arith.constant 0 : i32
    %c0_i32_1 = arith.constant 0 : i32
    %c0_i32_2 = arith.constant 0 : i32
    return %c0_i32, %c0_i32_0, %c0_i32_1 : i32, i32, i32
  }
  func.func @transform_20(%arg0: i32) -> (i32, i32) {
    %c0_i32 = arith.constant 0 : i32
    %c0_i32_0 = arith.constant 0 : i32
    %c0_i32_1 = arith.constant 0 : i32
    return %c0_i32, %c0_i32_0 : i32, i32
  }
  func.func @transform_21(%arg0: i32) -> (i32, i32) {
    %c0_i32 = arith.constant 0 : i32
    %c0_i32_0 = arith.constant 0 : i32
    %c0_i32_1 = arith.constant 0 : i32
    return %c0_i32, %c0_i32_0 : i32, i32
  }
  func.func @transform_22(%arg0: i32) -> (i32, i32) {
    %c0_i32 = arith.constant 0 : i32
    %c0_i32_0 = arith.constant 0 : i32
    %c0_i32_1 = arith.constant 0 : i32
    return %c0_i32, %c0_i32_0 : i32, i32
  }
  func.func @transform_23(%arg0: i32) -> (i32, i32) {
    %c0_i32 = arith.constant 0 : i32
    %c0_i32_0 = arith.constant 0 : i32
    %c0_i32_1 = arith.constant 0 : i32
    return %c0_i32, %c0_i32_0 : i32, i32
  }
  func.func @transform_24(%arg0: i32) -> (i32, i32) {
    %c0_i32 = arith.constant 0 : i32
    %c0_i32_0 = arith.constant 0 : i32
    %c0_i32_1 = arith.constant 0 : i32
    return %c0_i32, %c0_i32_0 : i32, i32
  }
  func.func @transform_25(%arg0: i32) -> (i32, i32, i32) {
    %c0_i32 = arith.constant 0 : i32
    %c0_i32_0 = arith.constant 0 : i32
    %c0_i32_1 = arith.constant 0 : i32
    return %arg0, %c0_i32, %c0_i32_0 : i32, i32, i32
  }
}

module attributes {stable_mosaic.version = 11 : i64} {
  func.func @_mlp2_kernel(%arg0: i32, %arg1: memref<64x32xf32, #tpu.memory_space<vmem>>, %arg2: memref<32x32xf32, #tpu.memory_space<vmem>>, %arg3: memref<1x32xf32, #tpu.memory_space<vmem>>, %arg4: memref<1x32xf32, #tpu.memory_space<vmem>>, %arg5: memref<32x16xf32, #tpu.memory_space<vmem>>, %arg6: memref<1x16xf32, #tpu.memory_space<vmem>>, %arg7: memref<64x16xf32, #tpu.memory_space<vmem>>) attributes {dimension_semantics = [#tpu.dimension_semantics<parallel>], iteration_bounds = array<i64: 1>, scalar_prefetch = 0 : i64, scratch_operands = 0 : i64, tpu.core_type = #tpu.core_type<tc>, window_params = [{transform_indices = @transform_0, window_bounds = array<i64: 64, 32>}, {pipeline_mode = #tpu.pipeline_mode<synchronous>, transform_indices = @transform_1, window_bounds = array<i64: 32, 32>}, {pipeline_mode = #tpu.pipeline_mode<synchronous>, transform_indices = @transform_2, window_bounds = array<i64: 1, 32>}, {pipeline_mode = #tpu.pipeline_mode<synchronous>, transform_indices = @transform_3, window_bounds = array<i64: 1, 32>}, {pipeline_mode = #tpu.pipeline_mode<synchronous>, transform_indices = @transform_4, window_bounds = array<i64: 32, 16>}, {pipeline_mode = #tpu.pipeline_mode<synchronous>, transform_indices = @transform_5, window_bounds = array<i64: 1, 16>}, {transform_indices = @transform_6, window_bounds = array<i64: 64, 16>}]} {
    %c0 = arith.constant 0 : index
    %c0_0 = arith.constant 0 : index
    %0 = vector.load %arg1[%c0, %c0_0] : memref<64x32xf32, #tpu.memory_space<vmem>>, vector<64x32xf32>
    %1 = arith.truncf %0 : vector<64x32xf32> to vector<64x32xbf16>
    %c0_1 = arith.constant 0 : index
    %c0_2 = arith.constant 0 : index
    %2 = vector.load %arg2[%c0_1, %c0_2] : memref<32x32xf32, #tpu.memory_space<vmem>>, vector<32x32xf32>
    %3 = arith.truncf %2 : vector<32x32xf32> to vector<32x32xbf16>
    %cst = arith.constant dense<0.000000e+00> : vector<64x32xf32>
    %4 = tpu.matmul %1, %3, %cst {dimension_numbers = #tpu.dot_dimension_numbers<[1], [0], [0], [1], [0, 0, 1, 1], [], []>} : vector<64x32xbf16>, vector<32x32xbf16>, vector<64x32xf32> -> vector<64x32xf32>
    %cst_3 = arith.constant 0.000000e+00 : f32
    %5 = vector.broadcast %cst_3 : f32 to vector<64x32xf32>
    %6 = arith.maximumf %4, %5 : vector<64x32xf32>
    %c0_4 = arith.constant 0 : index
    %c0_5 = arith.constant 0 : index
    %7 = vector.load %arg3[%c0_4, %c0_5] : memref<1x32xf32, #tpu.memory_space<vmem>>, vector<1x32xf32>
    %8 = vector.broadcast %7 : vector<1x32xf32> to vector<64x32xf32>
    %9 = arith.mulf %6, %8 : vector<64x32xf32>
    %c0_6 = arith.constant 0 : index
    %c0_7 = arith.constant 0 : index
    %10 = vector.load %arg4[%c0_6, %c0_7] : memref<1x32xf32, #tpu.memory_space<vmem>>, vector<1x32xf32>
    %11 = vector.broadcast %10 : vector<1x32xf32> to vector<64x32xf32>
    %12 = arith.addf %9, %11 : vector<64x32xf32>
    %13 = arith.truncf %12 : vector<64x32xf32> to vector<64x32xbf16>
    %c0_8 = arith.constant 0 : index
    %c0_9 = arith.constant 0 : index
    %14 = vector.load %arg5[%c0_8, %c0_9] : memref<32x16xf32, #tpu.memory_space<vmem>>, vector<32x16xf32>
    %15 = arith.truncf %14 : vector<32x16xf32> to vector<32x16xbf16>
    %cst_10 = arith.constant dense<0.000000e+00> : vector<64x16xf32>
    %16 = tpu.matmul %13, %15, %cst_10 {dimension_numbers = #tpu.dot_dimension_numbers<[1], [0], [0], [1], [0, 0, 1, 1], [], []>} : vector<64x32xbf16>, vector<32x16xbf16>, vector<64x16xf32> -> vector<64x16xf32>
    %c0_11 = arith.constant 0 : index
    %c0_12 = arith.constant 0 : index
    %17 = vector.load %arg6[%c0_11, %c0_12] : memref<1x16xf32, #tpu.memory_space<vmem>>, vector<1x16xf32>
    %18 = vector.broadcast %17 : vector<1x16xf32> to vector<64x16xf32>
    %19 = arith.addf %16, %18 : vector<64x16xf32>
    %c0_13 = arith.constant 0 : index
    %c0_14 = arith.constant 0 : index
    %20 = vector.load %arg7[%c0_13, %c0_14] : memref<64x16xf32, #tpu.memory_space<vmem>>, vector<64x16xf32>
    tpu.vector_store %arg7[%c0_13, %c0_14], %19 {strides = array<i32>} : memref<64x16xf32, #tpu.memory_space<vmem>>, vector<64x16xf32>,
    return
  }
  func.func @transform_0(%arg0: i32) -> (i32, i32) {
    %c0_i32 = arith.constant 0 : i32
    %c0_i32_0 = arith.constant 0 : i32
    return %arg0, %c0_i32 : i32, i32
  }
  func.func @transform_1(%arg0: i32) -> (i32, i32) {
    %c0_i32 = arith.constant 0 : i32
    %c0_i32_0 = arith.constant 0 : i32
    %c0_i32_1 = arith.constant 0 : i32
    return %c0_i32, %c0_i32_0 : i32, i32
  }
  func.func @transform_2(%arg0: i32) -> (i32, i32) {
    %c0_i32 = arith.constant 0 : i32
    %c0_i32_0 = arith.constant 0 : i32
    %c0_i32_1 = arith.constant 0 : i32
    return %c0_i32, %c0_i32_0 : i32, i32
  }
  func.func @transform_3(%arg0: i32) -> (i32, i32) {
    %c0_i32 = arith.constant 0 : i32
    %c0_i32_0 = arith.constant 0 : i32
    %c0_i32_1 = arith.constant 0 : i32
    return %c0_i32, %c0_i32_0 : i32, i32
  }
  func.func @transform_4(%arg0: i32) -> (i32, i32) {
    %c0_i32 = arith.constant 0 : i32
    %c0_i32_0 = arith.constant 0 : i32
    %c0_i32_1 = arith.constant 0 : i32
    return %c0_i32, %c0_i32_0 : i32, i32
  }
  func.func @transform_5(%arg0: i32) -> (i32, i32) {
    %c0_i32 = arith.constant 0 : i32
    %c0_i32_0 = arith.constant 0 : i32
    %c0_i32_1 = arith.constant 0 : i32
    return %c0_i32, %c0_i32_0 : i32, i32
  }
  func.func @transform_6(%arg0: i32) -> (i32, i32) {
    %c0_i32 = arith.constant 0 : i32
    %c0_i32_0 = arith.constant 0 : i32
    return %arg0, %c0_i32 : i32, i32
  }
}

</mosaic_0001>

<llo_original>
// kernel: weighted_graph_model_forward.3
$region0: #{weighted_graph_model_forward.3}
  #allocation0 [shape = 'u32[]', space=smem, size = 0x4, offset = 0x4, fixed_abs, tag = 'smem constant byte address 0x4 - core index']
  #allocation1 [shape = 'u32[144,128]{1,0:T(1,128)}', space=vmem, size = 0x12000, scoped, tag = 'internal scratch']
  %s0 = inlined_call_operand.vmem [shape: f32[64,32], index: 0, kind: input, shape index: {}]
  %s1 = inlined_call_operand.vmem [shape: f32[32,32], index: 1, kind: input, shape index: {}]
  %s2 = inlined_call_operand.vmem [shape: f32[1,32], index: 2, kind: input, shape index: {}]
  %s3 = inlined_call_operand.vmem [shape: f32[1,32], index: 3, kind: input, shape index: {}]
  %s4 = inlined_call_operand.vmem [shape: f32[32,16], index: 4, kind: input, shape index: {}]
  %s5 = inlined_call_operand.vmem [shape: f32[1,16], index: 5, kind: input, shape index: {}]
  %s6 = inlined_call_operand.hbm [shape: f32[64,16], index: 6, kind: output, shape index: {}]
  %s7 = sld [smem:[#allocation0]]
  $region34: #{weighted_graph_model_forward.3} parent=0
    _
  %s9 = ssub.s32 1, %s7
  %s10 = scalar_select 0, %s9, %s7
  $region1: #{weighted_graph_model_forward.3} parent=0
    #allocation2 [shape = 'u8[32768]{0}', space=vmem, size = 0x8000, scoped, tag = 'output window, operand 0, single buffered']
    #allocation3 [shape = 's32[1]{0}', space=sflag, size = 0x4, scoped, tag = 'scoped memory for weighted_graph_model_forward.3']
    %11 = vsyncpa [#allocation3], 0
    // Predicated region
    $region2: #{weighted_graph_model_forward.3} parent=1 // pred_check
      _
    $region3: #{weighted_graph_model_forward.3} parent=1 // pred_check_branch
      %13 = sbr.rel (0) target = $region5
    $region4: #{weighted_graph_model_forward.3} parent=1 // pred_region
      _
    $region5: #{weighted_graph_model_forward.3} parent=1 // pred_fallthru
      _
    // Predicated region
    $region6: #{weighted_graph_model_forward.3} parent=1 // pred_check
      _
    $region7: #{weighted_graph_model_forward.3} parent=1 // pred_check_branch
      %15 = sbr.rel (0) target = $region9
    $region8: #{weighted_graph_model_forward.3} parent=1 // pred_region
      _
    $region9: #{weighted_graph_model_forward.3} parent=1 // pred_fallthru
      _
    // Predicated region
    $region10: #{weighted_graph_model_forward.3} parent=1 // pred_check
      _
    $region11: #{weighted_graph_model_forward.3} parent=1 // pred_check_branch
      %17 = sbr.rel (0) target = $region13
    $region12: #{weighted_graph_model_forward.3} parent=1 // pred_region
      _
    $region13: #{weighted_graph_model_forward.3} parent=1 // pred_fallthru
      _
    // Predicated region
    $region14: #{weighted_graph_model_forward.3} parent=1 // pred_check
      _
    $region15: #{weighted_graph_model_forward.3} parent=1 // pred_check_branch
      %19 = sbr.rel (0) target = $region17
    $region16: #{weighted_graph_model_forward.3} parent=1 // pred_region
      _
    $region17: #{weighted_graph_model_forward.3} parent=1 // pred_fallthru
      _
    // Predicated region
    $region18: #{weighted_graph_model_forward.3} parent=1 // pred_check
      _
    $region19: #{weighted_graph_model_forward.3} parent=1 // pred_check_branch
      %21 = sbr.rel (0) target = $region21
    $region20: #{weighted_graph_model_forward.3} parent=1 // pred_region
      _
    $region21: #{weighted_graph_model_forward.3} parent=1 // pred_fallthru
      _
    // Predicated region
    $region22: #{weighted_graph_model_forward.3} parent=1 // pred_check
      _
    $region23: #{weighted_graph_model_forward.3} parent=1 // pred_check_branch
      %23 = sbr.rel (0) target = $region25
    $region24: #{weighted_graph_model_forward.3} parent=1 // pred_region
      _
    $region25: #{weighted_graph_model_forward.3} parent=1 // pred_fallthru
      _
    %v25 = vld [vmem:[%s0] sm:$0xff]
    %v26 = vld [vmem:[%s0 + $0x8] sm:$0xff]
    %v27 = vld [vmem:[%s0 + $0x10] sm:$0xff]
    %v28 = vld [vmem:[%s0 + $0x18] sm:$0xff]
    %v29 = vld [vmem:[%s0 + $0x20] sm:$0xff]
    %v30 = vld [vmem:[%s0 + $0x28] sm:$0xff]
    %v31 = vld [vmem:[%s0 + $0x30] sm:$0xff]
    %v32 = vld [vmem:[%s0 + $0x38] sm:$0xff]
    %v33 = vpack.c.bf16 %v26, %v25
    %v34 = vpack.c.bf16 %v28, %v27
    %v35 = vpack.c.bf16 %v30, %v29
    %v36 = vpack.c.bf16 %v32, %v31
    %v37 = vld [vmem:[%s1] sm:$0xff]
    %v38 = vld [vmem:[%s1 + $0x8] sm:$0xff]
    %v39 = vld [vmem:[%s1 + $0x10] sm:$0xff]
    %v40 = vld [vmem:[%s1 + $0x18] sm:$0xff]
    %v41 = vpack.c.bf16 %v38, %v37
    %v42 = vpack.c.bf16 %v40, %v39
    %vm43 = vcmask 261120
    %v45 = vsel %vm43, %v33, 0
    %v48 = vsel %vm43, %v34, 0
    %v51 = vsel %vm43, %v35, 0
    %v54 = vsel %vm43, %v36, 0
    %56 = vmatprep.subr.bf16.mxu0 0
    %57 = vmatpush1.bf16.msra.mxu0 %v41
    %58 = vmatprep.subr.bf16.mxu0 0
    %59 = vmatpush1.bf16.msra.mxu0 %v42
    %60 = vmatprep.subr.bf16.mxu0 0
    %61 = vmatpush1.bf16.msra.mxu0 0
    %62 = vmatprep.subr.bf16.mxu0 0
    %63 = vmatpush1.bf16.msra.mxu0 0
    %64 = vmatprep.subr.bf16.mxu0 0
    %65 = vmatpush1.bf16.msra.mxu0 0
    %66 = vmatprep.subr.bf16.mxu0 0
    %67 = vmatpush1.bf16.msra.mxu0 0
    %68 = vmatprep.subr.bf16.mxu0 0
    %69 = vmatpush1.bf16.msra.mxu0 0
    %70 = vmatprep.subr.bf16.mxu0 0
    %71 = vmatpush1.bf16.msra.mxu0 0
    %72 = vmatprep.subr.bf16.mxu0 0
    %73 = vmatpush1.bf16.msra.mxu0 0
    %74 = vmatprep.subr.bf16.mxu0 0
    %75 = vmatpush1.bf16.msra.mxu0 0
    %76 = vmatprep.subr.bf16.mxu0 0
    %77 = vmatpush1.bf16.msra.mxu0 0
    %78 = vmatprep.subr.bf16.mxu0 0
    %79 = vmatpush1.bf16.msra.mxu0 0
    %80 = vmatprep.subr.bf16.mxu0 0
    %81 = vmatpush1.bf16.msra.mxu0 0
    %82 = vmatprep.subr.bf16.mxu0 0
    %83 = vmatpush1.bf16.msra.mxu0 0
    %84 = vmatprep.subr.bf16.mxu0 0
    %85 = vmatpush1.bf16.msra.mxu0 0
    %86 = vmatprep.subr.bf16.mxu0 0
    %87 = vmatpush1.bf16.msra.mxu0 0
    %88 = vmatprep.mubr.bf16.mxu0 0
    %89 = vmatmul.mubr.bf16.gmra.mrb[0].mxu0 %v45
    %v90 = vpop.f32.mrb[0].mxu0
    %v91 = vadd.f32 0.0, %v90
    %v92 = vpop.f32.mrb[0].mxu0
    %v93 = vpop.f32.mrb[0].mxu0
    %v94 = vadd.f32 0.0, %v93
    %v95 = vpop.f32.mrb[0].mxu0
    %96 = vmatprep.mubr.bf16.mxu0 0
    %97 = vmatmul.mubr.bf16.gmra.mrb[0].mxu0 %v48
    %v98 = vpop.f32.mrb[0].mxu0
    %v99 = vadd.f32 0.0, %v98
    %v100 = vpop.f32.mrb[0].mxu0
    %v101 = vpop.f32.mrb[0].mxu0
    %v102 = vadd.f32 0.0, %v101
    %v103 = vpop.f32.mrb[0].mxu0
    %104 = vmatprep.mubr.bf16.mxu0 0
    %105 = vmatmul.mubr.bf16.gmra.mrb[0].mxu0 %v51
    %v106 = vpop.f32.mrb[0].mxu0
    %v107 = vadd.f32 0.0, %v106
    %v108 = vpop.f32.mrb[0].mxu0
    %v109 = vpop.f32.mrb[0].mxu0
    %v110 = vadd.f32 0.0, %v109
    %v111 = vpop.f32.mrb[0].mxu0
    %112 = vmatprep.mubr.bf16.mxu0 0
    %113 = vmatmul.mubr.bf16.gmra.mrb[0].mxu0 %v54
    %v114 = vpop.f32.mrb[0].mxu0
    %v115 = vadd.f32 0.0, %v114
    %v116 = vpop.f32.mrb[0].mxu0
    %v117 = vpop.f32.mrb[0].mxu0
    %v118 = vadd.f32 0.0, %v117
    %v119 = vpop.f32.mrb[0].mxu0
    %120 = vdwg.mxu0
    %v121 = vmax.f32 %v91, 0.0
    %v122 = vmax.f32 %v94, 0.0
    %v123 = vmax.f32 %v99, 0.0
    %v124 = vmax.f32 %v102, 0.0
    %v125 = vmax.f32 %v107, 0.0
    %v126 = vmax.f32 %v110, 0.0
    %v127 = vmax.f32 %v115, 0.0
    %v128 = vmax.f32 %v118, 0.0
    %v129 = vld [vmem:[%s2] sm:$0x1]
    %v131 = vlaneseq
    %v132 = vshrl.u32 %v131, 7
    %v133 = vsub.s32 0, %v132
    %v134 = vrot.slane %v129, %v133
    %v136 = vmul.f32 %v121, %v134
    %v137 = vmul.f32 %v122, %v134
    %v138 = vmul.f32 %v123, %v134
    %v139 = vmul.f32 %v124, %v134
    %v140 = vmul.f32 %v125, %v134
    %v141 = vmul.f32 %v126, %v134
    %v142 = vmul.f32 %v127, %v134
    %v143 = vmul.f32 %v128, %v134
    %v144 = vld [vmem:[%s3] sm:$0x1]
    %v146 = vlaneseq
    %v147 = vshrl.u32 %v146, 7
    %v148 = vsub.s32 0, %v147
    %v149 = vrot.slane %v144, %v148
    %v151 = vadd.f32 %v136, %v149
    %v152 = vadd.f32 %v137, %v149
    %v153 = vadd.f32 %v138, %v149
    %v154 = vadd.f32 %v139, %v149
    %v155 = vadd.f32 %v140, %v149
    %v156 = vadd.f32 %v141, %v149
    %v157 = vadd.f32 %v142, %v149
    %v158 = vadd.f32 %v143, %v149
    %v159 = vpack.c.bf16 %v152, %v151
    %v160 = vpack.c.bf16 %v154, %v153
    %v161 = vpack.c.bf16 %v156, %v155
    %v162 = vpack.c.bf16 %v158, %v157
    %v163 = vld [vmem:[%s4] sm:$0xff]
    %v164 = vld [vmem:[%s4 + $0x8] sm:$0xff]
    %v165 = vld [vmem:[%s4 + $0x10] sm:$0xff]
    %v166 = vld [vmem:[%s4 + $0x18] sm:$0xff]
    %v167 = vpack.c.bf16 %v164, %v163
    %v168 = vpack.c.bf16 %v166, %v165
    %v169 = vld [vmem:[%s5] sm:$0x1]
    %v171 = vlaneseq
    %v172 = vshrl.u32 %v171, 7
    %v173 = vsub.s32 0, %v172
    %v174 = vrot.slane %v169, %v173
    %v177 = vsel %vm43, %v159, 0
    %v180 = vsel %vm43, %v160, 0
    %v183 = vsel %vm43, %v161, 0
    %v186 = vsel %vm43, %v162, 0
    %188 = vmatprep.subr.bf16.mxu0 0
    %189 = vmatpush1.bf16.msra.mxu0 %v167
    %190 = vmatprep.subr.bf16.mxu0 0
    %191 = vmatpush1.bf16.msra.mxu0 %v168
    %192 = vmatprep.subr.bf16.mxu0 0
    %193 = vmatpush1.bf16.msra.mxu0 0
    %194 = vmatprep.subr.bf16.mxu0 0
    %195 = vmatpush1.bf16.msra.mxu0 0
    %196 = vmatprep.subr.bf16.mxu0 0
    %197 = vmatpush1.bf16.msra.mxu0 0
    %198 = vmatprep.subr.bf16.mxu0 0
    %199 = vmatpush1.bf16.msra.mxu0 0
    %200 = vmatprep.subr.bf16.mxu0 0
    %201 = vmatpush1.bf16.msra.mxu0 0
    %202 = vmatprep.subr.bf16.mxu0 0
    %203 = vmatpush1.bf16.msra.mxu0 0
    %204 = vmatprep.subr.bf16.mxu0 0
    %205 = vmatpush1.bf16.msra.mxu0 0
    %206 = vmatprep.subr.bf16.mxu0 0
    %207 = vmatpush1.bf16.msra.mxu0 0
    %208 = vmatprep.subr.bf16.mxu0 0
    %209 = vmatpush1.bf16.msra.mxu0 0
    %210 = vmatprep.subr.bf16.mxu0 0
    %211 = vmatpush1.bf16.msra.mxu0 0
    %212 = vmatprep.subr.bf16.mxu0 0
    %213 = vmatpush1.bf16.msra.mxu0 0
    %214 = vmatprep.subr.bf16.mxu0 0
    %215 = vmatpush1.bf16.msra.mxu0 0
    %216 = vmatprep.subr.bf16.mxu0 0
    %217 = vmatpush1.bf16.msra.mxu0 0
    %218 = vmatprep.subr.bf16.mxu0 0
    %219 = vmatpush1.bf16.msra.mxu0 0
    %220 = vmatprep.mubr.bf16.mxu0 0
    %221 = vmatmul.mubr.bf16.gmra.mrb[0].mxu0 %v177
    %v222 = vpop.f32.mrb[0].mxu0
    %v223 = vadd.f32 %v174, %v222
    %v224 = vpop.f32.mrb[0].mxu0
    %v225 = vpop.f32.mrb[0].mxu0
    %v226 = vadd.f32 %v174, %v225
    %v227 = vpop.f32.mrb[0].mxu0
    %228 = vmatprep.mubr.bf16.mxu0 0
    %229 = vmatmul.mubr.bf16.gmra.mrb[0].mxu0 %v180
    %v230 = vpop.f32.mrb[0].mxu0
    %v231 = vadd.f32 %v174, %v230
    %v232 = vpop.f32.mrb[0].mxu0
    %v233 = vpop.f32.mrb[0].mxu0
    %v234 = vadd.f32 %v174, %v233
    %v235 = vpop.f32.mrb[0].mxu0
    %236 = vmatprep.mubr.bf16.mxu0 0
    %237 = vmatmul.mubr.bf16.gmra.mrb[0].mxu0 %v183
    %v238 = vpop.f32.mrb[0].mxu0
    %v239 = vadd.f32 %v174, %v238
    %v240 = vpop.f32.mrb[0].mxu0
    %v241 = vpop.f32.mrb[0].mxu0
    %v242 = vadd.f32 %v174, %v241
    %v243 = vpop.f32.mrb[0].mxu0
    %244 = vmatprep.mubr.bf16.mxu0 0
    %245 = vmatmul.mubr.bf16.gmra.mrb[0].mxu0 %v186
    %v246 = vpop.f32.mrb[0].mxu0
    %v247 = vadd.f32 %v174, %v246
    %v248 = vpop.f32.mrb[0].mxu0
    %v249 = vpop.f32.mrb[0].mxu0
    %v250 = vadd.f32 %v174, %v249
    %v251 = vpop.f32.mrb[0].mxu0
    %252 = vdwg.mxu0
    %vm253 = vcmask 130048
    %254 = vst.msk [vmem:[#allocation2] sm:$0xff] %vm253, %v223
    %255 = vst.msk [vmem:[#allocation2 + $0x8] sm:$0xff] %vm253, %v226
    %256 = vst.msk [vmem:[#allocation2 + $0x10] sm:$0xff] %vm253, %v231
    %257 = vst.msk [vmem:[#allocation2 + $0x18] sm:$0xff] %vm253, %v234
    %258 = vst.msk [vmem:[#allocation2 + $0x20] sm:$0xff] %vm253, %v239
    %259 = vst.msk [vmem:[#allocation2 + $0x28] sm:$0xff] %vm253, %v242
    %260 = vst.msk [vmem:[#allocation2 + $0x30] sm:$0xff] %vm253, %v247
    %261 = vst.msk [vmem:[#allocation2 + $0x38] sm:$0xff] %vm253, %v250
    // Predicated region
    $region26: #{weighted_graph_model_forward.3} parent=1 // pred_check
      _
    $region27: #{weighted_graph_model_forward.3} parent=1 // pred_check_branch
      %263 = sbr.rel (0) target = $region29
    $region28: #{weighted_graph_model_forward.3} parent=1 // pred_region
      %s265 = ssub.s32 1024, 1024
      %266 = vsyncadd [#allocation3], %s265
      %s267 = sshll.u32 [#allocation2], 4
      %s268 = int_to_ptr.vmem [resolvable:$true] %s267
      %273 = dma.vmem_to_hbm [thread:$0]  %s268, 1024, %s6, [#allocation3], 128, 128, 8
    $region29: #{weighted_graph_model_forward.3} parent=1 // pred_fallthru
      _
    // Predicated region
    $region30: #{weighted_graph_model_forward.3} parent=1 // pred_check
      _
    $region31: #{weighted_graph_model_forward.3} parent=1 // pred_check_branch
      %275 = sbr.rel (0) target = $region33
    $region32: #{weighted_graph_model_forward.3} parent=1 // pred_region
      %276 = dma.done [#allocation3], 1024
    $region33: #{weighted_graph_model_forward.3} parent=1 // pred_fallthru
      _
    %277 = vsyncpa [#allocation3], 1

// kernel: weighted_graph_model_forward.2
$region0: #{weighted_graph_model_forward.2}
  #allocation0 [shape = 'u32[]', space=smem, size = 0x4, offset = 0x4, fixed_abs, tag = 'smem constant byte address 0x4 - core index']
  #allocation1 [shape = 'u32[144,128]{1,0:T(1,128)}', space=vmem, size = 0x12000, scoped, tag = 'internal scratch']
  #allocation2 [shape = 'f32[12,8,32]{2,1,0:T(8,128)}', space=vmem, size = 0xc000, scoped, tag = 'scratch operand']
  %s0 = inlined_call_operand.hbm [shape: f32[2,8,8,16], index: 0, kind: input, shape index: {}]
  %s1 = inlined_call_operand.hbm [shape: f32[2,8,8,8], index: 1, kind: input, shape index: {}]
  %s2 = inlined_call_operand.hbm [shape: f32[16,32], index: 2, kind: input, shape index: {}]
  %s3 = inlined_call_operand.vmem [shape: f32[1,32], index: 3, kind: input, shape index: {}, may-alias: {3,17,21}]
  %s4 = inlined_call_operand.vmem [shape: f32[1,32], index: 4, kind: input, shape index: {}, may-alias: {4,18,22}]
  %s5 = inlined_call_operand.hbm [shape: f32[32,32], index: 5, kind: input, shape index: {}]
  %s6 = inlined_call_operand.vmem [shape: f32[1,32], index: 6, kind: input, shape index: {}]
  %s7 = inlined_call_operand.hbm [shape: f32[32,32], index: 7, kind: input, shape index: {}]
  %s8 = inlined_call_operand.hbm [shape: f32[32,32], index: 8, kind: input, shape index: {}]
  %s9 = inlined_call_operand.vmem [shape: f32[64,1], index: 9, kind: input, shape index: {}, may-alias: {9,13}]
  %s10 = inlined_call_operand.vmem [shape: f32[64,1], index: 10, kind: input, shape index: {}, may-alias: {10,14}]
  %s11 = inlined_call_operand.hbm [shape: f32[32,32], index: 11, kind: input, shape index: {}]
  %s12 = inlined_call_operand.hbm [shape: f32[32,32], index: 12, kind: input, shape index: {}]
  %s13 = inlined_call_operand.vmem [shape: f32[64,1], index: 13, kind: input, shape index: {}, may-alias: {9,13}]
  %s14 = inlined_call_operand.vmem [shape: f32[64,1], index: 14, kind: input, shape index: {}, may-alias: {10,14}]
  %s15 = inlined_call_operand.hbm [shape: f32[5,32,32], index: 15, kind: input, shape index: {}]
  %s16 = inlined_call_operand.vmem [shape: f32[1,32], index: 16, kind: input, shape index: {}]
  %s17 = inlined_call_operand.vmem [shape: f32[1,32], index: 17, kind: input, shape index: {}, may-alias: {3,17,21}]
  %s18 = inlined_call_operand.vmem [shape: f32[1,32], index: 18, kind: input, shape index: {}, may-alias: {4,18,22}]
  %s19 = inlined_call_operand.vmem [shape: f32[5,32,32], index: 19, kind: input, shape index: {}]
  %s20 = inlined_call_operand.vmem [shape: f32[1,32], index: 20, kind: input, shape index: {}]
  %s21 = inlined_call_operand.vmem [shape: f32[1,32], index: 21, kind: input, shape index: {}, may-alias: {3,17,21}]
  %s22 = inlined_call_operand.vmem [shape: f32[1,32], index: 22, kind: input, shape index: {}, may-alias: {4,18,22}]
  %s23 = inlined_call_operand.hbm [shape: f32[32,64], index: 23, kind: input, shape index: {}]
  %s24 = inlined_call_operand.vmem [shape: f32[32,1], index: 24, kind: input, shape index: {}]
  %s25 = inlined_call_operand.vmem [shape: f32[2,32,32], index: 25, kind: output, shape index: {}]
  %s26 = sld [smem:[#allocation0]]
  $region173: #{weighted_graph_model_forward.2} parent=0
    _
  %s28 = ssub.s32 1, %s26
  %s29 = scalar_select 0, %s28, %s26
  $region1: #{weighted_graph_model_forward.2} parent=0
    #allocation3 [shape = 'u8[65536]{0}', space=vmem, size = 0x10000, scoped, tag = 'input window, operand 0']
    #allocation4 [shape = 's32[2]{0}', space=sflag, size = 0x8, scoped, tag = 'scoped memory for weighted_graph_model_forward.2']
    #allocation5 [shape = 'u8[65536]{0}', space=vmem, size = 0x10000, scoped, tag = 'input window, operand 1']
    #allocation6 [shape = 's32[2]{0}', space=sflag, size = 0x8, scoped, tag = 'scoped memory for weighted_graph_model_forward.2']
    #allocation7 [shape = 'u8[8192]{0}', space=vmem, size = 0x2000, scoped, tag = 'input window, operand 2, single buffered']
    #allocation8 [shape = 'u8[16384]{0}', space=vmem, size = 0x4000, scoped, tag = 'input window, operand 5, single buffered']
    #allocation9 [shape = 's32[1]{0}', space=sflag, size = 0x4, scoped, tag = 'scoped memory for weighted_graph_model_forward.2']
    #allocation10 [shape = 'u8[16384]{0}', space=vmem, size = 0x4000, scoped, tag = 'input window, operand 7, single buffered']
    #allocation11 [shape = 'u8[16384]{0}', space=vmem, size = 0x4000, scoped, tag = 'input window, operand 8, single buffered']
    #allocation12 [shape = 's32[1]{0}', space=sflag, size = 0x4, scoped, tag = 'scoped memory for weighted_graph_model_forward.2']
    #allocation13 [shape = 'u8[16384]{0}', space=vmem, size = 0x4000, scoped, tag = 'input window, operand 11, single buffered']
    #allocation14 [shape = 'u8[16384]{0}', space=vmem, size = 0x4000, scoped, tag = 'input window, operand 12, single buffered']
    #allocation15 [shape = 's32[1]{0}', space=sflag, size = 0x4, scoped, tag = 'scoped memory for weighted_graph_model_forward.2']
    #allocation16 [shape = 'u8[81920]{0}', space=vmem, size = 0x14000, scoped, tag = 'input window, operand 15, single buffered']
    #allocation17 [shape = 'u8[16384]{0}', space=vmem, size = 0x4000, scoped, tag = 'input window, operand 23, single buffered']
    #allocation18 [shape = 's32[1]{0}', space=sflag, size = 0x4, scoped, tag = 'scoped memory for weighted_graph_model_forward.2']
    %30 = vsyncpa [#allocation4], 0
    %s31 = scalar_lea.sflag [#allocation4], 1
    %32 = vsyncpa %s31, 0
    %33 = vsyncpa [#allocation6], 0
    %s34 = scalar_lea.sflag [#allocation6], 1
    %35 = vsyncpa %s34, 0
    %36 = vsyncpa [#allocation9], 0
    %37 = vsyncpa [#allocation12], 0
    %38 = vsyncpa [#allocation15], 0
    %39 = vsyncpa [#allocation18], 0
    loop: start=0, step=1, limit=4
    $region2: #{weighted_graph_model_forward.2} parent=1 // loop_pre_header
      _
    $region3: #{weighted_graph_model_forward.2} parent=1 // loop_header
      %s41 = sphi 0, %s45
      %p42 = scmp.ge.s32.totalorder %s41, 4
      %s51 = sphi 0, %s53
      %s54 = sphi 0, %s51
      %s55 = sphi 0, %s54
      %s71 = sphi 0, %s55
      %s77 = sphi 0, %s79
      %s80 = sphi 0, %s77
      %s81 = sphi 0, %s80
      %s97 = sphi 0, %s81
      %s101 = sphi 0, %s101
      %s103 = sphi 0, %s101
      %s104 = sphi 0, %s103
      %s118 = sphi 0, %s104
      %s122 = sphi 0, %s122
      %s124 = sphi 0, %s122
      %s125 = sphi 0, %s124
      %s139 = sphi 0, %s125
      %s143 = sphi 0, %s143
      %s145 = sphi 0, %s143
      %s146 = sphi 0, %s145
      %s160 = sphi 0, %s146
      %s164 = sphi 0, %s164
      %s166 = sphi 0, %s164
      %s167 = sphi 0, %s166
      %s181 = sphi 0, %s167
      %s185 = sphi 0, %s185
      %s187 = sphi 0, %s185
      %s188 = sphi 0, %s187
      %s202 = sphi 0, %s188
      %s206 = sphi 0, %s206
      %s208 = sphi 0, %s206
      %s209 = sphi 0, %s208
      %s223 = sphi 0, %s209
      %s227 = sphi 0, %s227
      %s229 = sphi 0, %s227
      %s230 = sphi 0, %s229
      %s244 = sphi 0, %s230
      %s248 = sphi 0, %s248
      %s250 = sphi 0, %s248
      %s251 = sphi 0, %s250
      %s265 = sphi 0, %s251
      %s269 = sphi 0, %s269
      %s271 = sphi 0, %s269
      %s272 = sphi 0, %s271
      %s286 = sphi 0, %s272
      %s290 = sphi 0, %s290
      %s292 = sphi 0, %s290
      %s293 = sphi 0, %s292
      %s307 = sphi 0, %s293
      %s311 = sphi 0, %s311
      %s313 = sphi 0, %s311
      %s314 = sphi 0, %s313
      %s328 = sphi 0, %s314
      %s332 = sphi 0, %s332
      %s334 = sphi 0, %s332
      %s335 = sphi 0, %s334
      %s349 = sphi 0, %s335
      %s353 = sphi 0, %s353
      %s355 = sphi 0, %s353
      %s356 = sphi 0, %s355
      %s370 = sphi 0, %s356
      %s374 = sphi 0, %s374
      %s376 = sphi 0, %s374
      %s377 = sphi 0, %s376
      %s391 = sphi 0, %s377
      %s395 = sphi 0, %s395
      %s397 = sphi 0, %s395
      %s398 = sphi 0, %s397
      %s412 = sphi 0, %s398
      %s416 = sphi 0, %s416
      %s418 = sphi 0, %s416
      %s419 = sphi 0, %s418
      %s433 = sphi 0, %s419
      %s437 = sphi 0, %s437
      %s439 = sphi 0, %s437
      %s440 = sphi 0, %s439
      %s454 = sphi 0, %s440
      %s458 = sphi 0, %s458
      %s460 = sphi 0, %s458
      %s461 = sphi 0, %s460
      %s475 = sphi 0, %s461
      %s479 = sphi 0, %s479
      %s481 = sphi 0, %s479
      %s482 = sphi 0, %s481
      %s496 = sphi 0, %s482
      %s500 = sphi 0, %s500
      %s502 = sphi 0, %s500
      %s503 = sphi 0, %s502
      %s517 = sphi 0, %s503
      %s521 = sphi 0, %s521
      %s523 = sphi 0, %s521
      %s524 = sphi 0, %s523
      %s538 = sphi 0, %s524
      %s542 = sphi 0, %s542
      %s544 = sphi 0, %s542
      %s545 = sphi 0, %s544
      %s559 = sphi 0, %s545
      %s563 = sphi 0, %s563
      %s565 = sphi 0, %s563
      %s566 = sphi 0, %s565
      %s580 = sphi 0, %s566
      %s586 = sphi 0, %s588
      %s589 = sphi 0, %s586
      %s590 = sphi 0, %s589
      %s606 = sphi 0, %s590
    $region4: #{weighted_graph_model_forward.2} parent=1 // loop_header_branch
      %44 = sbr.rel (%p42) target = $region8
    $region5: #{weighted_graph_model_forward.2} parent=1 // loop_body
      %s46 = ssub.s32 %s41, 1
      %s47 = ssub.s32 %s41, 2
      %s48 = sadd.s32 %s41, 1
      %s49 = ssub.s32 %s41, %s48
      %p50 = scmp.eq.s32.totalorder %s49, 0
      %s52 = sadd.s32 %s51, 1
      %s53 = scalar_select %p50, %s51, %s52
      %p56 = pneg %p50
      %p57 = scmp.eq.s32.totalorder %s41, 1
      %p58 = por %p56, %p57
      %p59 = scmp.ne.s32.totalorder %s51, %s54
      %p60 = scmp.eq.s32.totalorder %s41, 0
      %p61 = por %p59, %p60
      %p62 = scmp.ne.s32.totalorder %s51, %s54
      %p63 = scmp.eq.s32.totalorder %s46, 1
      %p64 = por %p62, %p63
      %p65 = scmp.ne.s32.totalorder %s54, %s55
      %p66 = scmp.eq.s32.totalorder %s46, 0
      %p67 = por %p65, %p66
      %p68 = scmp.ne.s32.totalorder %s54, %s55
      %p69 = scmp.eq.s32.totalorder %s47, 1
      %p70 = por %p68, %p69
      %p72 = scmp.ne.s32.totalorder %s55, %s71
      %p73 = scmp.eq.s32.totalorder %s47, 0
      %p74 = por %p72, %p73
      %s75 = ssub.s32 %s41, %s48
      %p76 = scmp.eq.s32.totalorder %s75, 0
      %s78 = sadd.s32 %s77, 1
      %s79 = scalar_select %p76, %s77, %s78
      %p82 = pneg %p76
      %p83 = scmp.eq.s32.totalorder %s41, 1
      %p84 = por %p82, %p83
      %p85 = scmp.ne.s32.totalorder %s77, %s80
      %p86 = scmp.eq.s32.totalorder %s41, 0
      %p87 = por %p85, %p86
      %p88 = scmp.ne.s32.totalorder %s77, %s80
      %p89 = scmp.eq.s32.totalorder %s46, 1
      %p90 = por %p88, %p89
      %p91 = scmp.ne.s32.totalorder %s80, %s81
      %p92 = scmp.eq.s32.totalorder %s46, 0
      %p93 = por %p91, %p92
      %p94 = scmp.ne.s32.totalorder %s80, %s81
      %p95 = scmp.eq.s32.totalorder %s47, 1
      %p96 = por %p94, %p95
      %p98 = scmp.ne.s32.totalorder %s81, %s97
      %p99 = scmp.eq.s32.totalorder %s47, 0
      %p100 = por %p98, %p99
      %s102 = sadd.s32 %s101, 1
      %p105 = scmp.eq.s32.totalorder %s41, 1
      %p106 = scmp.ne.s32.totalorder %s101, %s103
      %p107 = scmp.eq.s32.totalorder %s41, 0
      %p108 = por %p106, %p107
      %p109 = scmp.ne.s32.totalorder %s101, %s103
      %p110 = scmp.eq.s32.totalorder %s46, 1
      %p111 = por %p109, %p110
      %p112 = scmp.ne.s32.totalorder %s103, %s104
      %p113 = scmp.eq.s32.totalorder %s46, 0
      %p114 = por %p112, %p113
      %p115 = scmp.ne.s32.totalorder %s103, %s104
      %p116 = scmp.eq.s32.totalorder %s47, 1
      %p117 = por %p115, %p116
      %p119 = scmp.ne.s32.totalorder %s104, %s118
      %p120 = scmp.eq.s32.totalorder %s47, 0
      %p121 = por %p119, %p120
      %s123 = sadd.s32 %s122, 1
      %p126 = scmp.eq.s32.totalorder %s41, 1
      %p127 = scmp.ne.s32.totalorder %s122, %s124
      %p128 = scmp.eq.s32.totalorder %s41, 0
      %p129 = por %p127, %p128
      %p130 = scmp.ne.s32.totalorder %s122, %s124
      %p131 = scmp.eq.s32.totalorder %s46, 1
      %p132 = por %p130, %p131
      %p133 = scmp.ne.s32.totalorder %s124, %s125
      %p134 = scmp.eq.s32.totalorder %s46, 0
      %p135 = por %p133, %p134
      %p136 = scmp.ne.s32.totalorder %s124, %s125
      %p137 = scmp.eq.s32.totalorder %s47, 1
      %p138 = por %p136, %p137
      %p140 = scmp.ne.s32.totalorder %s125, %s139
      %p141 = scmp.eq.s32.totalorder %s47, 0
      %p142 = por %p140, %p141
      %s144 = sadd.s32 %s143, 1
      %p147 = scmp.eq.s32.totalorder %s41, 1
      %p148 = scmp.ne.s32.totalorder %s143, %s145
      %p149 = scmp.eq.s32.totalorder %s41, 0
      %p150 = por %p148, %p149
      %p151 = scmp.ne.s32.totalorder %s143, %s145
      %p152 = scmp.eq.s32.totalorder %s46, 1
      %p153 = por %p151, %p152
      %p154 = scmp.ne.s32.totalorder %s145, %s146
      %p155 = scmp.eq.s32.totalorder %s46, 0
      %p156 = por %p154, %p155
      %p157 = scmp.ne.s32.totalorder %s145, %s146
      %p158 = scmp.eq.s32.totalorder %s47, 1
      %p159 = por %p157, %p158
      %p161 = scmp.ne.s32.totalorder %s146, %s160
      %p162 = scmp.eq.s32.totalorder %s47, 0
      %p163 = por %p161, %p162
      %s165 = sadd.s32 %s164, 1
      %p168 = scmp.eq.s32.totalorder %s41, 1
      %p169 = scmp.ne.s32.totalorder %s164, %s166
      %p170 = scmp.eq.s32.totalorder %s41, 0
      %p171 = por %p169, %p170
      %p172 = scmp.ne.s32.totalorder %s164, %s166
      %p173 = scmp.eq.s32.totalorder %s46, 1
      %p174 = por %p172, %p173
      %p175 = scmp.ne.s32.totalorder %s166, %s167
      %p176 = scmp.eq.s32.totalorder %s46, 0
      %p177 = por %p175, %p176
      %p178 = scmp.ne.s32.totalorder %s166, %s167
      %p179 = scmp.eq.s32.totalorder %s47, 1
      %p180 = por %p178, %p179
      %p182 = scmp.ne.s32.totalorder %s167, %s181
      %p183 = scmp.eq.s32.totalorder %s47, 0
      %p184 = por %p182, %p183
      %s186 = sadd.s32 %s185, 1
      %p189 = scmp.eq.s32.totalorder %s41, 1
      %p190 = scmp.ne.s32.totalorder %s185, %s187
      %p191 = scmp.eq.s32.totalorder %s41, 0
      %p192 = por %p190, %p191
      %p193 = scmp.ne.s32.totalorder %s185, %s187
      %p194 = scmp.eq.s32.totalorder %s46, 1
      %p195 = por %p193, %p194
      %p196 = scmp.ne.s32.totalorder %s187, %s188
      %p197 = scmp.eq.s32.totalorder %s46, 0
      %p198 = por %p196, %p197
      %p199 = scmp.ne.s32.totalorder %s187, %s188
      %p200 = scmp.eq.s32.totalorder %s47, 1
      %p201 = por %p199, %p200
      %p203 = scmp.ne.s32.totalorder %s188, %s202
      %p204 = scmp.eq.s32.totalorder %s47, 0
      %p205 = por %p203, %p204
      %s207 = sadd.s32 %s206, 1
      %p210 = scmp.eq.s32.totalorder %s41, 1
      %p211 = scmp.ne.s32.totalorder %s206, %s208
      %p212 = scmp.eq.s32.totalorder %s41, 0
      %p213 = por %p211, %p212
      %p214 = scmp.ne.s32.totalorder %s206, %s208
      %p215 = scmp.eq.s32.totalorder %s46, 1
      %p216 = por %p214, %p215
      %p217 = scmp.ne.s32.totalorder %s208, %s209
      %p218 = scmp.eq.s32.totalorder %s46, 0
      %p219 = por %p217, %p218
      %p220 = scmp.ne.s32.totalorder %s208, %s209
      %p221 = scmp.eq.s32.totalorder %s47, 1
      %p222 = por %p220, %p221
      %p224 = scmp.ne.s32.totalorder %s209, %s223
      %p225 = scmp.eq.s32.totalorder %s47, 0
      %p226 = por %p224, %p225
      %s228 = sadd.s32 %s227, 1
      %p231 = scmp.eq.s32.totalorder %s41, 1
      %p232 = scmp.ne.s32.totalorder %s227, %s229
      %p233 = scmp.eq.s32.totalorder %s41, 0
      %p234 = por %p232, %p233
      %p235 = scmp.ne.s32.totalorder %s227, %s229
      %p236 = scmp.eq.s32.totalorder %s46, 1
      %p237 = por %p235, %p236
      %p238 = scmp.ne.s32.totalorder %s229, %s230
      %p239 = scmp.eq.s32.totalorder %s46, 0
      %p240 = por %p238, %p239
      %p241 = scmp.ne.s32.totalorder %s229, %s230
      %p242 = scmp.eq.s32.totalorder %s47, 1
      %p243 = por %p241, %p242
      %p245 = scmp.ne.s32.totalorder %s230, %s244
      %p246 = scmp.eq.s32.totalorder %s47, 0
      %p247 = por %p245, %p246
      %s249 = sadd.s32 %s248, 1
      %p252 = scmp.eq.s32.totalorder %s41, 1
      %p253 = scmp.ne.s32.totalorder %s248, %s250
      %p254 = scmp.eq.s32.totalorder %s41, 0
      %p255 = por %p253, %p254
      %p256 = scmp.ne.s32.totalorder %s248, %s250
      %p257 = scmp.eq.s32.totalorder %s46, 1
      %p258 = por %p256, %p257
      %p259 = scmp.ne.s32.totalorder %s250, %s251
      %p260 = scmp.eq.s32.totalorder %s46, 0
      %p261 = por %p259, %p260
      %p262 = scmp.ne.s32.totalorder %s250, %s251
      %p263 = scmp.eq.s32.totalorder %s47, 1
      %p264 = por %p262, %p263
      %p266 = scmp.ne.s32.totalorder %s251, %s265
      %p267 = scmp.eq.s32.totalorder %s47, 0
      %p268 = por %p266, %p267
      %s270 = sadd.s32 %s269, 1
      %p273 = scmp.eq.s32.totalorder %s41, 1
      %p274 = scmp.ne.s32.totalorder %s269, %s271
      %p275 = scmp.eq.s32.totalorder %s41, 0
      %p276 = por %p274, %p275
      %p277 = scmp.ne.s32.totalorder %s269, %s271
      %p278 = scmp.eq.s32.totalorder %s46, 1
      %p279 = por %p277, %p278
      %p280 = scmp.ne.s32.totalorder %s271, %s272
      %p281 = scmp.eq.s32.totalorder %s46, 0
      %p282 = por %p280, %p281
      %p283 = scmp.ne.s32.totalorder %s271, %s272
      %p284 = scmp.eq.s32.totalorder %s47, 1
      %p285 = por %p283, %p284
      %p287 = scmp.ne.s32.totalorder %s272, %s286
      %p288 = scmp.eq.s32.totalorder %s47, 0
      %p289 = por %p287, %p288
      %s291 = sadd.s32 %s290, 1
      %p294 = scmp.eq.s32.totalorder %s41, 1
      %p295 = scmp.ne.s32.totalorder %s290, %s292
      %p296 = scmp.eq.s32.totalorder %s41, 0
      %p297 = por %p295, %p296
      %p298 = scmp.ne.s32.totalorder %s290, %s292
      %p299 = scmp.eq.s32.totalorder %s46, 1
      %p300 = por %p298, %p299
      %p301 = scmp.ne.s32.totalorder %s292, %s293
      %p302 = scmp.eq.s32.totalorder %s46, 0
      %p303 = por %p301, %p302
      %p304 = scmp.ne.s32.totalorder %s292, %s293
      %p305 = scmp.eq.s32.totalorder %s47, 1
      %p306 = por %p304, %p305
      %p308 = scmp.ne.s32.totalorder %s293, %s307
      %p309 = scmp.eq.s32.totalorder %s47, 0
      %p310 = por %p308, %p309
      %s312 = sadd.s32 %s311, 1
      %p315 = scmp.eq.s32.totalorder %s41, 1
      %p316 = scmp.ne.s32.totalorder %s311, %s313
      %p317 = scmp.eq.s32.totalorder %s41, 0
      %p318 = por %p316, %p317
      %p319 = scmp.ne.s32.totalorder %s311, %s313
      %p320 = scmp.eq.s32.totalorder %s46, 1
      %p321 = por %p319, %p320
      %p322 = scmp.ne.s32.totalorder %s313, %s314
      %p323 = scmp.eq.s32.totalorder %s46, 0
      %p324 = por %p322, %p323
      %p325 = scmp.ne.s32.totalorder %s313, %s314
      %p326 = scmp.eq.s32.totalorder %s47, 1
      %p327 = por %p325, %p326
      %p329 = scmp.ne.s32.totalorder %s314, %s328
      %p330 = scmp.eq.s32.totalorder %s47, 0
      %p331 = por %p329, %p330
      %s333 = sadd.s32 %s332, 1
      %p336 = scmp.eq.s32.totalorder %s41, 1
      %p337 = scmp.ne.s32.totalorder %s332, %s334
      %p338 = scmp.eq.s32.totalorder %s41, 0
      %p339 = por %p337, %p338
      %p340 = scmp.ne.s32.totalorder %s332, %s334
      %p341 = scmp.eq.s32.totalorder %s46, 1
      %p342 = por %p340, %p341
      %p343 = scmp.ne.s32.totalorder %s334, %s335
      %p344 = scmp.eq.s32.totalorder %s46, 0
      %p345 = por %p343, %p344
      %p346 = scmp.ne.s32.totalorder %s334, %s335
      %p347 = scmp.eq.s32.totalorder %s47, 1
      %p348 = por %p346, %p347
      %p350 = scmp.ne.s32.totalorder %s335, %s349
      %p351 = scmp.eq.s32.totalorder %s47, 0
      %p352 = por %p350, %p351
      %s354 = sadd.s32 %s353, 1
      %p357 = scmp.eq.s32.totalorder %s41, 1
      %p358 = scmp.ne.s32.totalorder %s353, %s355
      %p359 = scmp.eq.s32.totalorder %s41, 0
      %p360 = por %p358, %p359
      %p361 = scmp.ne.s32.totalorder %s353, %s355
      %p362 = scmp.eq.s32.totalorder %s46, 1
      %p363 = por %p361, %p362
      %p364 = scmp.ne.s32.totalorder %s355, %s356
      %p365 = scmp.eq.s32.totalorder %s46, 0
      %p366 = por %p364, %p365
      %p367 = scmp.ne.s32.totalorder %s355, %s356
      %p368 = scmp.eq.s32.totalorder %s47, 1
      %p369 = por %p367, %p368
      %p371 = scmp.ne.s32.totalorder %s356, %s370
      %p372 = scmp.eq.s32.totalorder %s47, 0
      %p373 = por %p371, %p372
      %s375 = sadd.s32 %s374, 1
      %p378 = scmp.eq.s32.totalorder %s41, 1
      %p379 = scmp.ne.s32.totalorder %s374, %s376
      %p380 = scmp.eq.s32.totalorder %s41, 0
      %p381 = por %p379, %p380
      %p382 = scmp.ne.s32.totalorder %s374, %s376
      %p383 = scmp.eq.s32.totalorder %s46, 1
      %p384 = por %p382, %p383
      %p385 = scmp.ne.s32.totalorder %s376, %s377
      %p386 = scmp.eq.s32.totalorder %s46, 0
      %p387 = por %p385, %p386
      %p388 = scmp.ne.s32.totalorder %s376, %s377
      %p389 = scmp.eq.s32.totalorder %s47, 1
      %p390 = por %p388, %p389
      %p392 = scmp.ne.s32.totalorder %s377, %s391
      %p393 = scmp.eq.s32.totalorder %s47, 0
      %p394 = por %p392, %p393
      %s396 = sadd.s32 %s395, 1
      %p399 = scmp.eq.s32.totalorder %s41, 1
      %p400 = scmp.ne.s32.totalorder %s395, %s397
      %p401 = scmp.eq.s32.totalorder %s41, 0
      %p402 = por %p400, %p401
      %p403 = scmp.ne.s32.totalorder %s395, %s397
      %p404 = scmp.eq.s32.totalorder %s46, 1
      %p405 = por %p403, %p404
      %p406 = scmp.ne.s32.totalorder %s397, %s398
      %p407 = scmp.eq.s32.totalorder %s46, 0
      %p408 = por %p406, %p407
      %p409 = scmp.ne.s32.totalorder %s397, %s398
      %p410 = scmp.eq.s32.totalorder %s47, 1
      %p411 = por %p409, %p410
      %p413 = scmp.ne.s32.totalorder %s398, %s412
      %p414 = scmp.eq.s32.totalorder %s47, 0
      %p415 = por %p413, %p414
      %s417 = sadd.s32 %s416, 1
      %p420 = scmp.eq.s32.totalorder %s41, 1
      %p421 = scmp.ne.s32.totalorder %s416, %s418
      %p422 = scmp.eq.s32.totalorder %s41, 0
      %p423 = por %p421, %p422
      %p424 = scmp.ne.s32.totalorder %s416, %s418
      %p425 = scmp.eq.s32.totalorder %s46, 1
      %p426 = por %p424, %p425
      %p427 = scmp.ne.s32.totalorder %s418, %s419
      %p428 = scmp.eq.s32.totalorder %s46, 0
      %p429 = por %p427, %p428
      %p430 = scmp.ne.s32.totalorder %s418, %s419
      %p431 = scmp.eq.s32.totalorder %s47, 1
      %p432 = por %p430, %p431
      %p434 = scmp.ne.s32.totalorder %s419, %s433
      %p435 = scmp.eq.s32.totalorder %s47, 0
      %p436 = por %p434, %p435
      %s438 = sadd.s32 %s437, 1
      %p441 = scmp.eq.s32.totalorder %s41, 1
      %p442 = scmp.ne.s32.totalorder %s437, %s439
      %p443 = scmp.eq.s32.totalorder %s41, 0
      %p444 = por %p442, %p443
      %p445 = scmp.ne.s32.totalorder %s437, %s439
      %p446 = scmp.eq.s32.totalorder %s46, 1
      %p447 = por %p445, %p446
      %p448 = scmp.ne.s32.totalorder %s439, %s440
      %p449 = scmp.eq.s32.totalorder %s46, 0
      %p450 = por %p448, %p449
      %p451 = scmp.ne.s32.totalorder %s439, %s440
      %p452 = scmp.eq.s32.totalorder %s47, 1
      %p453 = por %p451, %p452
      %p455 = scmp.ne.s32.totalorder %s440, %s454
      %p456 = scmp.eq.s32.totalorder %s47, 0
      %p457 = por %p455, %p456
      %s459 = sadd.s32 %s458, 1
      %p462 = scmp.eq.s32.totalorder %s41, 1
      %p463 = scmp.ne.s32.totalorder %s458, %s460
      %p464 = scmp.eq.s32.totalorder %s41, 0
      %p465 = por %p463, %p464
      %p466 = scmp.ne.s32.totalorder %s458, %s460
      %p467 = scmp.eq.s32.totalorder %s46, 1
      %p468 = por %p466, %p467
      %p469 = scmp.ne.s32.totalorder %s460, %s461
      %p470 = scmp.eq.s32.totalorder %s46, 0
      %p471 = por %p469, %p470
      %p472 = scmp.ne.s32.totalorder %s460, %s461
      %p473 = scmp.eq.s32.totalorder %s47, 1
      %p474 = por %p472, %p473
      %p476 = scmp.ne.s32.totalorder %s461, %s475
      %p477 = scmp.eq.s32.totalorder %s47, 0
      %p478 = por %p476, %p477
      %s480 = sadd.s32 %s479, 1
      %p483 = scmp.eq.s32.totalorder %s41, 1
      %p484 = scmp.ne.s32.totalorder %s479, %s481
      %p485 = scmp.eq.s32.totalorder %s41, 0
      %p486 = por %p484, %p485
      %p487 = scmp.ne.s32.totalorder %s479, %s481
      %p488 = scmp.eq.s32.totalorder %s46, 1
      %p489 = por %p487, %p488
      %p490 = scmp.ne.s32.totalorder %s481, %s482
      %p491 = scmp.eq.s32.totalorder %s46, 0
      %p492 = por %p490, %p491
      %p493 = scmp.ne.s32.totalorder %s481, %s482
      %p494 = scmp.eq.s32.totalorder %s47, 1
      %p495 = por %p493, %p494
      %p497 = scmp.ne.s32.totalorder %s482, %s496
      %p498 = scmp.eq.s32.totalorder %s47, 0
      %p499 = por %p497, %p498
      %s501 = sadd.s32 %s500, 1
      %p504 = scmp.eq.s32.totalorder %s41, 1
      %p505 = scmp.ne.s32.totalorder %s500, %s502
      %p506 = scmp.eq.s32.totalorder %s41, 0
      %p507 = por %p505, %p506
      %p508 = scmp.ne.s32.totalorder %s500, %s502
      %p509 = scmp.eq.s32.totalorder %s46, 1
      %p510 = por %p508, %p509
      %p511 = scmp.ne.s32.totalorder %s502, %s503
      %p512 = scmp.eq.s32.totalorder %s46, 0
      %p513 = por %p511, %p512
      %p514 = scmp.ne.s32.totalorder %s502, %s503
      %p515 = scmp.eq.s32.totalorder %s47, 1
      %p516 = por %p514, %p515
      %p518 = scmp.ne.s32.totalorder %s503, %s517
      %p519 = scmp.eq.s32.totalorder %s47, 0
      %p520 = por %p518, %p519
      %s522 = sadd.s32 %s521, 1
      %p525 = scmp.eq.s32.totalorder %s41, 1
      %p526 = scmp.ne.s32.totalorder %s521, %s523
      %p527 = scmp.eq.s32.totalorder %s41, 0
      %p528 = por %p526, %p527
      %p529 = scmp.ne.s32.totalorder %s521, %s523
      %p530 = scmp.eq.s32.totalorder %s46, 1
      %p531 = por %p529, %p530
      %p532 = scmp.ne.s32.totalorder %s523, %s524
      %p533 = scmp.eq.s32.totalorder %s46, 0
      %p534 = por %p532, %p533
      %p535 = scmp.ne.s32.totalorder %s523, %s524
      %p536 = scmp.eq.s32.totalorder %s47, 1
      %p537 = por %p535, %p536
      %p539 = scmp.ne.s32.totalorder %s524, %s538
      %p540 = scmp.eq.s32.totalorder %s47, 0
      %p541 = por %p539, %p540
      %s543 = sadd.s32 %s542, 1
      %p546 = scmp.eq.s32.totalorder %s41, 1
      %p547 = scmp.ne.s32.totalorder %s542, %s544
      %p548 = scmp.eq.s32.totalorder %s41, 0
      %p549 = por %p547, %p548
      %p550 = scmp.ne.s32.totalorder %s542, %s544
      %p551 = scmp.eq.s32.totalorder %s46, 1
      %p552 = por %p550, %p551
      %p553 = scmp.ne.s32.totalorder %s544, %s545
      %p554 = scmp.eq.s32.totalorder %s46, 0
      %p555 = por %p553, %p554
      %p556 = scmp.ne.s32.totalorder %s544, %s545
      %p557 = scmp.eq.s32.totalorder %s47, 1
      %p558 = por %p556, %p557
      %p560 = scmp.ne.s32.totalorder %s545, %s559
      %p561 = scmp.eq.s32.totalorder %s47, 0
      %p562 = por %p560, %p561
      %s564 = sadd.s32 %s563, 1
      %p567 = scmp.eq.s32.totalorder %s41, 1
      %p568 = scmp.ne.s32.totalorder %s563, %s565
      %p569 = scmp.eq.s32.totalorder %s41, 0
      %p570 = por %p568, %p569
      %p571 = scmp.ne.s32.totalorder %s563, %s565
      %p572 = scmp.eq.s32.totalorder %s46, 1
      %p573 = por %p571, %p572
      %p574 = scmp.ne.s32.totalorder %s565, %s566
      %p575 = scmp.eq.s32.totalorder %s46, 0
      %p576 = por %p574, %p575
      %p577 = scmp.ne.s32.totalorder %s565, %s566
      %p578 = scmp.eq.s32.totalorder %s47, 1
      %p579 = por %p577, %p578
      %p581 = scmp.ne.s32.totalorder %s566, %s580
      %p582 = scmp.eq.s32.totalorder %s47, 0
      %p583 = por %p581, %p582
      %s584 = ssub.s32 %s41, %s48
      %p585 = scmp.eq.s32.totalorder %s584, 0
      %s587 = sadd.s32 %s586, 1
      %s588 = scalar_select %p585, %s586, %s587
      %p591 = pneg %p585
      %p592 = scmp.eq.s32.totalorder %s41, 1
      %p593 = por %p591, %p592
      %p594 = scmp.ne.s32.totalorder %s586, %s589
      %p595 = scmp.eq.s32.totalorder %s41, 0
      %p596 = por %p594, %p595
      %p597 = scmp.ne.s32.totalorder %s586, %s589
      %p598 = scmp.eq.s32.totalorder %s46, 1
      %p599 = por %p597, %p598
      %p600 = scmp.ne.s32.totalorder %s589, %s590
      %p601 = scmp.eq.s32.totalorder %s46, 0
      %p602 = por %p600, %p601
      %p603 = scmp.ne.s32.totalorder %s589, %s590
      %p604 = scmp.eq.s32.totalorder %s47, 1
      %p605 = por %p603, %p604
      %p607 = scmp.ne.s32.totalorder %s590, %s606
      %p608 = scmp.eq.s32.totalorder %s47, 0
      %p609 = por %p607, %p608
      %p610 = scmp.le.s32.totalorder 1, %s41
      %p611 = scmp.lt.s32.totalorder %s41, 3
      %p612 = pnand %p610, %p611
      %p613 = pneg %p612
      // Predicated region
      $region9: #{weighted_graph_model_forward.2} parent=5 // pred_check
        _
      $region10: #{weighted_graph_model_forward.2} parent=5 // pred_check_branch
        %615 = sbr.rel (%p612) target = $region12
      $region11: #{weighted_graph_model_forward.2} parent=5 // pred_region
        %s616 = ssub.s32 %s41, 1
        // Predicated region
        $region13: #{weighted_graph_model_forward.2} parent=11 // pred_check
          %p617 = pneg %p114
        $region14: #{weighted_graph_model_forward.2} parent=11 // pred_check_branch
          %619 = sbr.rel (%p617) target = $region16
        $region15: #{weighted_graph_model_forward.2} parent=11 // pred_region
          %s621 = ssub.s32 256, 256
          %622 = vsyncadd [#allocation6], %s621
          %s623 = sshll.u32 [#allocation7], 4
          %s624 = int_to_ptr.vmem [resolvable:$true] %s623
          %629 = dma.hbm_to_vmem [thread:$0]  %s2, 256, %s624, [#allocation6], 128, 128, 8
        $region16: #{weighted_graph_model_forward.2} parent=11 // pred_fallthru
          _
        // Predicated region
        $region17: #{weighted_graph_model_forward.2} parent=11 // pred_check
          %p630 = pneg %p135
        $region18: #{weighted_graph_model_forward.2} parent=11 // pred_check_branch
          %632 = sbr.rel (%p630) target = $region20
        $region19: #{weighted_graph_model_forward.2} parent=11 // pred_region
          _
        $region20: #{weighted_graph_model_forward.2} parent=11 // pred_fallthru
          _
        // Predicated region
        $region21: #{weighted_graph_model_forward.2} parent=11 // pred_check
          %p633 = pneg %p156
        $region22: #{weighted_graph_model_forward.2} parent=11 // pred_check_branch
          %635 = sbr.rel (%p633) target = $region24
        $region23: #{weighted_graph_model_forward.2} parent=11 // pred_region
          _
        $region24: #{weighted_graph_model_forward.2} parent=11 // pred_fallthru
          _
        // Predicated region
        $region25: #{weighted_graph_model_forward.2} parent=11 // pred_check
          %p636 = pneg %p177
        $region26: #{weighted_graph_model_forward.2} parent=11 // pred_check_branch
          %638 = sbr.rel (%p636) target = $region28
        $region27: #{weighted_graph_model_forward.2} parent=11 // pred_region
          %s640 = ssub.s32 512, 512
          %641 = vsyncadd [#allocation9], %s640
          %s642 = sshll.u32 [#allocation8], 4
          %s643 = int_to_ptr.vmem [resolvable:$true] %s642
          %648 = dma.hbm_to_vmem [thread:$0]  %s5, 512, %s643, [#allocation9], 128, 128, 8
        $region28: #{weighted_graph_model_forward.2} parent=11 // pred_fallthru
          _
        // Predicated region
        $region29: #{weighted_graph_model_forward.2} parent=11 // pred_check
          %p649 = pneg %p198
        $region30: #{weighted_graph_model_forward.2} parent=11 // pred_check_branch
          %651 = sbr.rel (%p649) target = $region32
        $region31: #{weighted_graph_model_forward.2} parent=11 // pred_region
          _
        $region32: #{weighted_graph_model_forward.2} parent=11 // pred_fallthru
          _
        // Predicated region
        $region33: #{weighted_graph_model_forward.2} parent=11 // pred_check
          %p652 = pneg %p219
        $region34: #{weighted_graph_model_forward.2} parent=11 // pred_check_branch
          %654 = sbr.rel (%p652) target = $region36
        $region35: #{weighted_graph_model_forward.2} parent=11 // pred_region
          %s656 = ssub.s32 512, 512
          %657 = vsyncadd [#allocation9], %s656
          %s658 = sshll.u32 [#allocation10], 4
          %s659 = int_to_ptr.vmem [resolvable:$true] %s658
          %664 = dma.hbm_to_vmem [thread:$0]  %s7, 512, %s659, [#allocation9], 128, 128, 8
        $region36: #{weighted_graph_model_forward.2} parent=11 // pred_fallthru
          _
        // Predicated region
        $region37: #{weighted_graph_model_forward.2} parent=11 // pred_check
          %p665 = pneg %p240
        $region38: #{weighted_graph_model_forward.2} parent=11 // pred_check_branch
          %667 = sbr.rel (%p665) target = $region40
        $region39: #{weighted_graph_model_forward.2} parent=11 // pred_region
          %s669 = ssub.s32 512, 512
          %670 = vsyncadd [#allocation12], %s669
          %s671 = sshll.u32 [#allocation11], 4
          %s672 = int_to_ptr.vmem [resolvable:$true] %s671
          %677 = dma.hbm_to_vmem [thread:$0]  %s8, 512, %s672, [#allocation12], 128, 128, 8
        $region40: #{weighted_graph_model_forward.2} parent=11 // pred_fallthru
          _
        // Predicated region
        $region41: #{weighted_graph_model_forward.2} parent=11 // pred_check
          %p678 = pneg %p261
        $region42: #{weighted_graph_model_forward.2} parent=11 // pred_check_branch
          %680 = sbr.rel (%p678) target = $region44
        $region43: #{weighted_graph_model_forward.2} parent=11 // pred_region
          _
        $region44: #{weighted_graph_model_forward.2} parent=11 // pred_fallthru
          _
        // Predicated region
        $region45: #{weighted_graph_model_forward.2} parent=11 // pred_check
          %p681 = pneg %p282
        $region46: #{weighted_graph_model_forward.2} parent=11 // pred_check_branch
          %683 = sbr.rel (%p681) target = $region48
        $region47: #{weighted_graph_model_forward.2} parent=11 // pred_region
          _
        $region48: #{weighted_graph_model_forward.2} parent=11 // pred_fallthru
          _
        // Predicated region
        $region49: #{weighted_graph_model_forward.2} parent=11 // pred_check
          %p684 = pneg %p303
        $region50: #{weighted_graph_model_forward.2} parent=11 // pred_check_branch
          %686 = sbr.rel (%p684) target = $region52
        $region51: #{weighted_graph_model_forward.2} parent=11 // pred_region
          %s688 = ssub.s32 512, 512
          %689 = vsyncadd [#allocation12], %s688
          %s690 = sshll.u32 [#allocation13], 4
          %s691 = int_to_ptr.vmem [resolvable:$true] %s690
          %696 = dma.hbm_to_vmem [thread:$0]  %s11, 512, %s691, [#allocation12], 128, 128, 8
        $region52: #{weighted_graph_model_forward.2} parent=11 // pred_fallthru
          _
        // Predicated region
        $region53: #{weighted_graph_model_forward.2} parent=11 // pred_check
          %p697 = pneg %p324
        $region54: #{weighted_graph_model_forward.2} parent=11 // pred_check_branch
          %699 = sbr.rel (%p697) target = $region56
        $region55: #{weighted_graph_model_forward.2} parent=11 // pred_region
          %s701 = ssub.s32 512, 512
          %702 = vsyncadd [#allocation15], %s701
          %s703 = sshll.u32 [#allocation14], 4
          %s704 = int_to_ptr.vmem [resolvable:$true] %s703
          %709 = dma.hbm_to_vmem [thread:$0]  %s12, 512, %s704, [#allocation15], 128, 128, 8
        $region56: #{weighted_graph_model_forward.2} parent=11 // pred_fallthru
          _
        // Predicated region
        $region57: #{weighted_graph_model_forward.2} parent=11 // pred_check
          %p710 = pneg %p345
        $region58: #{weighted_graph_model_forward.2} parent=11 // pred_check_branch
          %712 = sbr.rel (%p710) target = $region60
        $region59: #{weighted_graph_model_forward.2} parent=11 // pred_region
          _
        $region60: #{weighted_graph_model_forward.2} parent=11 // pred_fallthru
          _
        // Predicated region
        $region61: #{weighted_graph_model_forward.2} parent=11 // pred_check
          %p713 = pneg %p366
        $region62: #{weighted_graph_model_forward.2} parent=11 // pred_check_branch
          %715 = sbr.rel (%p713) target = $region64
        $region63: #{weighted_graph_model_forward.2} parent=11 // pred_region
          _
        $region64: #{weighted_graph_model_forward.2} parent=11 // pred_fallthru
          _
        // Predicated region
        $region65: #{weighted_graph_model_forward.2} parent=11 // pred_check
          %p716 = pneg %p387
        $region66: #{weighted_graph_model_forward.2} parent=11 // pred_check_branch
          %718 = sbr.rel (%p716) target = $region68
        $region67: #{weighted_graph_model_forward.2} parent=11 // pred_region
          %s720 = ssub.s32 2560, 2560
          %721 = vsyncadd [#allocation15], %s720
          %s722 = sshll.u32 [#allocation16], 4
          %s723 = int_to_ptr.vmem [resolvable:$true] %s722
          %728 = dma.hbm_to_vmem [thread:$0]  %s15, 2560, %s723, [#allocation15], 128, 128, 8
        $region68: #{weighted_graph_model_forward.2} parent=11 // pred_fallthru
          _
        // Predicated region
        $region69: #{weighted_graph_model_forward.2} parent=11 // pred_check
          %p729 = pneg %p408
        $region70: #{weighted_graph_model_forward.2} parent=11 // pred_check_branch
          %731 = sbr.rel (%p729) target = $region72
        $region71: #{weighted_graph_model_forward.2} parent=11 // pred_region
          _
        $region72: #{weighted_graph_model_forward.2} parent=11 // pred_fallthru
          _
        // Predicated region
        $region73: #{weighted_graph_model_forward.2} parent=11 // pred_check
          %p732 = pneg %p429
        $region74: #{weighted_graph_model_forward.2} parent=11 // pred_check_branch
          %734 = sbr.rel (%p732) target = $region76
        $region75: #{weighted_graph_model_forward.2} parent=11 // pred_region
          _
        $region76: #{weighted_graph_model_forward.2} parent=11 // pred_fallthru
          _
        // Predicated region
        $region77: #{weighted_graph_model_forward.2} parent=11 // pred_check
          %p735 = pneg %p450
        $region78: #{weighted_graph_model_forward.2} parent=11 // pred_check_branch
          %737 = sbr.rel (%p735) target = $region80
        $region79: #{weighted_graph_model_forward.2} parent=11 // pred_region
          _
        $region80: #{weighted_graph_model_forward.2} parent=11 // pred_fallthru
          _
        // Predicated region
        $region81: #{weighted_graph_model_forward.2} parent=11 // pred_check
          %p738 = pneg %p471
        $region82: #{weighted_graph_model_forward.2} parent=11 // pred_check_branch
          %740 = sbr.rel (%p738) target = $region84
        $region83: #{weighted_graph_model_forward.2} parent=11 // pred_region
          _
        $region84: #{weighted_graph_model_forward.2} parent=11 // pred_fallthru
          _
        // Predicated region
        $region85: #{weighted_graph_model_forward.2} parent=11 // pred_check
          %p741 = pneg %p492
        $region86: #{weighted_graph_model_forward.2} parent=11 // pred_check_branch
          %743 = sbr.rel (%p741) target = $region88
        $region87: #{weighted_graph_model_forward.2} parent=11 // pred_region
          _
        $region88: #{weighted_graph_model_forward.2} parent=11 // pred_fallthru
          _
        // Predicated region
        $region89: #{weighted_graph_model_forward.2} parent=11 // pred_check
          %p744 = pneg %p513
        $region90: #{weighted_graph_model_forward.2} parent=11 // pred_check_branch
          %746 = sbr.rel (%p744) target = $region92
        $region91: #{weighted_graph_model_forward.2} parent=11 // pred_region
          _
        $region92: #{weighted_graph_model_forward.2} parent=11 // pred_fallthru
          _
        // Predicated region
        $region93: #{weighted_graph_model_forward.2} parent=11 // pred_check
          %p747 = pneg %p534
        $region94: #{weighted_graph_model_forward.2} parent=11 // pred_check_branch
          %749 = sbr.rel (%p747) target = $region96
        $region95: #{weighted_graph_model_forward.2} parent=11 // pred_region
          _
        $region96: #{weighted_graph_model_forward.2} parent=11 // pred_fallthru
          _
        // Predicated region
        $region97: #{weighted_graph_model_forward.2} parent=11 // pred_check
          %p750 = pneg %p555
        $region98: #{weighted_graph_model_forward.2} parent=11 // pred_check_branch
          %752 = sbr.rel (%p750) target = $region100
        $region99: #{weighted_graph_model_forward.2} parent=11 // pred_region
          %s754 = ssub.s32 512, 512
          %755 = vsyncadd [#allocation18], %s754
          %s756 = sshll.u32 [#allocation17], 4
          %s757 = int_to_ptr.vmem [resolvable:$true] %s756
          %762 = dma.hbm_to_vmem [thread:$0]  %s23, 512, %s757, [#allocation18], 128, 128, 8
        $region100: #{weighted_graph_model_forward.2} parent=11 // pred_fallthru
          _
        // Predicated region
        $region101: #{weighted_graph_model_forward.2} parent=11 // pred_check
          %p763 = pneg %p576
        $region102: #{weighted_graph_model_forward.2} parent=11 // pred_check_branch
          %765 = sbr.rel (%p763) target = $region104
        $region103: #{weighted_graph_model_forward.2} parent=11 // pred_region
          _
        $region104: #{weighted_graph_model_forward.2} parent=11 // pred_fallthru
          _
      $region12: #{weighted_graph_model_forward.2} parent=5 // pred_fallthru
        _
      %p766 = scmp.lt.s32.totalorder %s41, 2
      // Predicated region
      $region105: #{weighted_graph_model_forward.2} parent=5 // pred_check
        %p767 = pneg %p766
      $region106: #{weighted_graph_model_forward.2} parent=5 // pred_check_branch
        %769 = sbr.rel (%p767) target = $region108
      $region107: #{weighted_graph_model_forward.2} parent=5 // pred_region
        // Predicated region
        $region109: #{weighted_graph_model_forward.2} parent=107 // pred_check
          %p770 = pneg %p61
        $region110: #{weighted_graph_model_forward.2} parent=107 // pred_check_branch
          %772 = sbr.rel (%p770) target = $region112
        $region111: #{weighted_graph_model_forward.2} parent=107 // pred_region
          %s773 = sand.u32 %s51, 1
          %s774 = scalar_lea.sflag [#allocation4], %s773
          %s775 = sand.u32 %s51, 1
          %s776 = smul.addr %s775, 64
          %s777 = scalar_lea.vmem [#allocation3], %s776
          %s779 = ssub.s32 1024, 1024
          %780 = vsyncadd %s774, %s779
          %s781 = smul.addr %s41, 8
          %s782 = smul.addr %s781, 128
          %s783 = scalar_lea.hbm %s0, %s782
          %s784 = sshll.u32 %s777, 4
          %s785 = int_to_ptr.vmem [resolvable:$true] %s784
          %790 = dma.hbm_to_vmem [thread:$0]  %s783, 1024, %s785, %s774, 128, 128, 8
        $region112: #{weighted_graph_model_forward.2} parent=107 // pred_fallthru
          _
        // Predicated region
        $region113: #{weighted_graph_model_forward.2} parent=107 // pred_check
          %p791 = pneg %p87
        $region114: #{weighted_graph_model_forward.2} parent=107 // pred_check_branch
          %793 = sbr.rel (%p791) target = $region116
        $region115: #{weighted_graph_model_forward.2} parent=107 // pred_region
          %s794 = sand.u32 %s41, 1
          %s795 = scalar_lea.sflag [#allocation6], %s794
          %s796 = sand.u32 %s77, 1
          %s797 = smul.addr %s796, 64
          %s798 = scalar_lea.vmem [#allocation5], %s797
          %s800 = ssub.s32 1024, 1024
          %801 = vsyncadd %s795, %s800
          %s802 = smul.addr %s41, 8
          %s803 = smul.addr %s802, 128
          %s804 = scalar_lea.hbm %s1, %s803
          %s805 = sshll.u32 %s798, 4
          %s806 = int_to_ptr.vmem [resolvable:$true] %s805
          %811 = dma.hbm_to_vmem [thread:$0]  %s804, 1024, %s806, %s795, 128, 128, 8
        $region116: #{weighted_graph_model_forward.2} parent=107 // pred_fallthru
          _
      $region108: #{weighted_graph_model_forward.2} parent=5 // pred_fallthru
        _
      %p812 = scmp.le.s32.totalorder 1, %s41
      %p813 = scmp.lt.s32.totalorder %s41, 3
      %p814 = pnand %p812, %p813
      %p815 = pneg %p814
      // Predicated region
      $region117: #{weighted_graph_model_forward.2} parent=5 // pred_check
        _
      $region118: #{weighted_graph_model_forward.2} parent=5 // pred_check_branch
        %817 = sbr.rel (%p814) target = $region120
      $region119: #{weighted_graph_model_forward.2} parent=5 // pred_region
        %s818 = ssub.s32 %s41, 1
        %s819 = sand.u32 %s54, 1
        %s820 = scalar_lea.sflag [#allocation4], %s819
        %s821 = sand.u32 %s54, 1
        %s822 = smul.addr %s821, 64
        %s823 = scalar_lea.vmem [#allocation3], %s822
        // Predicated region
        $region121: #{weighted_graph_model_forward.2} parent=119 // pred_check
          %p824 = pneg %p67
        $region122: #{weighted_graph_model_forward.2} parent=119 // pred_check_branch
          %826 = sbr.rel (%p824) target = $region124
        $region123: #{weighted_graph_model_forward.2} parent=119 // pred_region
          %827 = dma.done %s820, 1024
        $region124: #{weighted_graph_model_forward.2} parent=119 // pred_fallthru
          _
        %s828 = sand.u32 %s46, 1
        %s829 = scalar_lea.sflag [#allocation6], %s828
        %s830 = sand.u32 %s80, 1
        %s831 = smul.addr %s830, 64
        %s832 = scalar_lea.vmem [#allocation5], %s831
        // Predicated region
        $region125: #{weighted_graph_model_forward.2} parent=119 // pred_check
          %p833 = pneg %p93
        $region126: #{weighted_graph_model_forward.2} parent=119 // pred_check_branch
          %835 = sbr.rel (%p833) target = $region128
        $region127: #{weighted_graph_model_forward.2} parent=119 // pred_region
          %836 = dma.done %s829, 1024
        $region128: #{weighted_graph_model_forward.2} parent=119 // pred_fallthru
          _
        // Predicated region
        $region129: #{weighted_graph_model_forward.2} parent=119 // pred_check
          %p837 = pneg %p114
        $region130: #{weighted_graph_model_forward.2} parent=119 // pred_check_branch
          %839 = sbr.rel (%p837) target = $region132
        $region131: #{weighted_graph_model_forward.2} parent=119 // pred_region
          %840 = dma.done [#allocation6], 256
        $region132: #{weighted_graph_model_forward.2} parent=119 // pred_fallthru
          _
        // Predicated region
        $region133: #{weighted_graph_model_forward.2} parent=119 // pred_check
          %p841 = pneg %p177
        $region134: #{weighted_graph_model_forward.2} parent=119 // pred_check_branch
          %843 = sbr.rel (%p841) target = $region136
        $region135: #{weighted_graph_model_forward.2} parent=119 // pred_region
          %844 = dma.done [#allocation9], 512
        $region136: #{weighted_graph_model_forward.2} parent=119 // pred_fallthru
          _
        // Predicated region
        $region137: #{weighted_graph_model_forward.2} parent=119 // pred_check
          %p845 = pneg %p219
        $region138: #{weighted_graph_model_forward.2} parent=119 // pred_check_branch
          %847 = sbr.rel (%p845) target = $region140
        $region139: #{weighted_graph_model_forward.2} parent=119 // pred_region
          %848 = dma.done [#allocation9], 512
        $region140: #{weighted_graph_model_forward.2} parent=119 // pred_fallthru
          _
        // Predicated region
        $region141: #{weighted_graph_model_forward.2} parent=119 // pred_check
          %p849 = pneg %p240
        $region142: #{weighted_graph_model_forward.2} parent=119 // pred_check_branch
          %851 = sbr.rel (%p849) target = $region144
        $region143: #{weighted_graph_model_forward.2} parent=119 // pred_region
          %852 = dma.done [#allocation12], 512
        $region144: #{weighted_graph_model_forward.2} parent=119 // pred_fallthru
          _
        // Predicated region
        $region145: #{weighted_graph_model_forward.2} parent=119 // pred_check
          %p853 = pneg %p303
        $region146: #{weighted_graph_model_forward.2} parent=119 // pred_check_branch
          %855 = sbr.rel (%p853) target = $region148
        $region147: #{weighted_graph_model_forward.2} parent=119 // pred_region
          %856 = dma.done [#allocation12], 512
        $region148: #{weighted_graph_model_forward.2} parent=119 // pred_fallthru
          _
        // Predicated region
        $region149: #{weighted_graph_model_forward.2} parent=119 // pred_check
          %p857 = pneg %p324
        $region150: #{weighted_graph_model_forward.2} parent=119 // pred_check_branch
          %859 = sbr.rel (%p857) target = $region152
        $region151: #{weighted_graph_model_forward.2} parent=119 // pred_region
          %860 = dma.done [#allocation15], 512
        $region152: #{weighted_graph_model_forward.2} parent=119 // pred_fallthru
          _
        // Predicated region
        $region153: #{weighted_graph_model_forward.2} parent=119 // pred_check
          %p861 = pneg %p387
        $region154: #{weighted_graph_model_forward.2} parent=119 // pred_check_branch
          %863 = sbr.rel (%p861) target = $region156
        $region155: #{weighted_graph_model_forward.2} parent=119 // pred_region
          %864 = dma.done [#allocation15], 2560
        $region156: #{weighted_graph_model_forward.2} parent=119 // pred_fallthru
          _
        // Predicated region
        $region157: #{weighted_graph_model_forward.2} parent=119 // pred_check
          %p865 = pneg %p555
        $region158: #{weighted_graph_model_forward.2} parent=119 // pred_check_branch
          %867 = sbr.rel (%p865) target = $region160
        $region159: #{weighted_graph_model_forward.2} parent=119 // pred_region
          %868 = dma.done [#allocation18], 512
        $region160: #{weighted_graph_model_forward.2} parent=119 // pred_fallthru
          _
        %s869 = sand.u32 %s54, 1
        %s870 = scalar_lea.sflag [#allocation4], %s869
        %s871 = sand.u32 %s54, 1
        %s872 = smul.addr %s871, 64
        %s873 = scalar_lea.vmem [#allocation3], %s872
        %p874 = pneg %p67
        %p875 = pneg %p64
        %s876 = sand.u32 %s46, 1
        %s877 = scalar_lea.sflag [#allocation6], %s876
        %s878 = sand.u32 %s80, 1
        %s879 = smul.addr %s878, 64
        %s880 = scalar_lea.vmem [#allocation5], %s879
        %p881 = pneg %p93
        %p882 = pneg %p90
        %p883 = pneg %p114
        %p884 = pneg %p111
        %p885 = pneg %p135
        %p886 = pneg %p132
        %p887 = pneg %p156
        %p888 = pneg %p153
        %p889 = pneg %p177
        %p890 = pneg %p174
        %p891 = pneg %p198
        %p892 = pneg %p195
        %p893 = pneg %p219
        %p894 = pneg %p216
        %p895 = pneg %p240
        %p896 = pneg %p237
        %p897 = pneg %p261
        %p898 = pneg %p258
        %p899 = pneg %p282
        %p900 = pneg %p279
        %p901 = pneg %p303
        %p902 = pneg %p300
        %p903 = pneg %p324
        %p904 = pneg %p321
        %p905 = pneg %p345
        %p906 = pneg %p342
        %p907 = pneg %p366
        %p908 = pneg %p363
        %p909 = pneg %p387
        %p910 = pneg %p384
        %p911 = pneg %p408
        %p912 = pneg %p405
        %p913 = pneg %p429
        %p914 = pneg %p426
        %p915 = pneg %p450
        %p916 = pneg %p447
        %p917 = pneg %p471
        %p918 = pneg %p468
        %p919 = pneg %p492
        %p920 = pneg %p489
        %p921 = pneg %p513
        %p922 = pneg %p510
        %p923 = pneg %p534
        %p924 = pneg %p531
        %p925 = pneg %p555
        %p926 = pneg %p552
        %p927 = pneg %p576
        %p928 = pneg %p573
        %p929 = pneg %p602
        %p930 = pneg %p599
        %p931 = scmp.lt.s32.totalorder %s46, 1
        %s932 = scalar_select %p931, %s46, 1
        %s933 = smul.addr %s932, 4
        %s934 = smul.addr %s933, 8
        %s935 = scalar_lea.vmem %s25, %s934
        %p936 = scmp.lt.s32.totalorder %s46, 1
        %s937 = scalar_select %p936, %s46, 1
        %s938 = smul.addr %s937, 4
        %s939 = smul.addr %s938, 8
        %s940 = scalar_lea.vmem %s25, %s939
        %v942 = vld [vmem:[%s823] sm:$0xff]
        %v943 = vld [vmem:[%s823 + $0x8] sm:$0xff]
        %v944 = vld [vmem:[%s823 + $0x10] sm:$0xff]
        %v945 = vld [vmem:[%s823 + $0x18] sm:$0xff]
        %v946 = vld [vmem:[%s823 + $0x20] sm:$0xff]
        %v947 = vld [vmem:[%s823 + $0x28] sm:$0xff]
        %v948 = vld [vmem:[%s823 + $0x30] sm:$0xff]
        %v949 = vld [vmem:[%s823 + $0x38] sm:$0xff]
        %v950 = vpack.c.bf16 %v943, %v942
        %v951 = vpack.c.bf16 %v945, %v944
        %v952 = vpack.c.bf16 %v947, %v946
        %v953 = vpack.c.bf16 %v949, %v948
        %v954 = vld [vmem:[#allocation7] sm:$0xff]
        %v955 = vld [vmem:[#allocation7 + $0x8] sm:$0xff]
        %v956 = vpack.c.bf16 %v955, %v954
        %vm957 = vcmask 130048
        %v959 = vsel %vm957, %v950, 0
        %v962 = vsel %vm957, %v951, 0
        %v965 = vsel %vm957, %v952, 0
        %v968 = vsel %vm957, %v953, 0
        %970 = vmatprep.subr.bf16.mxu0 0
        %971 = vmatpush1.bf16.msra.mxu0 %v956
        %972 = vmatprep.subr.bf16.mxu0 0
        %973 = vmatpush1.bf16.msra.mxu0 0
        %974 = vmatprep.subr.bf16.mxu0 0
        %975 = vmatpush1.bf16.msra.mxu0 0
        %976 = vmatprep.subr.bf16.mxu0 0
        %977 = vmatpush1.bf16.msra.mxu0 0
        %978 = vmatprep.subr.bf16.mxu0 0
        %979 = vmatpush1.bf16.msra.mxu0 0
        %980 = vmatprep.subr.bf16.mxu0 0
        %981 = vmatpush1.bf16.msra.mxu0 0
        %982 = vmatprep.subr.bf16.mxu0 0
        %983 = vmatpush1.bf16.msra.mxu0 0
        %984 = vmatprep.subr.bf16.mxu0 0
        %985 = vmatpush1.bf16.msra.mxu0 0
        %986 = vmatprep.subr.bf16.mxu0 0
        %987 = vmatpush1.bf16.msra.mxu0 0
        %988 = vmatprep.subr.bf16.mxu0 0
        %989 = vmatpush1.bf16.msra.mxu0 0
        %990 = vmatprep.subr.bf16.mxu0 0
        %991 = vmatpush1.bf16.msra.mxu0 0
        %992 = vmatprep.subr.bf16.mxu0 0
        %993 = vmatpush1.bf16.msra.mxu0 0
        %994 = vmatprep.subr.bf16.mxu0 0
        %995 = vmatpush1.bf16.msra.mxu0 0
        %996 = vmatprep.subr.bf16.mxu0 0
        %997 = vmatpush1.bf16.msra.mxu0 0
        %998 = vmatprep.subr.bf16.mxu0 0
        %999 = vmatpush1.bf16.msra.mxu0 0
        %1000 = vmatprep.subr.bf16.mxu0 0
        %1001 = vmatpush1.bf16.msra.mxu0 0
        %1002 = vmatprep.mubr.bf16.mxu0 0
        %1003 = vmatmul.mubr.bf16.gmra.mrb[0].mxu0 %v959
        %v1004 = vpop.f32.mrb[0].mxu0
        %v1005 = vadd.f32 0.0, %v1004
        %v1006 = vpop.f32.mrb[0].mxu0
        %v1007 = vpop.f32.mrb[0].mxu0
        %v1008 = vadd.f32 0.0, %v1007
        %v1009 = vpop.f32.mrb[0].mxu0
        %1010 = vmatprep.mubr.bf16.mxu0 0
        %1011 = vmatmul.mubr.bf16.gmra.mrb[0].mxu0 %v962
        %v1012 = vpop.f32.mrb[0].mxu0
        %v1013 = vadd.f32 0.0, %v1012
        %v1014 = vpop.f32.mrb[0].mxu0
        %v1015 = vpop.f32.mrb[0].mxu0
        %v1016 = vadd.f32 0.0, %v1015
        %v1017 = vpop.f32.mrb[0].mxu0
        %1018 = vmatprep.mubr.bf16.mxu0 0
        %1019 = vmatmul.mubr.bf16.gmra.mrb[0].mxu0 %v965
        %v1020 = vpop.f32.mrb[0].mxu0
        %v1021 = vadd.f32 0.0, %v1020
        %v1022 = vpop.f32.mrb[0].mxu0
        %v1023 = vpop.f32.mrb[0].mxu0
        %v1024 = vadd.f32 0.0, %v1023
        %v1025 = vpop.f32.mrb[0].mxu0
        %1026 = vmatprep.mubr.bf16.mxu0 0
        %1027 = vmatmul.mubr.bf16.gmra.mrb[0].mxu0 %v968
        %v1028 = vpop.f32.mrb[0].mxu0
        %v1029 = vadd.f32 0.0, %v1028
        %v1030 = vpop.f32.mrb[0].mxu0
        %v1031 = vpop.f32.mrb[0].mxu0
        %v1032 = vadd.f32 0.0, %v1031
        %v1033 = vpop.f32.mrb[0].mxu0
        %1034 = vdwg.mxu0
        %v1035 = vmax.f32 %v1005, 0.0
        %v1036 = vmax.f32 %v1008, 0.0
        %v1037 = vmax.f32 %v1013, 0.0
        %v1038 = vmax.f32 %v1016, 0.0
        %v1039 = vmax.f32 %v1021, 0.0
        %v1040 = vmax.f32 %v1024, 0.0
        %v1041 = vmax.f32 %v1029, 0.0
        %v1042 = vmax.f32 %v1032, 0.0
        %v1043 = vld [vmem:[%s3] sm:$0x1]
        %v1045 = vlaneseq
        %v1046 = vshrl.u32 %v1045, 7
        %v1047 = vsub.s32 0, %v1046
        %v1048 = vrot.slane %v1043, %v1047
        %v1050 = vmul.f32 %v1035, %v1048
        %v1051 = vmul.f32 %v1036, %v1048
        %v1052 = vmul.f32 %v1037, %v1048
        %v1053 = vmul.f32 %v1038, %v1048
        %v1054 = vmul.f32 %v1039, %v1048
        %v1055 = vmul.f32 %v1040, %v1048
        %v1056 = vmul.f32 %v1041, %v1048
        %v1057 = vmul.f32 %v1042, %v1048
        %v1058 = vld [vmem:[%s4] sm:$0x1]
        %v1060 = vlaneseq
        %v1061 = vshrl.u32 %v1060, 7
        %v1062 = vsub.s32 0, %v1061
        %v1063 = vrot.slane %v1058, %v1062
        %v1065 = vadd.f32 %v1050, %v1063
        %v1066 = vadd.f32 %v1051, %v1063
        %v1067 = vadd.f32 %v1052, %v1063
        %v1068 = vadd.f32 %v1053, %v1063
        %v1069 = vadd.f32 %v1054, %v1063
        %v1070 = vadd.f32 %v1055, %v1063
        %v1071 = vadd.f32 %v1056, %v1063
        %v1072 = vadd.f32 %v1057, %v1063
        %v1073 = vpack.c.bf16 %v1066, %v1065
        %v1074 = vpack.c.bf16 %v1068, %v1067
        %v1075 = vpack.c.bf16 %v1070, %v1069
        %v1076 = vpack.c.bf16 %v1072, %v1071
        %v1077 = vld [vmem:[#allocation8] sm:$0xff]
        %v1078 = vld [vmem:[#allocation8 + $0x8] sm:$0xff]
        %v1079 = vld [vmem:[#allocation8 + $0x10] sm:$0xff]
        %v1080 = vld [vmem:[#allocation8 + $0x18] sm:$0xff]
        %v1081 = vpack.c.bf16 %v1078, %v1077
        %v1082 = vpack.c.bf16 %v1080, %v1079
        %v1083 = vld [vmem:[%s6] sm:$0x1]
        %v1085 = vlaneseq
        %v1086 = vshrl.u32 %v1085, 7
        %v1087 = vsub.s32 0, %v1086
        %v1088 = vrot.slane %v1083, %v1087
        %vm1090 = vcmask 261120
        %v1092 = vsel %vm1090, %v1073, 0
        %v1095 = vsel %vm1090, %v1074, 0
        %v1098 = vsel %vm1090, %v1075, 0
        %v1101 = vsel %vm1090, %v1076, 0
        %1103 = vmatprep.subr.bf16.mxu0 0
        %1104 = vmatpush1.bf16.msra.mxu0 %v1081
        %1105 = vmatprep.subr.bf16.mxu0 0
        %1106 = vmatpush1.bf16.msra.mxu0 %v1082
        %1107 = vmatprep.subr.bf16.mxu0 0
        %1108 = vmatpush1.bf16.msra.mxu0 0
        %1109 = vmatprep.subr.bf16.mxu0 0
        %1110 = vmatpush1.bf16.msra.mxu0 0
        %1111 = vmatprep.subr.bf16.mxu0 0
        %1112 = vmatpush1.bf16.msra.mxu0 0
        %1113 = vmatprep.subr.bf16.mxu0 0
        %1114 = vmatpush1.bf16.msra.mxu0 0
        %1115 = vmatprep.subr.bf16.mxu0 0
        %1116 = vmatpush1.bf16.msra.mxu0 0
        %1117 = vmatprep.subr.bf16.mxu0 0
        %1118 = vmatpush1.bf16.msra.mxu0 0
        %1119 = vmatprep.subr.bf16.mxu0 0
        %1120 = vmatpush1.bf16.msra.mxu0 0
        %1121 = vmatprep.subr.bf16.mxu0 0
        %1122 = vmatpush1.bf16.msra.mxu0 0
        %1123 = vmatprep.subr.bf16.mxu0 0
        %1124 = vmatpush1.bf16.msra.mxu0 0
        %1125 = vmatprep.subr.bf16.mxu0 0
        %1126 = vmatpush1.bf16.msra.mxu0 0
        %1127 = vmatprep.subr.bf16.mxu0 0
        %1128 = vmatpush1.bf16.msra.mxu0 0
        %1129 = vmatprep.subr.bf16.mxu0 0
        %1130 = vmatpush1.bf16.msra.mxu0 0
        %1131 = vmatprep.subr.bf16.mxu0 0
        %1132 = vmatpush1.bf16.msra.mxu0 0
        %1133 = vmatprep.subr.bf16.mxu0 0
        %1134 = vmatpush1.bf16.msra.mxu0 0
        %1135 = vmatprep.mubr.bf16.mxu0 0
        %1136 = vmatmul.mubr.bf16.gmra.mrb[0].mxu0 %v1092
        %v1137 = vpop.f32.mrb[0].mxu0
        %v1138 = vadd.f32 %v1088, %v1137
        %v1139 = vpop.f32.mrb[0].mxu0
        %v1140 = vpop.f32.mrb[0].mxu0
        %v1141 = vadd.f32 %v1088, %v1140
        %v1142 = vpop.f32.mrb[0].mxu0
        %1143 = vmatprep.mubr.bf16.mxu0 0
        %1144 = vmatmul.mubr.bf16.gmra.mrb[0].mxu0 %v1095
        %v1145 = vpop.f32.mrb[0].mxu0
        %v1146 = vadd.f32 %v1088, %v1145
        %v1147 = vpop.f32.mrb[0].mxu0
        %v1148 = vpop.f32.mrb[0].mxu0
        %v1149 = vadd.f32 %v1088, %v1148
        %v1150 = vpop.f32.mrb[0].mxu0
        %1151 = vmatprep.mubr.bf16.mxu0 0
        %1152 = vmatmul.mubr.bf16.gmra.mrb[0].mxu0 %v1098
        %v1153 = vpop.f32.mrb[0].mxu0
        %v1154 = vadd.f32 %v1088, %v1153
        %v1155 = vpop.f32.mrb[0].mxu0
        %v1156 = vpop.f32.mrb[0].mxu0
        %v1157 = vadd.f32 %v1088, %v1156
        %v1158 = vpop.f32.mrb[0].mxu0
        %1159 = vmatprep.mubr.bf16.mxu0 0
        %1160 = vmatmul.mubr.bf16.gmra.mrb[0].mxu0 %v1101
        %v1161 = vpop.f32.mrb[0].mxu0
        %v1162 = vadd.f32 %v1088, %v1161
        %v1163 = vpop.f32.mrb[0].mxu0
        %v1164 = vpop.f32.mrb[0].mxu0
        %v1165 = vadd.f32 %v1088, %v1164
        %v1166 = vpop.f32.mrb[0].mxu0
        %1167 = vdwg.mxu0
        %v1168 = vld [vmem:[%s832] sm:$0xff]
        %v1169 = vld [vmem:[%s832 + $0x8] sm:$0xff]
        %v1170 = vld [vmem:[%s832 + $0x10] sm:$0xff]
        %v1171 = vld [vmem:[%s832 + $0x18] sm:$0xff]
        %v1172 = vld [vmem:[%s832 + $0x20] sm:$0xff]
        %v1173 = vld [vmem:[%s832 + $0x28] sm:$0xff]
        %v1174 = vld [vmem:[%s832 + $0x30] sm:$0xff]
        %v1175 = vld [vmem:[%s832 + $0x38] sm:$0xff]
        %v1176 = vpack.c.bf16 %v1168, %v1168
        %v1177 = vpack.c.bf16 %v1169, %v1169
        %v1178 = vpack.c.bf16 %v1170, %v1170
        %v1179 = vpack.c.bf16 %v1171, %v1171
        %v1180 = vpack.c.bf16 %v1172, %v1172
        %v1181 = vpack.c.bf16 %v1173, %v1173
        %v1182 = vpack.c.bf16 %v1174, %v1174
        %v1183 = vpack.c.bf16 %v1175, %v1175
        %vm1184 = vcmask 64512
        %v1185 = vsel %vm1184, %v1168, 0.0
        %1186 = vadd.xlane.f32.xlu0 %v1185
        %v1187 = vpop.xlane.xlu0 %1186
        %v1188 = vsel %vm1184, %v1169, 0.0
        %1189 = vadd.xlane.f32.xlu0 %v1188
        %v1190 = vpop.xlane.xlu0 %1189
        %v1191 = vsel %vm1184, %v1170, 0.0
        %1192 = vadd.xlane.f32.xlu0 %v1191
        %v1193 = vpop.xlane.xlu0 %1192
        %v1194 = vsel %vm1184, %v1171, 0.0
        %1195 = vadd.xlane.f32.xlu0 %v1194
        %v1196 = vpop.xlane.xlu0 %1195
        %v1197 = vsel %vm1184, %v1172, 0.0
        %1198 = vadd.xlane.f32.xlu0 %v1197
        %v1199 = vpop.xlane.xlu0 %1198
        %v1200 = vsel %vm1184, %v1173, 0.0
        %1201 = vadd.xlane.f32.xlu0 %v1200
        %v1202 = vpop.xlane.xlu0 %1201
        %v1203 = vsel %vm1184, %v1174, 0.0
        %1204 = vadd.xlane.f32.xlu0 %v1203
        %v1205 = vpop.xlane.xlu0 %1204
        %v1206 = vsel %vm1184, %v1175, 0.0
        %1207 = vadd.xlane.f32.xlu0 %v1206
        %v1208 = vpop.xlane.xlu0 %1207
        %v1209 = vmax.f32 %v1187, 1.0
        %v1210 = vmax.f32 %v1190, 1.0
        %v1211 = vmax.f32 %v1193, 1.0
        %v1212 = vmax.f32 %v1196, 1.0
        %v1213 = vmax.f32 %v1199, 1.0
        %v1214 = vmax.f32 %v1202, 1.0
        %v1215 = vmax.f32 %v1205, 1.0
        %v1216 = vmax.f32 %v1208, 1.0
        %v1217 = vrcp.pop %v1209
        %v1218 = vmul.f32 1.0, %v1217
        %v1219 = vrcp.pop %v1210
        %v1220 = vmul.f32 1.0, %v1219
        %v1221 = vrcp.pop %v1211
        %v1222 = vmul.f32 1.0, %v1221
        %v1223 = vrcp.pop %v1212
        %v1224 = vmul.f32 1.0, %v1223
        %v1225 = vrcp.pop %v1213
        %v1226 = vmul.f32 1.0, %v1225
        %v1227 = vrcp.pop %v1214
        %v1228 = vmul.f32 1.0, %v1227
        %v1229 = vrcp.pop %v1215
        %v1230 = vmul.f32 1.0, %v1229
        %v1231 = vrcp.pop %v1216
        %v1232 = vmul.f32 1.0, %v1231
        %v1233 = vpack.c.bf16 %v1138, %v1138
        %v1234 = vpack.c.bf16 %v1141, %v1141
        %v1235 = vpack.c.bf16 %v1146, %v1146
        %v1236 = vpack.c.bf16 %v1149, %v1149
        %v1237 = vpack.c.bf16 %v1154, %v1154
        %v1238 = vpack.c.bf16 %v1157, %v1157
        %v1239 = vpack.c.bf16 %v1162, %v1162
        %v1240 = vpack.c.bf16 %v1165, %v1165
        %v1242 = vsel %vm1184, %v1176, 0
        %vm1244 = vcmask 1043456
        %v1246 = vsel %vm1244, %v1233, 0
        %1248 = vmatprep.subr.bf16.mxu0 0
        %1249 = vmatpush1.bf16.msra.mxu0 %v1246
        %1250 = vmatprep.subr.bf16.mxu0 0
        %1251 = vmatpush1.bf16.msra.mxu0 0
        %1252 = vmatprep.subr.bf16.mxu0 0
        %1253 = vmatpush1.bf16.msra.mxu0 0
        %1254 = vmatprep.subr.bf16.mxu0 0
        %1255 = vmatpush1.bf16.msra.mxu0 0
        %1256 = vmatprep.subr.bf16.mxu0 0
        %1257 = vmatpush1.bf16.msra.mxu0 0
        %1258 = vmatprep.subr.bf16.mxu0 0
        %1259 = vmatpush1.bf16.msra.mxu0 0
        %1260 = vmatprep.subr.bf16.mxu0 0
        %1261 = vmatpush1.bf16.msra.mxu0 0
        %1262 = vmatprep.subr.bf16.mxu0 0
        %1263 = vmatpush1.bf16.msra.mxu0 0
        %1264 = vmatprep.subr.bf16.mxu0 0
        %1265 = vmatpush1.bf16.msra.mxu0 0
        %1266 = vmatprep.subr.bf16.mxu0 0
        %1267 = vmatpush1.bf16.msra.mxu0 0
        %1268 = vmatprep.subr.bf16.mxu0 0
        %1269 = vmatpush1.bf16.msra.mxu0 0
        %1270 = vmatprep.subr.bf16.mxu0 0
        %1271 = vmatpush1.bf16.msra.mxu0 0
        %1272 = vmatprep.subr.bf16.mxu0 0
        %1273 = vmatpush1.bf16.msra.mxu0 0
        %1274 = vmatprep.subr.bf16.mxu0 0
        %1275 = vmatpush1.bf16.msra.mxu0 0
        %1276 = vmatprep.subr.bf16.mxu0 0
        %1277 = vmatpush1.bf16.msra.mxu0 0
        %1278 = vmatprep.subr.bf16.mxu0 0
        %1279 = vmatpush1.bf16.msra.mxu0 0
        %1280 = vmatprep.mubr.bf16.mxu0 0
        %1281 = vmatmul.mubr.bf16.gmra.mrb[0].mxu0 %v1242
        %v1282 = vpop.f32.mrb[0].mxu0
        %v1283 = vadd.f32 0.0, %v1282
        %v1284 = vpop.f32.mrb[0].mxu0
        %v1285 = vpop.f32.mrb[0].mxu0
        %v1286 = vpop.f32.mrb[0].mxu0
        %1287 = vdwg.mxu0
        %v1289 = vsel %vm1184, %v1177, 0
        %v1292 = vsel %vm1244, %v1234, 0
        %1294 = vmatprep.subr.bf16.mxu0 0
        %1295 = vmatpush1.bf16.msra.mxu0 %v1292
        %1296 = vmatprep.subr.bf16.mxu0 0
        %1297 = vmatpush1.bf16.msra.mxu0 0
        %1298 = vmatprep.subr.bf16.mxu0 0
        %1299 = vmatpush1.bf16.msra.mxu0 0
        %1300 = vmatprep.subr.bf16.mxu0 0
        %1301 = vmatpush1.bf16.msra.mxu0 0
        %1302 = vmatprep.subr.bf16.mxu0 0
        %1303 = vmatpush1.bf16.msra.mxu0 0
        %1304 = vmatprep.subr.bf16.mxu0 0
        %1305 = vmatpush1.bf16.msra.mxu0 0
        %1306 = vmatprep.subr.bf16.mxu0 0
        %1307 = vmatpush1.bf16.msra.mxu0 0
        %1308 = vmatprep.subr.bf16.mxu0 0
        %1309 = vmatpush1.bf16.msra.mxu0 0
        %1310 = vmatprep.subr.bf16.mxu0 0
        %1311 = vmatpush1.bf16.msra.mxu0 0
        %1312 = vmatprep.subr.bf16.mxu0 0
        %1313 = vmatpush1.bf16.msra.mxu0 0
        %1314 = vmatprep.subr.bf16.mxu0 0
        %1315 = vmatpush1.bf16.msra.mxu0 0
        %1316 = vmatprep.subr.bf16.mxu0 0
        %1317 = vmatpush1.bf16.msra.mxu0 0
        %1318 = vmatprep.subr.bf16.mxu0 0
        %1319 = vmatpush1.bf16.msra.mxu0 0
        %1320 = vmatprep.subr.bf16.mxu0 0
        %1321 = vmatpush1.bf16.msra.mxu0 0
        %1322 = vmatprep.subr.bf16.mxu0 0
        %1323 = vmatpush1.bf16.msra.mxu0 0
        %1324 = vmatprep.subr.bf16.mxu0 0
        %1325 = vmatpush1.bf16.msra.mxu0 0
        %1326 = vmatprep.mubr.bf16.mxu0 0
        %1327 = vmatmul.mubr.bf16.gmra.mrb[0].mxu0 %v1289
        %v1328 = vpop.f32.mrb[0].mxu0
        %v1329 = vadd.f32 0.0, %v1328
        %v1330 = vpop.f32.mrb[0].mxu0
        %v1331 = vpop.f32.mrb[0].mxu0
        %v1332 = vpop.f32.mrb[0].mxu0
        %1333 = vdwg.mxu0
        %v1335 = vsel %vm1184, %v1178, 0
        %v1338 = vsel %vm1244, %v1235, 0
        %1340 = vmatprep.subr.bf16.mxu0 0
        %1341 = vmatpush1.bf16.msra.mxu0 %v1338
        %1342 = vmatprep.subr.bf16.mxu0 0
        %1343 = vmatpush1.bf16.msra.mxu0 0
        %1344 = vmatprep.subr.bf16.mxu0 0
        %1345 = vmatpush1.bf16.msra.mxu0 0
        %1346 = vmatprep.subr.bf16.mxu0 0
        %1347 = vmatpush1.bf16.msra.mxu0 0
        %1348 = vmatprep.subr.bf16.mxu0 0
        %1349 = vmatpush1.bf16.msra.mxu0 0
        %1350 = vmatprep.subr.bf16.mxu0 0
        %1351 = vmatpush1.bf16.msra.mxu0 0
        %1352 = vmatprep.subr.bf16.mxu0 0
        %1353 = vmatpush1.bf16.msra.mxu0 0
        %1354 = vmatprep.subr.bf16.mxu0 0
        %1355 = vmatpush1.bf16.msra.mxu0 0
        %1356 = vmatprep.subr.bf16.mxu0 0
        %1357 = vmatpush1.bf16.msra.mxu0 0
        %1358 = vmatprep.subr.bf16.mxu0 0
        %1359 = vmatpush1.bf16.msra.mxu0 0
        %1360 = vmatprep.subr.bf16.mxu0 0
        %1361 = vmatpush1.bf16.msra.mxu0 0
        %1362 = vmatprep.subr.bf16.mxu0 0
        %1363 = vmatpush1.bf16.msra.mxu0 0
        %1364 = vmatprep.subr.bf16.mxu0 0
        %1365 = vmatpush1.bf16.msra.mxu0 0
        %1366 = vmatprep.subr.bf16.mxu0 0
        %1367 = vmatpush1.bf16.msra.mxu0 0
        %1368 = vmatprep.subr.bf16.mxu0 0
        %1369 = vmatpush1.bf16.msra.mxu0 0
        %1370 = vmatprep.subr.bf16.mxu0 0
        %1371 = vmatpush1.bf16.msra.mxu0 0
        %1372 = vmatprep.mubr.bf16.mxu0 0
        %1373 = vmatmul.mubr.bf16.gmra.mrb[0].mxu0 %v1335
        %v1374 = vpop.f32.mrb[0].mxu0
        %v1375 = vadd.f32 0.0, %v1374
        %v1376 = vpop.f32.mrb[0].mxu0
        %v1377 = vpop.f32.mrb[0].mxu0
        %v1378 = vpop.f32.mrb[0].mxu0
        %1379 = vdwg.mxu0
        %v1381 = vsel %vm1184, %v1179, 0
        %v1384 = vsel %vm1244, %v1236, 0
        %1386 = vmatprep.subr.bf16.mxu0 0
        %1387 = vmatpush1.bf16.msra.mxu0 %v1384
        %1388 = vmatprep.subr.bf16.mxu0 0
        %1389 = vmatpush1.bf16.msra.mxu0 0
        %1390 = vmatprep.subr.bf16.mxu0 0
        %1391 = vmatpush1.bf16.msra.mxu0 0
        %1392 = vmatprep.subr.bf16.mxu0 0
        %1393 = vmatpush1.bf16.msra.mxu0 0
        %1394 = vmatprep.subr.bf16.mxu0 0
        %1395 = vmatpush1.bf16.msra.mxu0 0
        %1396 = vmatprep.subr.bf16.mxu0 0
        %1397 = vmatpush1.bf16.msra.mxu0 0
        %1398 = vmatprep.subr.bf16.mxu0 0
        %1399 = vmatpush1.bf16.msra.mxu0 0
        %1400 = vmatprep.subr.bf16.mxu0 0
        %1401 = vmatpush1.bf16.msra.mxu0 0
        %1402 = vmatprep.subr.bf16.mxu0 0
        %1403 = vmatpush1.bf16.msra.mxu0 0
        %1404 = vmatprep.subr.bf16.mxu0 0
        %1405 = vmatpush1.bf16.msra.mxu0 0
        %1406 = vmatprep.subr.bf16.mxu0 0
        %1407 = vmatpush1.bf16.msra.mxu0 0
        %1408 = vmatprep.subr.bf16.mxu0 0
        %1409 = vmatpush1.bf16.msra.mxu0 0
        %1410 = vmatprep.subr.bf16.mxu0 0
        %1411 = vmatpush1.bf16.msra.mxu0 0
        %1412 = vmatprep.subr.bf16.mxu0 0
        %1413 = vmatpush1.bf16.msra.mxu0 0
        %1414 = vmatprep.subr.bf16.mxu0 0
        %1415 = vmatpush1.bf16.msra.mxu0 0
        %1416 = vmatprep.subr.bf16.mxu0 0
        %1417 = vmatpush1.bf16.msra.mxu0 0
        %1418 = vmatprep.mubr.bf16.mxu0 0
        %1419 = vmatmul.mubr.bf16.gmra.mrb[0].mxu0 %v1381
        %v1420 = vpop.f32.mrb[0].mxu0
        %v1421 = vadd.f32 0.0, %v1420
        %v1422 = vpop.f32.mrb[0].mxu0
        %v1423 = vpop.f32.mrb[0].mxu0
        %v1424 = vpop.f32.mrb[0].mxu0
        %1425 = vdwg.mxu0
        %v1427 = vsel %vm1184, %v1180, 0
        %v1430 = vsel %vm1244, %v1237, 0
        %1432 = vmatprep.subr.bf16.mxu0 0
        %1433 = vmatpush1.bf16.msra.mxu0 %v1430
        %1434 = vmatprep.subr.bf16.mxu0 0
        %1435 = vmatpush1.bf16.msra.mxu0 0
        %1436 = vmatprep.subr.bf16.mxu0 0
        %1437 = vmatpush1.bf16.msra.mxu0 0
        %1438 = vmatprep.subr.bf16.mxu0 0
        %1439 = vmatpush1.bf16.msra.mxu0 0
        %1440 = vmatprep.subr.bf16.mxu0 0
        %1441 = vmatpush1.bf16.msra.mxu0 0
        %1442 = vmatprep.subr.bf16.mxu0 0
        %1443 = vmatpush1.bf16.msra.mxu0 0
        %1444 = vmatprep.subr.bf16.mxu0 0
        %1445 = vmatpush1.bf16.msra.mxu0 0
        %1446 = vmatprep.subr.bf16.mxu0 0
        %1447 = vmatpush1.bf16.msra.mxu0 0
        %1448 = vmatprep.subr.bf16.mxu0 0
        %1449 = vmatpush1.bf16.msra.mxu0 0
        %1450 = vmatprep.subr.bf16.mxu0 0
        %1451 = vmatpush1.bf16.msra.mxu0 0
        %1452 = vmatprep.subr.bf16.mxu0 0
        %1453 = vmatpush1.bf16.msra.mxu0 0
        %1454 = vmatprep.subr.bf16.mxu0 0
        %1455 = vmatpush1.bf16.msra.mxu0 0
        %1456 = vmatprep.subr.bf16.mxu0 0
        %1457 = vmatpush1.bf16.msra.mxu0 0
        %1458 = vmatprep.subr.bf16.mxu0 0
        %1459 = vmatpush1.bf16.msra.mxu0 0
        %1460 = vmatprep.subr.bf16.mxu0 0
        %1461 = vmatpush1.bf16.msra.mxu0 0
        %1462 = vmatprep.subr.bf16.mxu0 0
        %1463 = vmatpush1.bf16.msra.mxu0 0
        %1464 = vmatprep.mubr.bf16.mxu0 0
        %1465 = vmatmul.mubr.bf16.gmra.mrb[0].mxu0 %v1427
        %v1466 = vpop.f32.mrb[0].mxu0
        %v1467 = vadd.f32 0.0, %v1466
        %v1468 = vpop.f32.mrb[0].mxu0
        %v1469 = vpop.f32.mrb[0].mxu0
        %v1470 = vpop.f32.mrb[0].mxu0
        %1471 = vdwg.mxu0
        %v1473 = vsel %vm1184, %v1181, 0
        %v1476 = vsel %vm1244, %v1238, 0
        %1478 = vmatprep.subr.bf16.mxu0 0
        %1479 = vmatpush1.bf16.msra.mxu0 %v1476
        %1480 = vmatprep.subr.bf16.mxu0 0
        %1481 = vmatpush1.bf16.msra.mxu0 0
        %1482 = vmatprep.subr.bf16.mxu0 0
        %1483 = vmatpush1.bf16.msra.mxu0 0
        %1484 = vmatprep.subr.bf16.mxu0 0
        %1485 = vmatpush1.bf16.msra.mxu0 0
        %1486 = vmatprep.subr.bf16.mxu0 0
        %1487 = vmatpush1.bf16.msra.mxu0 0
        %1488 = vmatprep.subr.bf16.mxu0 0
        %1489 = vmatpush1.bf16.msra.mxu0 0
        %1490 = vmatprep.subr.bf16.mxu0 0
        %1491 = vmatpush1.bf16.msra.mxu0 0
        %1492 = vmatprep.subr.bf16.mxu0 0
        %1493 = vmatpush1.bf16.msra.mxu0 0
        %1494 = vmatprep.subr.bf16.mxu0 0
        %1495 = vmatpush1.bf16.msra.mxu0 0
        %1496 = vmatprep.subr.bf16.mxu0 0
        %1497 = vmatpush1.bf16.msra.mxu0 0
        %1498 = vmatprep.subr.bf16.mxu0 0
        %1499 = vmatpush1.bf16.msra.mxu0 0
        %1500 = vmatprep.subr.bf16.mxu0 0
        %1501 = vmatpush1.bf16.msra.mxu0 0
        %1502 = vmatprep.subr.bf16.mxu0 0
        %1503 = vmatpush1.bf16.msra.mxu0 0
        %1504 = vmatprep.subr.bf16.mxu0 0
        %1505 = vmatpush1.bf16.msra.mxu0 0
        %1506 = vmatprep.subr.bf16.mxu0 0
        %1507 = vmatpush1.bf16.msra.mxu0 0
        %1508 = vmatprep.subr.bf16.mxu0 0
        %1509 = vmatpush1.bf16.msra.mxu0 0
        %1510 = vmatprep.mubr.bf16.mxu0 0
        %1511 = vmatmul.mubr.bf16.gmra.mrb[0].mxu0 %v1473
        %v1512 = vpop.f32.mrb[0].mxu0
        %v1513 = vadd.f32 0.0, %v1512
        %v1514 = vpop.f32.mrb[0].mxu0
        %v1515 = vpop.f32.mrb[0].mxu0
        %v1516 = vpop.f32.mrb[0].mxu0
        %1517 = vdwg.mxu0
        %v1519 = vsel %vm1184, %v1182, 0
        %v1522 = vsel %vm1244, %v1239, 0
        %1524 = vmatprep.subr.bf16.mxu0 0
        %1525 = vmatpush1.bf16.msra.mxu0 %v1522
        %1526 = vmatprep.subr.bf16.mxu0 0
        %1527 = vmatpush1.bf16.msra.mxu0 0
        %1528 = vmatprep.subr.bf16.mxu0 0
        %1529 = vmatpush1.bf16.msra.mxu0 0
        %1530 = vmatprep.subr.bf16.mxu0 0
        %1531 = vmatpush1.bf16.msra.mxu0 0
        %1532 = vmatprep.subr.bf16.mxu0 0
        %1533 = vmatpush1.bf16.msra.mxu0 0
        %1534 = vmatprep.subr.bf16.mxu0 0
        %1535 = vmatpush1.bf16.msra.mxu0 0
        %1536 = vmatprep.subr.bf16.mxu0 0
        %1537 = vmatpush1.bf16.msra.mxu0 0
        %1538 = vmatprep.subr.bf16.mxu0 0
        %1539 = vmatpush1.bf16.msra.mxu0 0
        %1540 = vmatprep.subr.bf16.mxu0 0
        %1541 = vmatpush1.bf16.msra.mxu0 0
        %1542 = vmatprep.subr.bf16.mxu0 0
        %1543 = vmatpush1.bf16.msra.mxu0 0
        %1544 = vmatprep.subr.bf16.mxu0 0
        %1545 = vmatpush1.bf16.msra.mxu0 0
        %1546 = vmatprep.subr.bf16.mxu0 0
        %1547 = vmatpush1.bf16.msra.mxu0 0
        %1548 = vmatprep.subr.bf16.mxu0 0
        %1549 = vmatpush1.bf16.msra.mxu0 0
        %1550 = vmatprep.subr.bf16.mxu0 0
        %1551 = vmatpush1.bf16.msra.mxu0 0
        %1552 = vmatprep.subr.bf16.mxu0 0
        %1553 = vmatpush1.bf16.msra.mxu0 0
        %1554 = vmatprep.subr.bf16.mxu0 0
        %1555 = vmatpush1.bf16.msra.mxu0 0
        %1556 = vmatprep.mubr.bf16.mxu0 0
        %1557 = vmatmul.mubr.bf16.gmra.mrb[0].mxu0 %v1519
        %v1558 = vpop.f32.mrb[0].mxu0
        %v1559 = vadd.f32 0.0, %v1558
        %v1560 = vpop.f32.mrb[0].mxu0
        %v1561 = vpop.f32.mrb[0].mxu0
        %v1562 = vpop.f32.mrb[0].mxu0
        %1563 = vdwg.mxu0
        %v1565 = vsel %vm1184, %v1183, 0
        %v1568 = vsel %vm1244, %v1240, 0
        %1570 = vmatprep.subr.bf16.mxu0 0
        %1571 = vmatpush1.bf16.msra.mxu0 %v1568
        %1572 = vmatprep.subr.bf16.mxu0 0
        %1573 = vmatpush1.bf16.msra.mxu0 0
        %1574 = vmatprep.subr.bf16.mxu0 0
        %1575 = vmatpush1.bf16.msra.mxu0 0
        %1576 = vmatprep.subr.bf16.mxu0 0
        %1577 = vmatpush1.bf16.msra.mxu0 0
        %1578 = vmatprep.subr.bf16.mxu0 0
        %1579 = vmatpush1.bf16.msra.mxu0 0
        %1580 = vmatprep.subr.bf16.mxu0 0
        %1581 = vmatpush1.bf16.msra.mxu0 0
        %1582 = vmatprep.subr.bf16.mxu0 0
        %1583 = vmatpush1.bf16.msra.mxu0 0
        %1584 = vmatprep.subr.bf16.mxu0 0
        %1585 = vmatpush1.bf16.msra.mxu0 0
        %1586 = vmatprep.subr.bf16.mxu0 0
        %1587 = vmatpush1.bf16.msra.mxu0 0
        %1588 = vmatprep.subr.bf16.mxu0 0
        %1589 = vmatpush1.bf16.msra.mxu0 0
        %1590 = vmatprep.subr.bf16.mxu0 0
        %1591 = vmatpush1.bf16.msra.mxu0 0
        %1592 = vmatprep.subr.bf16.mxu0 0
        %1593 = vmatpush1.bf16.msra.mxu0 0
        %1594 = vmatprep.subr.bf16.mxu0 0
        %1595 = vmatpush1.bf16.msra.mxu0 0
        %1596 = vmatprep.subr.bf16.mxu0 0
        %1597 = vmatpush1.bf16.msra.mxu0 0
        %1598 = vmatprep.subr.bf16.mxu0 0
        %1599 = vmatpush1.bf16.msra.mxu0 0
        %1600 = vmatprep.subr.bf16.mxu0 0
        %1601 = vmatpush1.bf16.msra.mxu0 0
        %1602 = vmatprep.mubr.bf16.mxu0 0
        %1603 = vmatmul.mubr.bf16.gmra.mrb[0].mxu0 %v1565
        %v1604 = vpop.f32.mrb[0].mxu0
        %v1605 = vadd.f32 0.0, %v1604
        %v1606 = vpop.f32.mrb[0].mxu0
        %v1607 = vpop.f32.mrb[0].mxu0
        %v1608 = vpop.f32.mrb[0].mxu0
        %1609 = vdwg.mxu0
        %v1610 = vmul.f32 %v1283, %v1218
        %v1611 = vmul.f32 %v1329, %v1220
        %v1612 = vmul.f32 %v1375, %v1222
        %v1613 = vmul.f32 %v1421, %v1224
        %v1614 = vmul.f32 %v1467, %v1226
        %v1615 = vmul.f32 %v1513, %v1228
        %v1616 = vmul.f32 %v1559, %v1230
        %v1617 = vmul.f32 %v1605, %v1232
        %v1618 = vpack.c.bf16 %v1611, %v1610
        %v1619 = vpack.c.bf16 %v1613, %v1612
        %v1620 = vpack.c.bf16 %v1615, %v1614
        %v1621 = vpack.c.bf16 %v1617, %v1616
        %v1622 = vld [vmem:[#allocation10] sm:$0xff]
        %v1623 = vld [vmem:[#allocation10 + $0x8] sm:$0xff]
        %v1624 = vld [vmem:[#allocation10 + $0x10] sm:$0xff]
        %v1625 = vld [vmem:[#allocation10 + $0x18] sm:$0xff]
        %v1626 = vpack.c.bf16 %v1623, %v1622
        %v1627 = vpack.c.bf16 %v1625, %v1624
        %v1628 = vpack.c.bf16 %v1141, %v1138
        %v1629 = vpack.c.bf16 %v1149, %v1146
        %v1630 = vpack.c.bf16 %v1157, %v1154
        %v1631 = vpack.c.bf16 %v1165, %v1162
        %v1632 = vld [vmem:[#allocation11] sm:$0xff]
        %v1633 = vld [vmem:[#allocation11 + $0x8] sm:$0xff]
        %v1634 = vld [vmem:[#allocation11 + $0x10] sm:$0xff]
        %v1635 = vld [vmem:[#allocation11 + $0x18] sm:$0xff]
        %v1636 = vpack.c.bf16 %v1633, %v1632
        %v1637 = vpack.c.bf16 %v1635, %v1634
        %v1639 = vsel %vm1090, %v1628, 0
        %v1642 = vsel %vm1090, %v1629, 0
        %v1645 = vsel %vm1090, %v1630, 0
        %v1648 = vsel %vm1090, %v1631, 0
        %1650 = vmatprep.subr.bf16.mxu0 0
        %1651 = vmatpush1.bf16.msra.mxu0 %v1636
        %1652 = vmatprep.subr.bf16.mxu0 0
        %1653 = vmatpush1.bf16.msra.mxu0 %v1637
        %1654 = vmatprep.subr.bf16.mxu0 0
        %1655 = vmatpush1.bf16.msra.mxu0 0
        %1656 = vmatprep.subr.bf16.mxu0 0
        %1657 = vmatpush1.bf16.msra.mxu0 0
        %1658 = vmatprep.subr.bf16.mxu0 0
        %1659 = vmatpush1.bf16.msra.mxu0 0
        %1660 = vmatprep.subr.bf16.mxu0 0
        %1661 = vmatpush1.bf16.msra.mxu0 0
        %1662 = vmatprep.subr.bf16.mxu0 0
        %1663 = vmatpush1.bf16.msra.mxu0 0
        %1664 = vmatprep.subr.bf16.mxu0 0
        %1665 = vmatpush1.bf16.msra.mxu0 0
        %1666 = vmatprep.subr.bf16.mxu0 0
        %1667 = vmatpush1.bf16.msra.mxu0 0
        %1668 = vmatprep.subr.bf16.mxu0 0
        %1669 = vmatpush1.bf16.msra.mxu0 0
        %1670 = vmatprep.subr.bf16.mxu0 0
        %1671 = vmatpush1.bf16.msra.mxu0 0
        %1672 = vmatprep.subr.bf16.mxu0 0
        %1673 = vmatpush1.bf16.msra.mxu0 0
        %1674 = vmatprep.subr.bf16.mxu0 0
        %1675 = vmatpush1.bf16.msra.mxu0 0
        %1676 = vmatprep.subr.bf16.mxu0 0
        %1677 = vmatpush1.bf16.msra.mxu0 0
        %1678 = vmatprep.subr.bf16.mxu0 0
        %1679 = vmatpush1.bf16.msra.mxu0 0
        %1680 = vmatprep.subr.bf16.mxu0 0
        %1681 = vmatpush1.bf16.msra.mxu0 0
        %1682 = vmatprep.mubr.bf16.mxu0 0
        %1683 = vmatmul.mubr.bf16.gmra.mrb[0].mxu0 %v1639
        %v1684 = vpop.f32.mrb[0].mxu0
        %v1685 = vadd.f32 0.0, %v1684
        %v1686 = vpop.f32.mrb[0].mxu0
        %v1687 = vpop.f32.mrb[0].mxu0
        %v1688 = vadd.f32 0.0, %v1687
        %v1689 = vpop.f32.mrb[0].mxu0
        %1690 = vmatprep.mubr.bf16.mxu0 0
        %1691 = vmatmul.mubr.bf16.gmra.mrb[0].mxu0 %v1642
        %v1692 = vpop.f32.mrb[0].mxu0
        %v1693 = vadd.f32 0.0, %v1692
        %v1694 = vpop.f32.mrb[0].mxu0
        %v1695 = vpop.f32.mrb[0].mxu0
        %v1696 = vadd.f32 0.0, %v1695
        %v1697 = vpop.f32.mrb[0].mxu0
        %1698 = vmatprep.mubr.bf16.mxu0 0
        %1699 = vmatmul.mubr.bf16.gmra.mrb[0].mxu0 %v1645
        %v1700 = vpop.f32.mrb[0].mxu0
        %v1701 = vadd.f32 0.0, %v1700
        %v1702 = vpop.f32.mrb[0].mxu0
        %v1703 = vpop.f32.mrb[0].mxu0
        %v1704 = vadd.f32 0.0, %v1703
        %v1705 = vpop.f32.mrb[0].mxu0
        %1706 = vmatprep.mubr.bf16.mxu0 0
        %1707 = vmatmul.mubr.bf16.gmra.mrb[0].mxu0 %v1648
        %v1708 = vpop.f32.mrb[0].mxu0
        %v1709 = vadd.f32 0.0, %v1708
        %v1710 = vpop.f32.mrb[0].mxu0
        %v1711 = vpop.f32.mrb[0].mxu0
        %v1712 = vadd.f32 0.0, %v1711
        %v1713 = vpop.f32.mrb[0].mxu0
        %1714 = vdwg.mxu0
        %v1716 = vsel %vm1090, %v1618, 0
        %v1719 = vsel %vm1090, %v1619, 0
        %v1722 = vsel %vm1090, %v1620, 0
        %v1725 = vsel %vm1090, %v1621, 0
        %1727 = vmatprep.subr.bf16.mxu0 0
        %1728 = vmatpush1.bf16.msra.mxu0 %v1626
        %1729 = vmatprep.subr.bf16.mxu0 0
        %1730 = vmatpush1.bf16.msra.mxu0 %v1627
        %1731 = vmatprep.subr.bf16.mxu0 0
        %1732 = vmatpush1.bf16.msra.mxu0 0
        %1733 = vmatprep.subr.bf16.mxu0 0
        %1734 = vmatpush1.bf16.msra.mxu0 0
        %1735 = vmatprep.subr.bf16.mxu0 0
        %1736 = vmatpush1.bf16.msra.mxu0 0
        %1737 = vmatprep.subr.bf16.mxu0 0
        %1738 = vmatpush1.bf16.msra.mxu0 0
        %1739 = vmatprep.subr.bf16.mxu0 0
        %1740 = vmatpush1.bf16.msra.mxu0 0
        %1741 = vmatprep.subr.bf16.mxu0 0
        %1742 = vmatpush1.bf16.msra.mxu0 0
        %1743 = vmatprep.subr.bf16.mxu0 0
        %1744 = vmatpush1.bf16.msra.mxu0 0
        %1745 = vmatprep.subr.bf16.mxu0 0
        %1746 = vmatpush1.bf16.msra.mxu0 0
        %1747 = vmatprep.subr.bf16.mxu0 0
        %1748 = vmatpush1.bf16.msra.mxu0 0
        %1749 = vmatprep.subr.bf16.mxu0 0
        %1750 = vmatpush1.bf16.msra.mxu0 0
        %1751 = vmatprep.subr.bf16.mxu0 0
        %1752 = vmatpush1.bf16.msra.mxu0 0
        %1753 = vmatprep.subr.bf16.mxu0 0
        %1754 = vmatpush1.bf16.msra.mxu0 0
        %1755 = vmatprep.subr.bf16.mxu0 0
        %1756 = vmatpush1.bf16.msra.mxu0 0
        %1757 = vmatprep.subr.bf16.mxu0 0
        %1758 = vmatpush1.bf16.msra.mxu0 0
        %1759 = vmatprep.mubr.bf16.mxu0 0
        %1760 = vmatmul.mubr.bf16.gmra.mrb[0].mxu0 %v1716
        %v1761 = vpop.f32.mrb[0].mxu0
        %v1762 = vadd.f32 %v1685, %v1761
        %v1763 = vpop.f32.mrb[0].mxu0
        %v1764 = vpop.f32.mrb[0].mxu0
        %v1765 = vadd.f32 %v1688, %v1764
        %v1766 = vpop.f32.mrb[0].mxu0
        %1767 = vmatprep.mubr.bf16.mxu0 0
        %1768 = vmatmul.mubr.bf16.gmra.mrb[0].mxu0 %v1719
        %v1769 = vpop.f32.mrb[0].mxu0
        %v1770 = vadd.f32 %v1693, %v1769
        %v1771 = vpop.f32.mrb[0].mxu0
        %v1772 = vpop.f32.mrb[0].mxu0
        %v1773 = vadd.f32 %v1696, %v1772
        %v1774 = vpop.f32.mrb[0].mxu0
        %1775 = vmatprep.mubr.bf16.mxu0 0
        %1776 = vmatmul.mubr.bf16.gmra.mrb[0].mxu0 %v1722
        %v1777 = vpop.f32.mrb[0].mxu0
        %v1778 = vadd.f32 %v1701, %v1777
        %v1779 = vpop.f32.mrb[0].mxu0
        %v1780 = vpop.f32.mrb[0].mxu0
        %v1781 = vadd.f32 %v1704, %v1780
        %v1782 = vpop.f32.mrb[0].mxu0
        %1783 = vmatprep.mubr.bf16.mxu0 0
        %1784 = vmatmul.mubr.bf16.gmra.mrb[0].mxu0 %v1725
        %v1785 = vpop.f32.mrb[0].mxu0
        %v1786 = vadd.f32 %v1709, %v1785
        %v1787 = vpop.f32.mrb[0].mxu0
        %v1788 = vpop.f32.mrb[0].mxu0
        %v1789 = vadd.f32 %v1712, %v1788
        %v1790 = vpop.f32.mrb[0].mxu0
        %1791 = vdwg.mxu0
        %v1792 = vmax.f32 %v1762, 0.0
        %v1793 = vmax.f32 %v1765, 0.0
        %v1794 = vmax.f32 %v1770, 0.0
        %v1795 = vmax.f32 %v1773, 0.0
        %v1796 = vmax.f32 %v1778, 0.0
        %v1797 = vmax.f32 %v1781, 0.0
        %v1798 = vmax.f32 %v1786, 0.0
        %v1799 = vmax.f32 %v1789, 0.0
        %v1800 = vld [vmem:[%s9] sm:$0xff]
        %v1801 = vld [vmem:[%s9 + $0x8] sm:$0xff]
        %v1802 = vld [vmem:[%s9 + $0x10] sm:$0xff]
        %v1803 = vld [vmem:[%s9 + $0x18] sm:$0xff]
        %v1804 = vld [vmem:[%s9 + $0x20] sm:$0xff]
        %v1805 = vld [vmem:[%s9 + $0x28] sm:$0xff]
        %v1806 = vld [vmem:[%s9 + $0x30] sm:$0xff]
        %v1807 = vld [vmem:[%s9 + $0x38] sm:$0xff]
        %1809 = vset.pattern.permute.xlu0 0
        %1810 = vperm.xlu0 %1809, %v1800
        %v1811 = vpop.permute.xlu0 %1810
        %1814 = vset.pattern.permute.xlu0 0
        %1815 = vperm.xlu0 %1814, %v1801
        %v1816 = vpop.permute.xlu0 %1815
        %1819 = vset.pattern.permute.xlu0 0
        %1820 = vperm.xlu0 %1819, %v1802
        %v1821 = vpop.permute.xlu0 %1820
        %1824 = vset.pattern.permute.xlu0 0
        %1825 = vperm.xlu0 %1824, %v1803
        %v1826 = vpop.permute.xlu0 %1825
        %1829 = vset.pattern.permute.xlu0 0
        %1830 = vperm.xlu0 %1829, %v1804
        %v1831 = vpop.permute.xlu0 %1830
        %1834 = vset.pattern.permute.xlu0 0
        %1835 = vperm.xlu0 %1834, %v1805
        %v1836 = vpop.permute.xlu0 %1835
        %1839 = vset.pattern.permute.xlu0 0
        %1840 = vperm.xlu0 %1839, %v1806
        %v1841 = vpop.permute.xlu0 %1840
        %1844 = vset.pattern.permute.xlu0 0
        %1845 = vperm.xlu0 %1844, %v1807
        %v1846 = vpop.permute.xlu0 %1845
        %v1848 = vmul.f32 %v1792, %v1811
        %v1849 = vmul.f32 %v1793, %v1816
        %v1850 = vmul.f32 %v1794, %v1821
        %v1851 = vmul.f32 %v1795, %v1826
        %v1852 = vmul.f32 %v1796, %v1831
        %v1853 = vmul.f32 %v1797, %v1836
        %v1854 = vmul.f32 %v1798, %v1841
        %v1855 = vmul.f32 %v1799, %v1846
        %v1856 = vld [vmem:[%s10] sm:$0xff]
        %v1857 = vld [vmem:[%s10 + $0x8] sm:$0xff]
        %v1858 = vld [vmem:[%s10 + $0x10] sm:$0xff]
        %v1859 = vld [vmem:[%s10 + $0x18] sm:$0xff]
        %v1860 = vld [vmem:[%s10 + $0x20] sm:$0xff]
        %v1861 = vld [vmem:[%s10 + $0x28] sm:$0xff]
        %v1862 = vld [vmem:[%s10 + $0x30] sm:$0xff]
        %v1863 = vld [vmem:[%s10 + $0x38] sm:$0xff]
        %1865 = vset.pattern.permute.xlu0 0
        %1866 = vperm.xlu0 %1865, %v1856
        %v1867 = vpop.permute.xlu0 %1866
        %1870 = vset.pattern.permute.xlu0 0
        %1871 = vperm.xlu0 %1870, %v1857
        %v1872 = vpop.permute.xlu0 %1871
        %1875 = vset.pattern.permute.xlu0 0
        %1876 = vperm.xlu0 %1875, %v1858
        %v1877 = vpop.permute.xlu0 %1876
        %1880 = vset.pattern.permute.xlu0 0
        %1881 = vperm.xlu0 %1880, %v1859
        %v1882 = vpop.permute.xlu0 %1881
        %1885 = vset.pattern.permute.xlu0 0
        %1886 = vperm.xlu0 %1885, %v1860
        %v1887 = vpop.permute.xlu0 %1886
        %1890 = vset.pattern.permute.xlu0 0
        %1891 = vperm.xlu0 %1890, %v1861
        %v1892 = vpop.permute.xlu0 %1891
        %1895 = vset.pattern.permute.xlu0 0
        %1896 = vperm.xlu0 %1895, %v1862
        %v1897 = vpop.permute.xlu0 %1896
        %1900 = vset.pattern.permute.xlu0 0
        %1901 = vperm.xlu0 %1900, %v1863
        %v1902 = vpop.permute.xlu0 %1901
        %v1904 = vadd.f32 %v1848, %v1867
        %v1905 = vadd.f32 %v1849, %v1872
        %v1906 = vadd.f32 %v1850, %v1877
        %v1907 = vadd.f32 %v1851, %v1882
        %v1908 = vadd.f32 %v1852, %v1887
        %v1909 = vadd.f32 %v1853, %v1892
        %v1910 = vadd.f32 %v1854, %v1897
        %v1911 = vadd.f32 %v1855, %v1902
        %v1912 = vpack.c.bf16 %v1904, %v1904
        %v1913 = vpack.c.bf16 %v1905, %v1905
        %v1914 = vpack.c.bf16 %v1906, %v1906
        %v1915 = vpack.c.bf16 %v1907, %v1907
        %v1916 = vpack.c.bf16 %v1908, %v1908
        %v1917 = vpack.c.bf16 %v1909, %v1909
        %v1918 = vpack.c.bf16 %v1910, %v1910
        %v1919 = vpack.c.bf16 %v1911, %v1911
        %v1921 = vsel %vm1244, %v1912, 0
        %1923 = vmatprep.subr.bf16.mxu0 0
        %1924 = vmatpush1.bf16.msra.mxu0 %v1921
        %1925 = vmatprep.subr.bf16.mxu0 0
        %1926 = vmatpush1.bf16.msra.mxu0 0
        %1927 = vmatprep.subr.bf16.mxu0 0
        %1928 = vmatpush1.bf16.msra.mxu0 0
        %1929 = vmatprep.subr.bf16.mxu0 0
        %1930 = vmatpush1.bf16.msra.mxu0 0
        %1931 = vmatprep.subr.bf16.mxu0 0
        %1932 = vmatpush1.bf16.msra.mxu0 0
        %1933 = vmatprep.subr.bf16.mxu0 0
        %1934 = vmatpush1.bf16.msra.mxu0 0
        %1935 = vmatprep.subr.bf16.mxu0 0
        %1936 = vmatpush1.bf16.msra.mxu0 0
        %1937 = vmatprep.subr.bf16.mxu0 0
        %1938 = vmatpush1.bf16.msra.mxu0 0
        %1939 = vmatprep.subr.bf16.mxu0 0
        %1940 = vmatpush1.bf16.msra.mxu0 0
        %1941 = vmatprep.subr.bf16.mxu0 0
        %1942 = vmatpush1.bf16.msra.mxu0 0
        %1943 = vmatprep.subr.bf16.mxu0 0
        %1944 = vmatpush1.bf16.msra.mxu0 0
        %1945 = vmatprep.subr.bf16.mxu0 0
        %1946 = vmatpush1.bf16.msra.mxu0 0
        %1947 = vmatprep.subr.bf16.mxu0 0
        %1948 = vmatpush1.bf16.msra.mxu0 0
        %1949 = vmatprep.subr.bf16.mxu0 0
        %1950 = vmatpush1.bf16.msra.mxu0 0
        %1951 = vmatprep.subr.bf16.mxu0 0
        %1952 = vmatpush1.bf16.msra.mxu0 0
        %1953 = vmatprep.subr.bf16.mxu0 0
        %1954 = vmatpush1.bf16.msra.mxu0 0
        %1955 = vmatprep.mubr.bf16.mxu0 0
        %1956 = vmatmul.mubr.bf16.gmra.mrb[0].mxu0 %v1242
        %v1957 = vpop.f32.mrb[0].mxu0
        %v1958 = vadd.f32 0.0, %v1957
        %v1959 = vpop.f32.mrb[0].mxu0
        %v1960 = vpop.f32.mrb[0].mxu0
        %v1961 = vpop.f32.mrb[0].mxu0
        %1962 = vdwg.mxu0
        %v1964 = vsel %vm1244, %v1913, 0
        %1966 = vmatprep.subr.bf16.mxu0 0
        %1967 = vmatpush1.bf16.msra.mxu0 %v1964
        %1968 = vmatprep.subr.bf16.mxu0 0
        %1969 = vmatpush1.bf16.msra.mxu0 0
        %1970 = vmatprep.subr.bf16.mxu0 0
        %1971 = vmatpush1.bf16.msra.mxu0 0
        %1972 = vmatprep.subr.bf16.mxu0 0
        %1973 = vmatpush1.bf16.msra.mxu0 0
        %1974 = vmatprep.subr.bf16.mxu0 0
        %1975 = vmatpush1.bf16.msra.mxu0 0
        %1976 = vmatprep.subr.bf16.mxu0 0
        %1977 = vmatpush1.bf16.msra.mxu0 0
        %1978 = vmatprep.subr.bf16.mxu0 0
        %1979 = vmatpush1.bf16.msra.mxu0 0
        %1980 = vmatprep.subr.bf16.mxu0 0
        %1981 = vmatpush1.bf16.msra.mxu0 0
        %1982 = vmatprep.subr.bf16.mxu0 0
        %1983 = vmatpush1.bf16.msra.mxu0 0
        %1984 = vmatprep.subr.bf16.mxu0 0
        %1985 = vmatpush1.bf16.msra.mxu0 0
        %1986 = vmatprep.subr.bf16.mxu0 0
        %1987 = vmatpush1.bf16.msra.mxu0 0
        %1988 = vmatprep.subr.bf16.mxu0 0
        %1989 = vmatpush1.bf16.msra.mxu0 0
        %1990 = vmatprep.subr.bf16.mxu0 0
        %1991 = vmatpush1.bf16.msra.mxu0 0
        %1992 = vmatprep.subr.bf16.mxu0 0
        %1993 = vmatpush1.bf16.msra.mxu0 0
        %1994 = vmatprep.subr.bf16.mxu0 0
        %1995 = vmatpush1.bf16.msra.mxu0 0
        %1996 = vmatprep.subr.bf16.mxu0 0
        %1997 = vmatpush1.bf16.msra.mxu0 0
        %1998 = vmatprep.mubr.bf16.mxu0 0
        %1999 = vmatmul.mubr.bf16.gmra.mrb[0].mxu0 %v1289
        %v2000 = vpop.f32.mrb[0].mxu0
        %v2001 = vadd.f32 0.0, %v2000
        %v2002 = vpop.f32.mrb[0].mxu0
        %v2003 = vpop.f32.mrb[0].mxu0
        %v2004 = vpop.f32.mrb[0].mxu0
        %2005 = vdwg.mxu0
        %v2007 = vsel %vm1244, %v1914, 0
        %2009 = vmatprep.subr.bf16.mxu0 0
        %2010 = vmatpush1.bf16.msra.mxu0 %v2007
        %2011 = vmatprep.subr.bf16.mxu0 0
        %2012 = vmatpush1.bf16.msra.mxu0 0
        %2013 = vmatprep.subr.bf16.mxu0 0
        %2014 = vmatpush1.bf16.msra.mxu0 0
        %2015 = vmatprep.subr.bf16.mxu0 0
        %2016 = vmatpush1.bf16.msra.mxu0 0
        %2017 = vmatprep.subr.bf16.mxu0 0
        %2018 = vmatpush1.bf16.msra.mxu0 0
        %2019 = vmatprep.subr.bf16.mxu0 0
        %2020 = vmatpush1.bf16.msra.mxu0 0
        %2021 = vmatprep.subr.bf16.mxu0 0
        %2022 = vmatpush1.bf16.msra.mxu0 0
        %2023 = vmatprep.subr.bf16.mxu0 0
        %2024 = vmatpush1.bf16.msra.mxu0 0
        %2025 = vmatprep.subr.bf16.mxu0 0
        %2026 = vmatpush1.bf16.msra.mxu0 0
        %2027 = vmatprep.subr.bf16.mxu0 0
        %2028 = vmatpush1.bf16.msra.mxu0 0
        %2029 = vmatprep.subr.bf16.mxu0 0
        %2030 = vmatpush1.bf16.msra.mxu0 0
        %2031 = vmatprep.subr.bf16.mxu0 0
        %2032 = vmatpush1.bf16.msra.mxu0 0
        %2033 = vmatprep.subr.bf16.mxu0 0
        %2034 = vmatpush1.bf16.msra.mxu0 0
        %2035 = vmatprep.subr.bf16.mxu0 0
        %2036 = vmatpush1.bf16.msra.mxu0 0
        %2037 = vmatprep.subr.bf16.mxu0 0
        %2038 = vmatpush1.bf16.msra.mxu0 0
        %2039 = vmatprep.subr.bf16.mxu0 0
        %2040 = vmatpush1.bf16.msra.mxu0 0
        %2041 = vmatprep.mubr.bf16.mxu0 0
        %2042 = vmatmul.mubr.bf16.gmra.mrb[0].mxu0 %v1335
        %v2043 = vpop.f32.mrb[0].mxu0
        %v2044 = vadd.f32 0.0, %v2043
        %v2045 = vpop.f32.mrb[0].mxu0
        %v2046 = vpop.f32.mrb[0].mxu0
        %v2047 = vpop.f32.mrb[0].mxu0
        %2048 = vdwg.mxu0
        %v2050 = vsel %vm1244, %v1915, 0
        %2052 = vmatprep.subr.bf16.mxu0 0
        %2053 = vmatpush1.bf16.msra.mxu0 %v2050
        %2054 = vmatprep.subr.bf16.mxu0 0
        %2055 = vmatpush1.bf16.msra.mxu0 0
        %2056 = vmatprep.subr.bf16.mxu0 0
        %2057 = vmatpush1.bf16.msra.mxu0 0
        %2058 = vmatprep.subr.bf16.mxu0 0
        %2059 = vmatpush1.bf16.msra.mxu0 0
        %2060 = vmatprep.subr.bf16.mxu0 0
        %2061 = vmatpush1.bf16.msra.mxu0 0
        %2062 = vmatprep.subr.bf16.mxu0 0
        %2063 = vmatpush1.bf16.msra.mxu0 0
        %2064 = vmatprep.subr.bf16.mxu0 0
        %2065 = vmatpush1.bf16.msra.mxu0 0
        %2066 = vmatprep.subr.bf16.mxu0 0
        %2067 = vmatpush1.bf16.msra.mxu0 0
        %2068 = vmatprep.subr.bf16.mxu0 0
        %2069 = vmatpush1.bf16.msra.mxu0 0
        %2070 = vmatprep.subr.bf16.mxu0 0
        %2071 = vmatpush1.bf16.msra.mxu0 0
        %2072 = vmatprep.subr.bf16.mxu0 0
        %2073 = vmatpush1.bf16.msra.mxu0 0
        %2074 = vmatprep.subr.bf16.mxu0 0
        %2075 = vmatpush1.bf16.msra.mxu0 0
        %2076 = vmatprep.subr.bf16.mxu0 0
        %2077 = vmatpush1.bf16.msra.mxu0 0
        %2078 = vmatprep.subr.bf16.mxu0 0
        %2079 = vmatpush1.bf16.msra.mxu0 0
        %2080 = vmatprep.subr.bf16.mxu0 0
        %2081 = vmatpush1.bf16.msra.mxu0 0
        %2082 = vmatprep.subr.bf16.mxu0 0
        %2083 = vmatpush1.bf16.msra.mxu0 0
        %2084 = vmatprep.mubr.bf16.mxu0 0
        %2085 = vmatmul.mubr.bf16.gmra.mrb[0].mxu0 %v1381
        %v2086 = vpop.f32.mrb[0].mxu0
        %v2087 = vadd.f32 0.0, %v2086
        %v2088 = vpop.f32.mrb[0].mxu0
        %v2089 = vpop.f32.mrb[0].mxu0
        %v2090 = vpop.f32.mrb[0].mxu0
        %2091 = vdwg.mxu0
        %v2093 = vsel %vm1244, %v1916, 0
        %2095 = vmatprep.subr.bf16.mxu0 0
        %2096 = vmatpush1.bf16.msra.mxu0 %v2093
        %2097 = vmatprep.subr.bf16.mxu0 0
        %2098 = vmatpush1.bf16.msra.mxu0 0
        %2099 = vmatprep.subr.bf16.mxu0 0
        %2100 = vmatpush1.bf16.msra.mxu0 0
        %2101 = vmatprep.subr.bf16.mxu0 0
        %2102 = vmatpush1.bf16.msra.mxu0 0
        %2103 = vmatprep.subr.bf16.mxu0 0
        %2104 = vmatpush1.bf16.msra.mxu0 0
        %2105 = vmatprep.subr.bf16.mxu0 0
        %2106 = vmatpush1.bf16.msra.mxu0 0
        %2107 = vmatprep.subr.bf16.mxu0 0
        %2108 = vmatpush1.bf16.msra.mxu0 0
        %2109 = vmatprep.subr.bf16.mxu0 0
        %2110 = vmatpush1.bf16.msra.mxu0 0
        %2111 = vmatprep.subr.bf16.mxu0 0
        %2112 = vmatpush1.bf16.msra.mxu0 0
        %2113 = vmatprep.subr.bf16.mxu0 0
        %2114 = vmatpush1.bf16.msra.mxu0 0
        %2115 = vmatprep.subr.bf16.mxu0 0
        %2116 = vmatpush1.bf16.msra.mxu0 0
        %2117 = vmatprep.subr.bf16.mxu0 0
        %2118 = vmatpush1.bf16.msra.mxu0 0
        %2119 = vmatprep.subr.bf16.mxu0 0
        %2120 = vmatpush1.bf16.msra.mxu0 0
        %2121 = vmatprep.subr.bf16.mxu0 0
        %2122 = vmatpush1.bf16.msra.mxu0 0
        %2123 = vmatprep.subr.bf16.mxu0 0
        %2124 = vmatpush1.bf16.msra.mxu0 0
        %2125 = vmatprep.subr.bf16.mxu0 0
        %2126 = vmatpush1.bf16.msra.mxu0 0
        %2127 = vmatprep.mubr.bf16.mxu0 0
        %2128 = vmatmul.mubr.bf16.gmra.mrb[0].mxu0 %v1427
        %v2129 = vpop.f32.mrb[0].mxu0
        %v2130 = vadd.f32 0.0, %v2129
        %v2131 = vpop.f32.mrb[0].mxu0
        %v2132 = vpop.f32.mrb[0].mxu0
        %v2133 = vpop.f32.mrb[0].mxu0
        %2134 = vdwg.mxu0
        %v2136 = vsel %vm1244, %v1917, 0
        %2138 = vmatprep.subr.bf16.mxu0 0
        %2139 = vmatpush1.bf16.msra.mxu0 %v2136
        %2140 = vmatprep.subr.bf16.mxu0 0
        %2141 = vmatpush1.bf16.msra.mxu0 0
        %2142 = vmatprep.subr.bf16.mxu0 0
        %2143 = vmatpush1.bf16.msra.mxu0 0
        %2144 = vmatprep.subr.bf16.mxu0 0
        %2145 = vmatpush1.bf16.msra.mxu0 0
        %2146 = vmatprep.subr.bf16.mxu0 0
        %2147 = vmatpush1.bf16.msra.mxu0 0
        %2148 = vmatprep.subr.bf16.mxu0 0
        %2149 = vmatpush1.bf16.msra.mxu0 0
        %2150 = vmatprep.subr.bf16.mxu0 0
        %2151 = vmatpush1.bf16.msra.mxu0 0
        %2152 = vmatprep.subr.bf16.mxu0 0
        %2153 = vmatpush1.bf16.msra.mxu0 0
        %2154 = vmatprep.subr.bf16.mxu0 0
        %2155 = vmatpush1.bf16.msra.mxu0 0
        %2156 = vmatprep.subr.bf16.mxu0 0
        %2157 = vmatpush1.bf16.msra.mxu0 0
        %2158 = vmatprep.subr.bf16.mxu0 0
        %2159 = vmatpush1.bf16.msra.mxu0 0
        %2160 = vmatprep.subr.bf16.mxu0 0
        %2161 = vmatpush1.bf16.msra.mxu0 0
        %2162 = vmatprep.subr.bf16.mxu0 0
        %2163 = vmatpush1.bf16.msra.mxu0 0
        %2164 = vmatprep.subr.bf16.mxu0 0
        %2165 = vmatpush1.bf16.msra.mxu0 0
        %2166 = vmatprep.subr.bf16.mxu0 0
        %2167 = vmatpush1.bf16.msra.mxu0 0
        %2168 = vmatprep.subr.bf16.mxu0 0
        %2169 = vmatpush1.bf16.msra.mxu0 0
        %2170 = vmatprep.mubr.bf16.mxu0 0
        %2171 = vmatmul.mubr.bf16.gmra.mrb[0].mxu0 %v1473
        %v2172 = vpop.f32.mrb[0].mxu0
        %v2173 = vadd.f32 0.0, %v2172
        %v2174 = vpop.f32.mrb[0].mxu0
        %v2175 = vpop.f32.mrb[0].mxu0
        %v2176 = vpop.f32.mrb[0].mxu0
        %2177 = vdwg.mxu0
        %v2179 = vsel %vm1244, %v1918, 0
        %2181 = vmatprep.subr.bf16.mxu0 0
        %2182 = vmatpush1.bf16.msra.mxu0 %v2179
        %2183 = vmatprep.subr.bf16.mxu0 0
        %2184 = vmatpush1.bf16.msra.mxu0 0
        %2185 = vmatprep.subr.bf16.mxu0 0
        %2186 = vmatpush1.bf16.msra.mxu0 0
        %2187 = vmatprep.subr.bf16.mxu0 0
        %2188 = vmatpush1.bf16.msra.mxu0 0
        %2189 = vmatprep.subr.bf16.mxu0 0
        %2190 = vmatpush1.bf16.msra.mxu0 0
        %2191 = vmatprep.subr.bf16.mxu0 0
        %2192 = vmatpush1.bf16.msra.mxu0 0
        %2193 = vmatprep.subr.bf16.mxu0 0
        %2194 = vmatpush1.bf16.msra.mxu0 0
        %2195 = vmatprep.subr.bf16.mxu0 0
        %2196 = vmatpush1.bf16.msra.mxu0 0
        %2197 = vmatprep.subr.bf16.mxu0 0
        %2198 = vmatpush1.bf16.msra.mxu0 0
        %2199 = vmatprep.subr.bf16.mxu0 0
        %2200 = vmatpush1.bf16.msra.mxu0 0
        %2201 = vmatprep.subr.bf16.mxu0 0
        %2202 = vmatpush1.bf16.msra.mxu0 0
        %2203 = vmatprep.subr.bf16.mxu0 0
        %2204 = vmatpush1.bf16.msra.mxu0 0
        %2205 = vmatprep.subr.bf16.mxu0 0
        %2206 = vmatpush1.bf16.msra.mxu0 0
        %2207 = vmatprep.subr.bf16.mxu0 0
        %2208 = vmatpush1.bf16.msra.mxu0 0
        %2209 = vmatprep.subr.bf16.mxu0 0
        %2210 = vmatpush1.bf16.msra.mxu0 0
        %2211 = vmatprep.subr.bf16.mxu0 0
        %2212 = vmatpush1.bf16.msra.mxu0 0
        %2213 = vmatprep.mubr.bf16.mxu0 0
        %2214 = vmatmul.mubr.bf16.gmra.mrb[0].mxu0 %v1519
        %v2215 = vpop.f32.mrb[0].mxu0
        %v2216 = vadd.f32 0.0, %v2215
        %v2217 = vpop.f32.mrb[0].mxu0
        %v2218 = vpop.f32.mrb[0].mxu0
        %v2219 = vpop.f32.mrb[0].mxu0
        %2220 = vdwg.mxu0
        %v2222 = vsel %vm1244, %v1919, 0
        %2224 = vmatprep.subr.bf16.mxu0 0
        %2225 = vmatpush1.bf16.msra.mxu0 %v2222
        %2226 = vmatprep.subr.bf16.mxu0 0
        %2227 = vmatpush1.bf16.msra.mxu0 0
        %2228 = vmatprep.subr.bf16.mxu0 0
        %2229 = vmatpush1.bf16.msra.mxu0 0
        %2230 = vmatprep.subr.bf16.mxu0 0
        %2231 = vmatpush1.bf16.msra.mxu0 0
        %2232 = vmatprep.subr.bf16.mxu0 0
        %2233 = vmatpush1.bf16.msra.mxu0 0
        %2234 = vmatprep.subr.bf16.mxu0 0
        %2235 = vmatpush1.bf16.msra.mxu0 0
        %2236 = vmatprep.subr.bf16.mxu0 0
        %2237 = vmatpush1.bf16.msra.mxu0 0
        %2238 = vmatprep.subr.bf16.mxu0 0
        %2239 = vmatpush1.bf16.msra.mxu0 0
        %2240 = vmatprep.subr.bf16.mxu0 0
        %2241 = vmatpush1.bf16.msra.mxu0 0
        %2242 = vmatprep.subr.bf16.mxu0 0
        %2243 = vmatpush1.bf16.msra.mxu0 0
        %2244 = vmatprep.subr.bf16.mxu0 0
        %2245 = vmatpush1.bf16.msra.mxu0 0
        %2246 = vmatprep.subr.bf16.mxu0 0
        %2247 = vmatpush1.bf16.msra.mxu0 0
        %2248 = vmatprep.subr.bf16.mxu0 0
        %2249 = vmatpush1.bf16.msra.mxu0 0
        %2250 = vmatprep.subr.bf16.mxu0 0
        %2251 = vmatpush1.bf16.msra.mxu0 0
        %2252 = vmatprep.subr.bf16.mxu0 0
        %2253 = vmatpush1.bf16.msra.mxu0 0
        %2254 = vmatprep.subr.bf16.mxu0 0
        %2255 = vmatpush1.bf16.msra.mxu0 0
        %2256 = vmatprep.mubr.bf16.mxu0 0
        %2257 = vmatmul.mubr.bf16.gmra.mrb[0].mxu0 %v1565
        %v2258 = vpop.f32.mrb[0].mxu0
        %v2259 = vadd.f32 0.0, %v2258
        %v2260 = vpop.f32.mrb[0].mxu0
        %v2261 = vpop.f32.mrb[0].mxu0
        %v2262 = vpop.f32.mrb[0].mxu0
        %2263 = vdwg.mxu0
        %v2264 = vmul.f32 %v1958, %v1218
        %v2265 = vmul.f32 %v2001, %v1220
        %v2266 = vmul.f32 %v2044, %v1222
        %v2267 = vmul.f32 %v2087, %v1224
        %v2268 = vmul.f32 %v2130, %v1226
        %v2269 = vmul.f32 %v2173, %v1228
        %v2270 = vmul.f32 %v2216, %v1230
        %v2271 = vmul.f32 %v2259, %v1232
        %v2272 = vpack.c.bf16 %v2265, %v2264
        %v2273 = vpack.c.bf16 %v2267, %v2266
        %v2274 = vpack.c.bf16 %v2269, %v2268
        %v2275 = vpack.c.bf16 %v2271, %v2270
        %v2276 = vld [vmem:[#allocation13] sm:$0xff]
        %v2277 = vld [vmem:[#allocation13 + $0x8] sm:$0xff]
        %v2278 = vld [vmem:[#allocation13 + $0x10] sm:$0xff]
        %v2279 = vld [vmem:[#allocation13 + $0x18] sm:$0xff]
        %v2280 = vpack.c.bf16 %v2277, %v2276
        %v2281 = vpack.c.bf16 %v2279, %v2278
        %v2282 = vpack.c.bf16 %v1905, %v1904
        %v2283 = vpack.c.bf16 %v1907, %v1906
        %v2284 = vpack.c.bf16 %v1909, %v1908
        %v2285 = vpack.c.bf16 %v1911, %v1910
        %v2286 = vld [vmem:[#allocation14] sm:$0xff]
        %v2287 = vld [vmem:[#allocation14 + $0x8] sm:$0xff]
        %v2288 = vld [vmem:[#allocation14 + $0x10] sm:$0xff]
        %v2289 = vld [vmem:[#allocation14 + $0x18] sm:$0xff]
        %v2290 = vpack.c.bf16 %v2287, %v2286
        %v2291 = vpack.c.bf16 %v2289, %v2288
        %v2293 = vsel %vm1090, %v2282, 0
        %v2296 = vsel %vm1090, %v2283, 0
        %v2299 = vsel %vm1090, %v2284, 0
        %v2302 = vsel %vm1090, %v2285, 0
        %2304 = vmatprep.subr.bf16.mxu0 0
        %2305 = vmatpush1.bf16.msra.mxu0 %v2290
        %2306 = vmatprep.subr.bf16.mxu0 0
        %2307 = vmatpush1.bf16.msra.mxu0 %v2291
        %2308 = vmatprep.subr.bf16.mxu0 0
        %2309 = vmatpush1.bf16.msra.mxu0 0
        %2310 = vmatprep.subr.bf16.mxu0 0
        %2311 = vmatpush1.bf16.msra.mxu0 0
        %2312 = vmatprep.subr.bf16.mxu0 0
        %2313 = vmatpush1.bf16.msra.mxu0 0
        %2314 = vmatprep.subr.bf16.mxu0 0
        %2315 = vmatpush1.bf16.msra.mxu0 0
        %2316 = vmatprep.subr.bf16.mxu0 0
        %2317 = vmatpush1.bf16.msra.mxu0 0
        %2318 = vmatprep.subr.bf16.mxu0 0
        %2319 = vmatpush1.bf16.msra.mxu0 0
        %2320 = vmatprep.subr.bf16.mxu0 0
        %2321 = vmatpush1.bf16.msra.mxu0 0
        %2322 = vmatprep.subr.bf16.mxu0 0
        %2323 = vmatpush1.bf16.msra.mxu0 0
        %2324 = vmatprep.subr.bf16.mxu0 0
        %2325 = vmatpush1.bf16.msra.mxu0 0
        %2326 = vmatprep.subr.bf16.mxu0 0
        %2327 = vmatpush1.bf16.msra.mxu0 0
        %2328 = vmatprep.subr.bf16.mxu0 0
        %2329 = vmatpush1.bf16.msra.mxu0 0
        %2330 = vmatprep.subr.bf16.mxu0 0
        %2331 = vmatpush1.bf16.msra.mxu0 0
        %2332 = vmatprep.subr.bf16.mxu0 0
        %2333 = vmatpush1.bf16.msra.mxu0 0
        %2334 = vmatprep.subr.bf16.mxu0 0
        %2335 = vmatpush1.bf16.msra.mxu0 0
        %2336 = vmatprep.mubr.bf16.mxu0 0
        %2337 = vmatmul.mubr.bf16.gmra.mrb[0].mxu0 %v2293
        %v2338 = vpop.f32.mrb[0].mxu0
        %v2339 = vadd.f32 0.0, %v2338
        %v2340 = vpop.f32.mrb[0].mxu0
        %v2341 = vpop.f32.mrb[0].mxu0
        %v2342 = vadd.f32 0.0, %v2341
        %v2343 = vpop.f32.mrb[0].mxu0
        %2344 = vmatprep.mubr.bf16.mxu0 0
        %2345 = vmatmul.mubr.bf16.gmra.mrb[0].mxu0 %v2296
        %v2346 = vpop.f32.mrb[0].mxu0
        %v2347 = vadd.f32 0.0, %v2346
        %v2348 = vpop.f32.mrb[0].mxu0
        %v2349 = vpop.f32.mrb[0].mxu0
        %v2350 = vadd.f32 0.0, %v2349
        %v2351 = vpop.f32.mrb[0].mxu0
        %2352 = vmatprep.mubr.bf16.mxu0 0
        %2353 = vmatmul.mubr.bf16.gmra.mrb[0].mxu0 %v2299
        %v2354 = vpop.f32.mrb[0].mxu0
        %v2355 = vadd.f32 0.0, %v2354
        %v2356 = vpop.f32.mrb[0].mxu0
        %v2357 = vpop.f32.mrb[0].mxu0
        %v2358 = vadd.f32 0.0, %v2357
        %v2359 = vpop.f32.mrb[0].mxu0
        %2360 = vmatprep.mubr.bf16.mxu0 0
        %2361 = vmatmul.mubr.bf16.gmra.mrb[0].mxu0 %v2302
        %v2362 = vpop.f32.mrb[0].mxu0
        %v2363 = vadd.f32 0.0, %v2362
        %v2364 = vpop.f32.mrb[0].mxu0
        %v2365 = vpop.f32.mrb[0].mxu0
        %v2366 = vadd.f32 0.0, %v2365
        %v2367 = vpop.f32.mrb[0].mxu0
        %2368 = vdwg.mxu0
        %v2370 = vsel %vm1090, %v2272, 0
        %v2373 = vsel %vm1090, %v2273, 0
        %v2376 = vsel %vm1090, %v2274, 0
        %v2379 = vsel %vm1090, %v2275, 0
        %2381 = vmatprep.subr.bf16.mxu0 0
        %2382 = vmatpush1.bf16.msra.mxu0 %v2280
        %2383 = vmatprep.subr.bf16.mxu0 0
        %2384 = vmatpush1.bf16.msra.mxu0 %v2281
        %2385 = vmatprep.subr.bf16.mxu0 0
        %2386 = vmatpush1.bf16.msra.mxu0 0
        %2387 = vmatprep.subr.bf16.mxu0 0
        %2388 = vmatpush1.bf16.msra.mxu0 0
        %2389 = vmatprep.subr.bf16.mxu0 0
        %2390 = vmatpush1.bf16.msra.mxu0 0
        %2391 = vmatprep.subr.bf16.mxu0 0
        %2392 = vmatpush1.bf16.msra.mxu0 0
        %2393 = vmatprep.subr.bf16.mxu0 0
        %2394 = vmatpush1.bf16.msra.mxu0 0
        %2395 = vmatprep.subr.bf16.mxu0 0
        %2396 = vmatpush1.bf16.msra.mxu0 0
        %2397 = vmatprep.subr.bf16.mxu0 0
        %2398 = vmatpush1.bf16.msra.mxu0 0
        %2399 = vmatprep.subr.bf16.mxu0 0
        %2400 = vmatpush1.bf16.msra.mxu0 0
        %2401 = vmatprep.subr.bf16.mxu0 0
        %2402 = vmatpush1.bf16.msra.mxu0 0
        %2403 = vmatprep.subr.bf16.mxu0 0
        %2404 = vmatpush1.bf16.msra.mxu0 0
        %2405 = vmatprep.subr.bf16.mxu0 0
        %2406 = vmatpush1.bf16.msra.mxu0 0
        %2407 = vmatprep.subr.bf16.mxu0 0
        %2408 = vmatpush1.bf16.msra.mxu0 0
        %2409 = vmatprep.subr.bf16.mxu0 0
        %2410 = vmatpush1.bf16.msra.mxu0 0
        %2411 = vmatprep.subr.bf16.mxu0 0
        %2412 = vmatpush1.bf16.msra.mxu0 0
        %2413 = vmatprep.mubr.bf16.mxu0 0
        %2414 = vmatmul.mubr.bf16.gmra.mrb[0].mxu0 %v2370
        %v2415 = vpop.f32.mrb[0].mxu0
        %v2416 = vadd.f32 %v2339, %v2415
        %v2417 = vpop.f32.mrb[0].mxu0
        %v2418 = vpop.f32.mrb[0].mxu0
        %v2419 = vadd.f32 %v2342, %v2418
        %v2420 = vpop.f32.mrb[0].mxu0
        %2421 = vmatprep.mubr.bf16.mxu0 0
        %2422 = vmatmul.mubr.bf16.gmra.mrb[0].mxu0 %v2373
        %v2423 = vpop.f32.mrb[0].mxu0
        %v2424 = vadd.f32 %v2347, %v2423
        %v2425 = vpop.f32.mrb[0].mxu0
        %v2426 = vpop.f32.mrb[0].mxu0
        %v2427 = vadd.f32 %v2350, %v2426
        %v2428 = vpop.f32.mrb[0].mxu0
        %2429 = vmatprep.mubr.bf16.mxu0 0
        %2430 = vmatmul.mubr.bf16.gmra.mrb[0].mxu0 %v2376
        %v2431 = vpop.f32.mrb[0].mxu0
        %v2432 = vadd.f32 %v2355, %v2431
        %v2433 = vpop.f32.mrb[0].mxu0
        %v2434 = vpop.f32.mrb[0].mxu0
        %v2435 = vadd.f32 %v2358, %v2434
        %v2436 = vpop.f32.mrb[0].mxu0
        %2437 = vmatprep.mubr.bf16.mxu0 0
        %2438 = vmatmul.mubr.bf16.gmra.mrb[0].mxu0 %v2379
        %v2439 = vpop.f32.mrb[0].mxu0
        %v2440 = vadd.f32 %v2363, %v2439
        %v2441 = vpop.f32.mrb[0].mxu0
        %v2442 = vpop.f32.mrb[0].mxu0
        %v2443 = vadd.f32 %v2366, %v2442
        %v2444 = vpop.f32.mrb[0].mxu0
        %2445 = vdwg.mxu0
        %v2446 = vmax.f32 %v2416, 0.0
        %v2447 = vmax.f32 %v2419, 0.0
        %v2448 = vmax.f32 %v2424, 0.0
        %v2449 = vmax.f32 %v2427, 0.0
        %v2450 = vmax.f32 %v2432, 0.0
        %v2451 = vmax.f32 %v2435, 0.0
        %v2452 = vmax.f32 %v2440, 0.0
        %v2453 = vmax.f32 %v2443, 0.0
        %v2454 = vld [vmem:[%s13] sm:$0xff]
        %v2455 = vld [vmem:[%s13 + $0x8] sm:$0xff]
        %v2456 = vld [vmem:[%s13 + $0x10] sm:$0xff]
        %v2457 = vld [vmem:[%s13 + $0x18] sm:$0xff]
        %v2458 = vld [vmem:[%s13 + $0x20] sm:$0xff]
        %v2459 = vld [vmem:[%s13 + $0x28] sm:$0xff]
        %v2460 = vld [vmem:[%s13 + $0x30] sm:$0xff]
        %v2461 = vld [vmem:[%s13 + $0x38] sm:$0xff]
        %2463 = vset.pattern.permute.xlu0 0
        %2464 = vperm.xlu0 %2463, %v2454
        %v2465 = vpop.permute.xlu0 %2464
        %2468 = vset.pattern.permute.xlu0 0
        %2469 = vperm.xlu0 %2468, %v2455
        %v2470 = vpop.permute.xlu0 %2469
        %2473 = vset.pattern.permute.xlu0 0
        %2474 = vperm.xlu0 %2473, %v2456
        %v2475 = vpop.permute.xlu0 %2474
        %2478 = vset.pattern.permute.xlu0 0
        %2479 = vperm.xlu0 %2478, %v2457
        %v2480 = vpop.permute.xlu0 %2479
        %2483 = vset.pattern.permute.xlu0 0
        %2484 = vperm.xlu0 %2483, %v2458
        %v2485 = vpop.permute.xlu0 %2484
        %2488 = vset.pattern.permute.xlu0 0
        %2489 = vperm.xlu0 %2488, %v2459
        %v2490 = vpop.permute.xlu0 %2489
        %2493 = vset.pattern.permute.xlu0 0
        %2494 = vperm.xlu0 %2493, %v2460
        %v2495 = vpop.permute.xlu0 %2494
        %2498 = vset.pattern.permute.xlu0 0
        %2499 = vperm.xlu0 %2498, %v2461
        %v2500 = vpop.permute.xlu0 %2499
        %v2502 = vmul.f32 %v2446, %v2465
        %v2503 = vmul.f32 %v2447, %v2470
        %v2504 = vmul.f32 %v2448, %v2475
        %v2505 = vmul.f32 %v2449, %v2480
        %v2506 = vmul.f32 %v2450, %v2485
        %v2507 = vmul.f32 %v2451, %v2490
        %v2508 = vmul.f32 %v2452, %v2495
        %v2509 = vmul.f32 %v2453, %v2500
        %v2510 = vld [vmem:[%s14] sm:$0xff]
        %v2511 = vld [vmem:[%s14 + $0x8] sm:$0xff]
        %v2512 = vld [vmem:[%s14 + $0x10] sm:$0xff]
        %v2513 = vld [vmem:[%s14 + $0x18] sm:$0xff]
        %v2514 = vld [vmem:[%s14 + $0x20] sm:$0xff]
        %v2515 = vld [vmem:[%s14 + $0x28] sm:$0xff]
        %v2516 = vld [vmem:[%s14 + $0x30] sm:$0xff]
        %v2517 = vld [vmem:[%s14 + $0x38] sm:$0xff]
        %2519 = vset.pattern.permute.xlu0 0
        %2520 = vperm.xlu0 %2519, %v2510
        %v2521 = vpop.permute.xlu0 %2520
        %2524 = vset.pattern.permute.xlu0 0
        %2525 = vperm.xlu0 %2524, %v2511
        %v2526 = vpop.permute.xlu0 %2525
        %2529 = vset.pattern.permute.xlu0 0
        %2530 = vperm.xlu0 %2529, %v2512
        %v2531 = vpop.permute.xlu0 %2530
        %2534 = vset.pattern.permute.xlu0 0
        %2535 = vperm.xlu0 %2534, %v2513
        %v2536 = vpop.permute.xlu0 %2535
        %2539 = vset.pattern.permute.xlu0 0
        %2540 = vperm.xlu0 %2539, %v2514
        %v2541 = vpop.permute.xlu0 %2540
        %2544 = vset.pattern.permute.xlu0 0
        %2545 = vperm.xlu0 %2544, %v2515
        %v2546 = vpop.permute.xlu0 %2545
        %2549 = vset.pattern.permute.xlu0 0
        %2550 = vperm.xlu0 %2549, %v2516
        %v2551 = vpop.permute.xlu0 %2550
        %2554 = vset.pattern.permute.xlu0 0
        %2555 = vperm.xlu0 %2554, %v2517
        %v2556 = vpop.permute.xlu0 %2555
        %v2558 = vadd.f32 %v2502, %v2521
        %v2559 = vadd.f32 %v2503, %v2526
        %v2560 = vadd.f32 %v2504, %v2531
        %v2561 = vadd.f32 %v2505, %v2536
        %v2562 = vadd.f32 %v2506, %v2541
        %v2563 = vadd.f32 %v2507, %v2546
        %v2564 = vadd.f32 %v2508, %v2551
        %v2565 = vadd.f32 %v2509, %v2556
        %2566 = vst.msk [vmem:[#allocation2] sm:$0xff] %vm1090, 0.0
        %2567 = vst.msk [vmem:[#allocation2 + $0x8] sm:$0xff] %vm1090, 0.0
        %2568 = vst.msk [vmem:[#allocation2 + $0x10] sm:$0xff] %vm1090, 0.0
        %2569 = vst.msk [vmem:[#allocation2 + $0x18] sm:$0xff] %vm1090, 0.0
        %2570 = vst.msk [vmem:[#allocation2 + $0x20] sm:$0xff] %vm1090, 0.0
        %2571 = vst.msk [vmem:[#allocation2 + $0x28] sm:$0xff] %vm1090, 0.0
        %2572 = vst.msk [vmem:[#allocation2 + $0x30] sm:$0xff] %vm1090, 0.0
        %2573 = vst.msk [vmem:[#allocation2 + $0x38] sm:$0xff] %vm1090, 0.0
        %2574 = vst.msk [vmem:[#allocation2 + $0x40] sm:$0xff] %vm1090, 0.0
        %2575 = vst.msk [vmem:[#allocation2 + $0x48] sm:$0xff] %vm1090, 0.0
        %2576 = vst.msk [vmem:[#allocation2 + $0x50] sm:$0xff] %vm1090, 0.0
        %2577 = vst.msk [vmem:[#allocation2 + $0x58] sm:$0xff] %vm1090, 0.0
        %s2578 = scalar_lea.vmem [#allocation2], 16
        %2579 = vst.msk [vmem:[%s2578] sm:$0xff] %vm1090, %v2558
        %2580 = vst.msk [vmem:[%s2578 + $0x8] sm:$0xff] %vm1090, %v2559
        %2581 = vst.msk [vmem:[%s2578 + $0x10] sm:$0xff] %vm1090, %v2560
        %2582 = vst.msk [vmem:[%s2578 + $0x18] sm:$0xff] %vm1090, %v2561
        %2583 = vst.msk [vmem:[%s2578 + $0x20] sm:$0xff] %vm1090, %v2562
        %2584 = vst.msk [vmem:[%s2578 + $0x28] sm:$0xff] %vm1090, %v2563
        %2585 = vst.msk [vmem:[%s2578 + $0x30] sm:$0xff] %vm1090, %v2564
        %2586 = vst.msk [vmem:[%s2578 + $0x38] sm:$0xff] %vm1090, %v2565
        %v2587 = vld [vmem:[#allocation2] sm:$0xff]
        %v2588 = vld [vmem:[#allocation2 + $0x8] sm:$0xff]
        %v2589 = vld [vmem:[#allocation2 + $0x10] sm:$0xff]
        %v2590 = vld [vmem:[#allocation2 + $0x18] sm:$0xff]
        %v2591 = vld [vmem:[#allocation2 + $0x20] sm:$0xff]
        %v2592 = vld [vmem:[#allocation2 + $0x28] sm:$0xff]
        %v2593 = vld [vmem:[#allocation2 + $0x30] sm:$0xff]
        %v2594 = vld [vmem:[#allocation2 + $0x38] sm:$0xff]
        %v2595 = vpack.c.bf16 %v2588, %v2587
        %v2596 = vpack.c.bf16 %v2590, %v2589
        %v2597 = vpack.c.bf16 %v2592, %v2591
        %v2598 = vpack.c.bf16 %v2594, %v2593
        %v2599 = vld [vmem:[#allocation16] sm:$0xff]
        %v2600 = vld [vmem:[#allocation16 + $0x8] sm:$0xff]
        %v2601 = vld [vmem:[#allocation16 + $0x10] sm:$0xff]
        %v2602 = vld [vmem:[#allocation16 + $0x18] sm:$0xff]
        %v2603 = vpack.c.bf16 %v2600, %v2599
        %v2604 = vpack.c.bf16 %v2602, %v2601
        %s2605 = scalar_lea.vmem [#allocation2], 8
        %v2606 = vld [vmem:[%s2605] sm:$0xff]
        %v2607 = vld [vmem:[%s2605 + $0x8] sm:$0xff]
        %v2608 = vld [vmem:[%s2605 + $0x10] sm:$0xff]
        %v2609 = vld [vmem:[%s2605 + $0x18] sm:$0xff]
        %v2610 = vld [vmem:[%s2605 + $0x20] sm:$0xff]
        %v2611 = vld [vmem:[%s2605 + $0x28] sm:$0xff]
        %v2612 = vld [vmem:[%s2605 + $0x30] sm:$0xff]
        %v2613 = vld [vmem:[%s2605 + $0x38] sm:$0xff]
        %v2614 = vpack.c.bf16 %v2607, %v2606
        %v2615 = vpack.c.bf16 %v2609, %v2608
        %v2616 = vpack.c.bf16 %v2611, %v2610
        %v2617 = vpack.c.bf16 %v2613, %v2612
        %s2618 = scalar_lea.vmem [#allocation16], 32
        %v2619 = vld [vmem:[%s2618] sm:$0xff]
        %v2620 = vld [vmem:[%s2618 + $0x8] sm:$0xff]
        %v2621 = vld [vmem:[%s2618 + $0x10] sm:$0xff]
        %v2622 = vld [vmem:[%s2618 + $0x18] sm:$0xff]
        %v2623 = vpack.c.bf16 %v2620, %v2619
        %v2624 = vpack.c.bf16 %v2622, %v2621
        %v2626 = vsel %vm1090, %v2614, 0
        %v2629 = vsel %vm1090, %v2615, 0
        %v2632 = vsel %vm1090, %v2616, 0
        %v2635 = vsel %vm1090, %v2617, 0
        %2637 = vmatprep.subr.bf16.mxu0 0
        %2638 = vmatpush1.bf16.msra.mxu0 %v2623
        %2639 = vmatprep.subr.bf16.mxu0 0
        %2640 = vmatpush1.bf16.msra.mxu0 %v2624
        %2641 = vmatprep.subr.bf16.mxu0 0
        %2642 = vmatpush1.bf16.msra.mxu0 0
        %2643 = vmatprep.subr.bf16.mxu0 0
        %2644 = vmatpush1.bf16.msra.mxu0 0
        %2645 = vmatprep.subr.bf16.mxu0 0
        %2646 = vmatpush1.bf16.msra.mxu0 0
        %2647 = vmatprep.subr.bf16.mxu0 0
        %2648 = vmatpush1.bf16.msra.mxu0 0
        %2649 = vmatprep.subr.bf16.mxu0 0
        %2650 = vmatpush1.bf16.msra.mxu0 0
        %2651 = vmatprep.subr.bf16.mxu0 0
        %2652 = vmatpush1.bf16.msra.mxu0 0
        %2653 = vmatprep.subr.bf16.mxu0 0
        %2654 = vmatpush1.bf16.msra.mxu0 0
        %2655 = vmatprep.subr.bf16.mxu0 0
        %2656 = vmatpush1.bf16.msra.mxu0 0
        %2657 = vmatprep.subr.bf16.mxu0 0
        %2658 = vmatpush1.bf16.msra.mxu0 0
        %2659 = vmatprep.subr.bf16.mxu0 0
        %2660 = vmatpush1.bf16.msra.mxu0 0
        %2661 = vmatprep.subr.bf16.mxu0 0
        %2662 = vmatpush1.bf16.msra.mxu0 0
        %2663 = vmatprep.subr.bf16.mxu0 0
        %2664 = vmatpush1.bf16.msra.mxu0 0
        %2665 = vmatprep.subr.bf16.mxu0 0
        %2666 = vmatpush1.bf16.msra.mxu0 0
        %2667 = vmatprep.subr.bf16.mxu0 0
        %2668 = vmatpush1.bf16.msra.mxu0 0
        %2669 = vmatprep.mubr.bf16.mxu0 0
        %2670 = vmatmul.mubr.bf16.gmra.mrb[0].mxu0 %v2626
        %v2671 = vpop.f32.mrb[0].mxu0
        %v2672 = vadd.f32 0.0, %v2671
        %v2673 = vpop.f32.mrb[0].mxu0
        %v2674 = vpop.f32.mrb[0].mxu0
        %v2675 = vadd.f32 0.0, %v2674
        %v2676 = vpop.f32.mrb[0].mxu0
        %2677 = vmatprep.mubr.bf16.mxu0 0
        %2678 = vmatmul.mubr.bf16.gmra.mrb[0].mxu0 %v2629
        %v2679 = vpop.f32.mrb[0].mxu0
        %v2680 = vadd.f32 0.0, %v2679
        %v2681 = vpop.f32.mrb[0].mxu0
        %v2682 = vpop.f32.mrb[0].mxu0
        %v2683 = vadd.f32 0.0, %v2682
        %v2684 = vpop.f32.mrb[0].mxu0
        %2685 = vmatprep.mubr.bf16.mxu0 0
        %2686 = vmatmul.mubr.bf16.gmra.mrb[0].mxu0 %v2632
        %v2687 = vpop.f32.mrb[0].mxu0
        %v2688 = vadd.f32 0.0, %v2687
        %v2689 = vpop.f32.mrb[0].mxu0
        %v2690 = vpop.f32.mrb[0].mxu0
        %v2691 = vadd.f32 0.0, %v2690
        %v2692 = vpop.f32.mrb[0].mxu0
        %2693 = vmatprep.mubr.bf16.mxu0 0
        %2694 = vmatmul.mubr.bf16.gmra.mrb[0].mxu0 %v2635
        %v2695 = vpop.f32.mrb[0].mxu0
        %v2696 = vadd.f32 0.0, %v2695
        %v2697 = vpop.f32.mrb[0].mxu0
        %v2698 = vpop.f32.mrb[0].mxu0
        %v2699 = vadd.f32 0.0, %v2698
        %v2700 = vpop.f32.mrb[0].mxu0
        %2701 = vdwg.mxu0
        %v2703 = vsel %vm1090, %v2595, 0
        %v2706 = vsel %vm1090, %v2596, 0
        %v2709 = vsel %vm1090, %v2597, 0
        %v2712 = vsel %vm1090, %v2598, 0
        %2714 = vmatprep.subr.bf16.mxu0 0
        %2715 = vmatpush1.bf16.msra.mxu0 %v2603
        %2716 = vmatprep.subr.bf16.mxu0 0
        %2717 = vmatpush1.bf16.msra.mxu0 %v2604
        %2718 = vmatprep.subr.bf16.mxu0 0
        %2719 = vmatpush1.bf16.msra.mxu0 0
        %2720 = vmatprep.subr.bf16.mxu0 0
        %2721 = vmatpush1.bf16.msra.mxu0 0
        %2722 = vmatprep.subr.bf16.mxu0 0
        %2723 = vmatpush1.bf16.msra.mxu0 0
        %2724 = vmatprep.subr.bf16.mxu0 0
        %2725 = vmatpush1.bf16.msra.mxu0 0
        %2726 = vmatprep.subr.bf16.mxu0 0
        %2727 = vmatpush1.bf16.msra.mxu0 0
        %2728 = vmatprep.subr.bf16.mxu0 0
        %2729 = vmatpush1.bf16.msra.mxu0 0
        %2730 = vmatprep.subr.bf16.mxu0 0
        %2731 = vmatpush1.bf16.msra.mxu0 0
        %2732 = vmatprep.subr.bf16.mxu0 0
        %2733 = vmatpush1.bf16.msra.mxu0 0
        %2734 = vmatprep.subr.bf16.mxu0 0
        %2735 = vmatpush1.bf16.msra.mxu0 0
        %2736 = vmatprep.subr.bf16.mxu0 0
        %2737 = vmatpush1.bf16.msra.mxu0 0
        %2738 = vmatprep.subr.bf16.mxu0 0
        %2739 = vmatpush1.bf16.msra.mxu0 0
        %2740 = vmatprep.subr.bf16.mxu0 0
        %2741 = vmatpush1.bf16.msra.mxu0 0
        %2742 = vmatprep.subr.bf16.mxu0 0
        %2743 = vmatpush1.bf16.msra.mxu0 0
        %2744 = vmatprep.subr.bf16.mxu0 0
        %2745 = vmatpush1.bf16.msra.mxu0 0
        %2746 = vmatprep.mubr.bf16.mxu0 0
        %2747 = vmatmul.mubr.bf16.gmra.mrb[0].mxu0 %v2703
        %v2748 = vpop.f32.mrb[0].mxu0
        %v2749 = vadd.f32 %v2672, %v2748
        %v2750 = vpop.f32.mrb[0].mxu0
        %v2751 = vpop.f32.mrb[0].mxu0
        %v2752 = vadd.f32 %v2675, %v2751
        %v2753 = vpop.f32.mrb[0].mxu0
        %2754 = vmatprep.mubr.bf16.mxu0 0
        %2755 = vmatmul.mubr.bf16.gmra.mrb[0].mxu0 %v2706
        %v2756 = vpop.f32.mrb[0].mxu0
        %v2757 = vadd.f32 %v2680, %v2756
        %v2758 = vpop.f32.mrb[0].mxu0
        %v2759 = vpop.f32.mrb[0].mxu0
        %v2760 = vadd.f32 %v2683, %v2759
        %v2761 = vpop.f32.mrb[0].mxu0
        %2762 = vmatprep.mubr.bf16.mxu0 0
        %2763 = vmatmul.mubr.bf16.gmra.mrb[0].mxu0 %v2709
        %v2764 = vpop.f32.mrb[0].mxu0
        %v2765 = vadd.f32 %v2688, %v2764
        %v2766 = vpop.f32.mrb[0].mxu0
        %v2767 = vpop.f32.mrb[0].mxu0
        %v2768 = vadd.f32 %v2691, %v2767
        %v2769 = vpop.f32.mrb[0].mxu0
        %2770 = vmatprep.mubr.bf16.mxu0 0
        %2771 = vmatmul.mubr.bf16.gmra.mrb[0].mxu0 %v2712
        %v2772 = vpop.f32.mrb[0].mxu0
        %v2773 = vadd.f32 %v2696, %v2772
        %v2774 = vpop.f32.mrb[0].mxu0
        %v2775 = vpop.f32.mrb[0].mxu0
        %v2776 = vadd.f32 %v2699, %v2775
        %v2777 = vpop.f32.mrb[0].mxu0
        %2778 = vdwg.mxu0
        %v2779 = vld [vmem:[%s2578] sm:$0xff]
        %v2780 = vld [vmem:[%s2578 + $0x8] sm:$0xff]
        %v2781 = vld [vmem:[%s2578 + $0x10] sm:$0xff]
        %v2782 = vld [vmem:[%s2578 + $0x18] sm:$0xff]
        %v2783 = vld [vmem:[%s2578 + $0x20] sm:$0xff]
        %v2784 = vld [vmem:[%s2578 + $0x28] sm:$0xff]
        %v2785 = vld [vmem:[%s2578 + $0x30] sm:$0xff]
        %v2786 = vld [vmem:[%s2578 + $0x38] sm:$0xff]
        %v2787 = vpack.c.bf16 %v2780, %v2779
        %v2788 = vpack.c.bf16 %v2782, %v2781
        %v2789 = vpack.c.bf16 %v2784, %v2783
        %v2790 = vpack.c.bf16 %v2786, %v2785
        %s2791 = scalar_lea.vmem [#allocation16], 64
        %v2792 = vld [vmem:[%s2791] sm:$0xff]
        %v2793 = vld [vmem:[%s2791 + $0x8] sm:$0xff]
        %v2794 = vld [vmem:[%s2791 + $0x10] sm:$0xff]
        %v2795 = vld [vmem:[%s2791 + $0x18] sm:$0xff]
        %v2796 = vpack.c.bf16 %v2793, %v2792
        %v2797 = vpack.c.bf16 %v2795, %v2794
        %v2799 = vsel %vm1090, %v2787, 0
        %v2802 = vsel %vm1090, %v2788, 0
        %v2805 = vsel %vm1090, %v2789, 0
        %v2808 = vsel %vm1090, %v2790, 0
        %2810 = vmatprep.subr.bf16.mxu0 0
        %2811 = vmatpush1.bf16.msra.mxu0 %v2796
        %2812 = vmatprep.subr.bf16.mxu0 0
        %2813 = vmatpush1.bf16.msra.mxu0 %v2797
        %2814 = vmatprep.subr.bf16.mxu0 0
        %2815 = vmatpush1.bf16.msra.mxu0 0
        %2816 = vmatprep.subr.bf16.mxu0 0
        %2817 = vmatpush1.bf16.msra.mxu0 0
        %2818 = vmatprep.subr.bf16.mxu0 0
        %2819 = vmatpush1.bf16.msra.mxu0 0
        %2820 = vmatprep.subr.bf16.mxu0 0
        %2821 = vmatpush1.bf16.msra.mxu0 0
        %2822 = vmatprep.subr.bf16.mxu0 0
        %2823 = vmatpush1.bf16.msra.mxu0 0
        %2824 = vmatprep.subr.bf16.mxu0 0
        %2825 = vmatpush1.bf16.msra.mxu0 0
        %2826 = vmatprep.subr.bf16.mxu0 0
        %2827 = vmatpush1.bf16.msra.mxu0 0
        %2828 = vmatprep.subr.bf16.mxu0 0
        %2829 = vmatpush1.bf16.msra.mxu0 0
        %2830 = vmatprep.subr.bf16.mxu0 0
        %2831 = vmatpush1.bf16.msra.mxu0 0
        %2832 = vmatprep.subr.bf16.mxu0 0
        %2833 = vmatpush1.bf16.msra.mxu0 0
        %2834 = vmatprep.subr.bf16.mxu0 0
        %2835 = vmatpush1.bf16.msra.mxu0 0
        %2836 = vmatprep.subr.bf16.mxu0 0
        %2837 = vmatpush1.bf16.msra.mxu0 0
        %2838 = vmatprep.subr.bf16.mxu0 0
        %2839 = vmatpush1.bf16.msra.mxu0 0
        %2840 = vmatprep.subr.bf16.mxu0 0
        %2841 = vmatpush1.bf16.msra.mxu0 0
        %2842 = vmatprep.mubr.bf16.mxu0 0
        %2843 = vmatmul.mubr.bf16.gmra.mrb[0].mxu0 %v2799
        %v2844 = vpop.f32.mrb[0].mxu0
        %v2845 = vadd.f32 0.0, %v2844
        %v2846 = vpop.f32.mrb[0].mxu0
        %v2847 = vpop.f32.mrb[0].mxu0
        %v2848 = vadd.f32 0.0, %v2847
        %v2849 = vpop.f32.mrb[0].mxu0
        %2850 = vmatprep.mubr.bf16.mxu0 0
        %2851 = vmatmul.mubr.bf16.gmra.mrb[0].mxu0 %v2802
        %v2852 = vpop.f32.mrb[0].mxu0
        %v2853 = vadd.f32 0.0, %v2852
        %v2854 = vpop.f32.mrb[0].mxu0
        %v2855 = vpop.f32.mrb[0].mxu0
        %v2856 = vadd.f32 0.0, %v2855
        %v2857 = vpop.f32.mrb[0].mxu0
        %2858 = vmatprep.mubr.bf16.mxu0 0
        %2859 = vmatmul.mubr.bf16.gmra.mrb[0].mxu0 %v2805
        %v2860 = vpop.f32.mrb[0].mxu0
        %v2861 = vadd.f32 0.0, %v2860
        %v2862 = vpop.f32.mrb[0].mxu0
        %v2863 = vpop.f32.mrb[0].mxu0
        %v2864 = vadd.f32 0.0, %v2863
        %v2865 = vpop.f32.mrb[0].mxu0
        %2866 = vmatprep.mubr.bf16.mxu0 0
        %2867 = vmatmul.mubr.bf16.gmra.mrb[0].mxu0 %v2808
        %v2868 = vpop.f32.mrb[0].mxu0
        %v2869 = vadd.f32 0.0, %v2868
        %v2870 = vpop.f32.mrb[0].mxu0
        %v2871 = vpop.f32.mrb[0].mxu0
        %v2872 = vadd.f32 0.0, %v2871
        %v2873 = vpop.f32.mrb[0].mxu0
        %2874 = vdwg.mxu0
        %v2875 = vadd.f32 %v2749, %v2845
        %v2876 = vadd.f32 %v2752, %v2848
        %v2877 = vadd.f32 %v2757, %v2853
        %v2878 = vadd.f32 %v2760, %v2856
        %v2879 = vadd.f32 %v2765, %v2861
        %v2880 = vadd.f32 %v2768, %v2864
        %v2881 = vadd.f32 %v2773, %v2869
        %v2882 = vadd.f32 %v2776, %v2872
        %s2883 = scalar_lea.vmem [#allocation2], 24
        %v2884 = vld [vmem:[%s2883] sm:$0xff]
        %v2885 = vld [vmem:[%s2883 + $0x8] sm:$0xff]
        %v2886 = vld [vmem:[%s2883 + $0x10] sm:$0xff]
        %v2887 = vld [vmem:[%s2883 + $0x18] sm:$0xff]
        %v2888 = vld [vmem:[%s2883 + $0x20] sm:$0xff]
        %v2889 = vld [vmem:[%s2883 + $0x28] sm:$0xff]
        %v2890 = vld [vmem:[%s2883 + $0x30] sm:$0xff]
        %v2891 = vld [vmem:[%s2883 + $0x38] sm:$0xff]
        %v2892 = vpack.c.bf16 %v2885, %v2884
        %v2893 = vpack.c.bf16 %v2887, %v2886
        %v2894 = vpack.c.bf16 %v2889, %v2888
        %v2895 = vpack.c.bf16 %v2891, %v2890
        %s2896 = scalar_lea.vmem [#allocation16], 96
        %v2897 = vld [vmem:[%s2896] sm:$0xff]
        %v2898 = vld [vmem:[%s2896 + $0x8] sm:$0xff]
        %v2899 = vld [vmem:[%s2896 + $0x10] sm:$0xff]
        %v2900 = vld [vmem:[%s2896 + $0x18] sm:$0xff]
        %v2901 = vpack.c.bf16 %v2898, %v2897
        %v2902 = vpack.c.bf16 %v2900, %v2899
        %v2904 = vsel %vm1090, %v2892, 0
        %v2907 = vsel %vm1090, %v2893, 0
        %v2910 = vsel %vm1090, %v2894, 0
        %v2913 = vsel %vm1090, %v2895, 0
        %2915 = vmatprep.subr.bf16.mxu0 0
        %2916 = vmatpush1.bf16.msra.mxu0 %v2901
        %2917 = vmatprep.subr.bf16.mxu0 0
        %2918 = vmatpush1.bf16.msra.mxu0 %v2902
        %2919 = vmatprep.subr.bf16.mxu0 0
        %2920 = vmatpush1.bf16.msra.mxu0 0
        %2921 = vmatprep.subr.bf16.mxu0 0
        %2922 = vmatpush1.bf16.msra.mxu0 0
        %2923 = vmatprep.subr.bf16.mxu0 0
        %2924 = vmatpush1.bf16.msra.mxu0 0
        %2925 = vmatprep.subr.bf16.mxu0 0
        %2926 = vmatpush1.bf16.msra.mxu0 0
        %2927 = vmatprep.subr.bf16.mxu0 0
        %2928 = vmatpush1.bf16.msra.mxu0 0
        %2929 = vmatprep.subr.bf16.mxu0 0
        %2930 = vmatpush1.bf16.msra.mxu0 0
        %2931 = vmatprep.subr.bf16.mxu0 0
        %2932 = vmatpush1.bf16.msra.mxu0 0
        %2933 = vmatprep.subr.bf16.mxu0 0
        %2934 = vmatpush1.bf16.msra.mxu0 0
        %2935 = vmatprep.subr.bf16.mxu0 0
        %2936 = vmatpush1.bf16.msra.mxu0 0
        %2937 = vmatprep.subr.bf16.mxu0 0
        %2938 = vmatpush1.bf16.msra.mxu0 0
        %2939 = vmatprep.subr.bf16.mxu0 0
        %2940 = vmatpush1.bf16.msra.mxu0 0
        %2941 = vmatprep.subr.bf16.mxu0 0
        %2942 = vmatpush1.bf16.msra.mxu0 0
        %2943 = vmatprep.subr.bf16.mxu0 0
        %2944 = vmatpush1.bf16.msra.mxu0 0
        %2945 = vmatprep.subr.bf16.mxu0 0
        %2946 = vmatpush1.bf16.msra.mxu0 0
        %2947 = vmatprep.mubr.bf16.mxu0 0
        %2948 = vmatmul.mubr.bf16.gmra.mrb[0].mxu0 %v2904
        %v2949 = vpop.f32.mrb[0].mxu0
        %v2950 = vadd.f32 0.0, %v2949
        %v2951 = vpop.f32.mrb[0].mxu0
        %v2952 = vpop.f32.mrb[0].mxu0
        %v2953 = vadd.f32 0.0, %v2952
        %v2954 = vpop.f32.mrb[0].mxu0
        %2955 = vmatprep.mubr.bf16.mxu0 0
        %2956 = vmatmul.mubr.bf16.gmra.mrb[0].mxu0 %v2907
        %v2957 = vpop.f32.mrb[0].mxu0
        %v2958 = vadd.f32 0.0, %v2957
        %v2959 = vpop.f32.mrb[0].mxu0
        %v2960 = vpop.f32.mrb[0].mxu0
        %v2961 = vadd.f32 0.0, %v2960
        %v2962 = vpop.f32.mrb[0].mxu0
        %2963 = vmatprep.mubr.bf16.mxu0 0
        %2964 = vmatmul.mubr.bf16.gmra.mrb[0].mxu0 %v2910
        %v2965 = vpop.f32.mrb[0].mxu0
        %v2966 = vadd.f32 0.0, %v2965
        %v2967 = vpop.f32.mrb[0].mxu0
        %v2968 = vpop.f32.mrb[0].mxu0
        %v2969 = vadd.f32 0.0, %v2968
        %v2970 = vpop.f32.mrb[0].mxu0
        %2971 = vmatprep.mubr.bf16.mxu0 0
        %2972 = vmatmul.mubr.bf16.gmra.mrb[0].mxu0 %v2913
        %v2973 = vpop.f32.mrb[0].mxu0
        %v2974 = vadd.f32 0.0, %v2973
        %v2975 = vpop.f32.mrb[0].mxu0
        %v2976 = vpop.f32.mrb[0].mxu0
        %v2977 = vadd.f32 0.0, %v2976
        %v2978 = vpop.f32.mrb[0].mxu0
        %2979 = vdwg.mxu0
        %v2980 = vadd.f32 %v2875, %v2950
        %v2981 = vadd.f32 %v2876, %v2953
        %v2982 = vadd.f32 %v2877, %v2958
        %v2983 = vadd.f32 %v2878, %v2961
        %v2984 = vadd.f32 %v2879, %v2966
        %v2985 = vadd.f32 %v2880, %v2969
        %v2986 = vadd.f32 %v2881, %v2974
        %v2987 = vadd.f32 %v2882, %v2977
        %s2988 = scalar_lea.vmem [#allocation2], 32
        %v2989 = vld [vmem:[%s2988] sm:$0xff]
        %v2990 = vld [vmem:[%s2988 + $0x8] sm:$0xff]
        %v2991 = vld [vmem:[%s2988 + $0x10] sm:$0xff]
        %v2992 = vld [vmem:[%s2988 + $0x18] sm:$0xff]
        %v2993 = vld [vmem:[%s2988 + $0x20] sm:$0xff]
        %v2994 = vld [vmem:[%s2988 + $0x28] sm:$0xff]
        %v2995 = vld [vmem:[%s2988 + $0x30] sm:$0xff]
        %v2996 = vld [vmem:[%s2988 + $0x38] sm:$0xff]
        %v2997 = vpack.c.bf16 %v2990, %v2989
        %v2998 = vpack.c.bf16 %v2992, %v2991
        %v2999 = vpack.c.bf16 %v2994, %v2993
        %v3000 = vpack.c.bf16 %v2996, %v2995
        %s3001 = scalar_lea.vmem [#allocation16], 128
        %v3002 = vld [vmem:[%s3001] sm:$0xff]
        %v3003 = vld [vmem:[%s3001 + $0x8] sm:$0xff]
        %v3004 = vld [vmem:[%s3001 + $0x10] sm:$0xff]
        %v3005 = vld [vmem:[%s3001 + $0x18] sm:$0xff]
        %v3006 = vpack.c.bf16 %v3003, %v3002
        %v3007 = vpack.c.bf16 %v3005, %v3004
        %v3009 = vsel %vm1090, %v2997, 0
        %v3012 = vsel %vm1090, %v2998, 0
        %v3015 = vsel %vm1090, %v2999, 0
        %v3018 = vsel %vm1090, %v3000, 0
        %3020 = vmatprep.subr.bf16.mxu0 0
        %3021 = vmatpush1.bf16.msra.mxu0 %v3006
        %3022 = vmatprep.subr.bf16.mxu0 0
        %3023 = vmatpush1.bf16.msra.mxu0 %v3007
        %3024 = vmatprep.subr.bf16.mxu0 0
        %3025 = vmatpush1.bf16.msra.mxu0 0
        %3026 = vmatprep.subr.bf16.mxu0 0
        %3027 = vmatpush1.bf16.msra.mxu0 0
        %3028 = vmatprep.subr.bf16.mxu0 0
        %3029 = vmatpush1.bf16.msra.mxu0 0
        %3030 = vmatprep.subr.bf16.mxu0 0
        %3031 = vmatpush1.bf16.msra.mxu0 0
        %3032 = vmatprep.subr.bf16.mxu0 0
        %3033 = vmatpush1.bf16.msra.mxu0 0
        %3034 = vmatprep.subr.bf16.mxu0 0
        %3035 = vmatpush1.bf16.msra.mxu0 0
        %3036 = vmatprep.subr.bf16.mxu0 0
        %3037 = vmatpush1.bf16.msra.mxu0 0
        %3038 = vmatprep.subr.bf16.mxu0 0
        %3039 = vmatpush1.bf16.msra.mxu0 0
        %3040 = vmatprep.subr.bf16.mxu0 0
        %3041 = vmatpush1.bf16.msra.mxu0 0
        %3042 = vmatprep.subr.bf16.mxu0 0
        %3043 = vmatpush1.bf16.msra.mxu0 0
        %3044 = vmatprep.subr.bf16.mxu0 0
        %3045 = vmatpush1.bf16.msra.mxu0 0
        %3046 = vmatprep.subr.bf16.mxu0 0
        %3047 = vmatpush1.bf16.msra.mxu0 0
        %3048 = vmatprep.subr.bf16.mxu0 0
        %3049 = vmatpush1.bf16.msra.mxu0 0
        %3050 = vmatprep.subr.bf16.mxu0 0
        %3051 = vmatpush1.bf16.msra.mxu0 0
        %3052 = vmatprep.mubr.bf16.mxu0 0
        %3053 = vmatmul.mubr.bf16.gmra.mrb[0].mxu0 %v3009
        %v3054 = vpop.f32.mrb[0].mxu0
        %v3055 = vadd.f32 0.0, %v3054
        %v3056 = vpop.f32.mrb[0].mxu0
        %v3057 = vpop.f32.mrb[0].mxu0
        %v3058 = vadd.f32 0.0, %v3057
        %v3059 = vpop.f32.mrb[0].mxu0
        %3060 = vmatprep.mubr.bf16.mxu0 0
        %3061 = vmatmul.mubr.bf16.gmra.mrb[0].mxu0 %v3012
        %v3062 = vpop.f32.mrb[0].mxu0
        %v3063 = vadd.f32 0.0, %v3062
        %v3064 = vpop.f32.mrb[0].mxu0
        %v3065 = vpop.f32.mrb[0].mxu0
        %v3066 = vadd.f32 0.0, %v3065
        %v3067 = vpop.f32.mrb[0].mxu0
        %3068 = vmatprep.mubr.bf16.mxu0 0
        %3069 = vmatmul.mubr.bf16.gmra.mrb[0].mxu0 %v3015
        %v3070 = vpop.f32.mrb[0].mxu0
        %v3071 = vadd.f32 0.0, %v3070
        %v3072 = vpop.f32.mrb[0].mxu0
        %v3073 = vpop.f32.mrb[0].mxu0
        %v3074 = vadd.f32 0.0, %v3073
        %v3075 = vpop.f32.mrb[0].mxu0
        %3076 = vmatprep.mubr.bf16.mxu0 0
        %3077 = vmatmul.mubr.bf16.gmra.mrb[0].mxu0 %v3018
        %v3078 = vpop.f32.mrb[0].mxu0
        %v3079 = vadd.f32 0.0, %v3078
        %v3080 = vpop.f32.mrb[0].mxu0
        %v3081 = vpop.f32.mrb[0].mxu0
        %v3082 = vadd.f32 0.0, %v3081
        %v3083 = vpop.f32.mrb[0].mxu0
        %3084 = vdwg.mxu0
        %v3085 = vadd.f32 %v2980, %v3055
        %v3086 = vadd.f32 %v2981, %v3058
        %v3087 = vadd.f32 %v2982, %v3063
        %v3088 = vadd.f32 %v2983, %v3066
        %v3089 = vadd.f32 %v2984, %v3071
        %v3090 = vadd.f32 %v2985, %v3074
        %v3091 = vadd.f32 %v2986, %v3079
        %v3092 = vadd.f32 %v2987, %v3082
        %v3093 = vld [vmem:[%s16] sm:$0x1]
        %v3095 = vlaneseq
        %v3096 = vshrl.u32 %v3095, 7
        %v3097 = vsub.s32 0, %v3096
        %v3098 = vrot.slane %v3093, %v3097
        %v3100 = vadd.f32 %v3085, %v3098
        %v3101 = vadd.f32 %v3086, %v3098
        %v3102 = vadd.f32 %v3087, %v3098
        %v3103 = vadd.f32 %v3088, %v3098
        %v3104 = vadd.f32 %v3089, %v3098
        %v3105 = vadd.f32 %v3090, %v3098
        %v3106 = vadd.f32 %v3091, %v3098
        %v3107 = vadd.f32 %v3092, %v3098
        %v3108 = vmax.f32 %v3100, 0.0
        %v3109 = vmax.f32 %v3101, 0.0
        %v3110 = vmax.f32 %v3102, 0.0
        %v3111 = vmax.f32 %v3103, 0.0
        %v3112 = vmax.f32 %v3104, 0.0
        %v3113 = vmax.f32 %v3105, 0.0
        %v3114 = vmax.f32 %v3106, 0.0
        %v3115 = vmax.f32 %v3107, 0.0
        %v3116 = vld [vmem:[%s17] sm:$0x1]
        %v3118 = vlaneseq
        %v3119 = vshrl.u32 %v3118, 7
        %v3120 = vsub.s32 0, %v3119
        %v3121 = vrot.slane %v3116, %v3120
        %v3123 = vmul.f32 %v3108, %v3121
        %v3124 = vmul.f32 %v3109, %v3121
        %v3125 = vmul.f32 %v3110, %v3121
        %v3126 = vmul.f32 %v3111, %v3121
        %v3127 = vmul.f32 %v3112, %v3121
        %v3128 = vmul.f32 %v3113, %v3121
        %v3129 = vmul.f32 %v3114, %v3121
        %v3130 = vmul.f32 %v3115, %v3121
        %v3131 = vld [vmem:[%s18] sm:$0x1]
        %v3133 = vlaneseq
        %v3134 = vshrl.u32 %v3133, 7
        %v3135 = vsub.s32 0, %v3134
        %v3136 = vrot.slane %v3131, %v3135
        %v3138 = vadd.f32 %v3123, %v3136
        %v3139 = vadd.f32 %v3124, %v3136
        %v3140 = vadd.f32 %v3125, %v3136
        %v3141 = vadd.f32 %v3126, %v3136
        %v3142 = vadd.f32 %v3127, %v3136
        %v3143 = vadd.f32 %v3128, %v3136
        %v3144 = vadd.f32 %v3129, %v3136
        %v3145 = vadd.f32 %v3130, %v3136
        %3146 = vst.msk [vmem:[%s2578] sm:$0xff] %vm1090, %v3138
        %3147 = vst.msk [vmem:[%s2578 + $0x8] sm:$0xff] %vm1090, %v3139
        %3148 = vst.msk [vmem:[%s2578 + $0x10] sm:$0xff] %vm1090, %v3140
        %3149 = vst.msk [vmem:[%s2578 + $0x18] sm:$0xff] %vm1090, %v3141
        %3150 = vst.msk [vmem:[%s2578 + $0x20] sm:$0xff] %vm1090, %v3142
        %3151 = vst.msk [vmem:[%s2578 + $0x28] sm:$0xff] %vm1090, %v3143
        %3152 = vst.msk [vmem:[%s2578 + $0x30] sm:$0xff] %vm1090, %v3144
        %3153 = vst.msk [vmem:[%s2578 + $0x38] sm:$0xff] %vm1090, %v3145
        %v3154 = vld [vmem:[#allocation2] sm:$0xff]
        %v3155 = vld [vmem:[#allocation2 + $0x8] sm:$0xff]
        %v3156 = vld [vmem:[#allocation2 + $0x10] sm:$0xff]
        %v3157 = vld [vmem:[#allocation2 + $0x18] sm:$0xff]
        %v3158 = vld [vmem:[#allocation2 + $0x20] sm:$0xff]
        %v3159 = vld [vmem:[#allocation2 + $0x28] sm:$0xff]
        %v3160 = vld [vmem:[#allocation2 + $0x30] sm:$0xff]
        %v3161 = vld [vmem:[#allocation2 + $0x38] sm:$0xff]
        %v3162 = vpack.c.bf16 %v3155, %v3154
        %v3163 = vpack.c.bf16 %v3157, %v3156
        %v3164 = vpack.c.bf16 %v3159, %v3158
        %v3165 = vpack.c.bf16 %v3161, %v3160
        %v3166 = vld [vmem:[%s19] sm:$0xff]
        %v3167 = vld [vmem:[%s19 + $0x8] sm:$0xff]
        %v3168 = vld [vmem:[%s19 + $0x10] sm:$0xff]
        %v3169 = vld [vmem:[%s19 + $0x18] sm:$0xff]
        %v3170 = vpack.c.bf16 %v3167, %v3166
        %v3171 = vpack.c.bf16 %v3169, %v3168
        %v3172 = vld [vmem:[%s2605] sm:$0xff]
        %v3173 = vld [vmem:[%s2605 + $0x8] sm:$0xff]
        %v3174 = vld [vmem:[%s2605 + $0x10] sm:$0xff]
        %v3175 = vld [vmem:[%s2605 + $0x18] sm:$0xff]
        %v3176 = vld [vmem:[%s2605 + $0x20] sm:$0xff]
        %v3177 = vld [vmem:[%s2605 + $0x28] sm:$0xff]
        %v3178 = vld [vmem:[%s2605 + $0x30] sm:$0xff]
        %v3179 = vld [vmem:[%s2605 + $0x38] sm:$0xff]
        %v3180 = vpack.c.bf16 %v3173, %v3172
        %v3181 = vpack.c.bf16 %v3175, %v3174
        %v3182 = vpack.c.bf16 %v3177, %v3176
        %v3183 = vpack.c.bf16 %v3179, %v3178
        %s3184 = scalar_lea.vmem %s19, 32
        %v3185 = vld [vmem:[%s3184] sm:$0xff]
        %v3186 = vld [vmem:[%s3184 + $0x8] sm:$0xff]
        %v3187 = vld [vmem:[%s3184 + $0x10] sm:$0xff]
        %v3188 = vld [vmem:[%s3184 + $0x18] sm:$0xff]
        %v3189 = vpack.c.bf16 %v3186, %v3185
        %v3190 = vpack.c.bf16 %v3188, %v3187
        %v3192 = vsel %vm1090, %v3180, 0
        %v3195 = vsel %vm1090, %v3181, 0
        %v3198 = vsel %vm1090, %v3182, 0
        %v3201 = vsel %vm1090, %v3183, 0
        %3203 = vmatprep.subr.bf16.mxu0 0
        %3204 = vmatpush1.bf16.msra.mxu0 %v3189
        %3205 = vmatprep.subr.bf16.mxu0 0
        %3206 = vmatpush1.bf16.msra.mxu0 %v3190
        %3207 = vmatprep.subr.bf16.mxu0 0
        %3208 = vmatpush1.bf16.msra.mxu0 0
        %3209 = vmatprep.subr.bf16.mxu0 0
        %3210 = vmatpush1.bf16.msra.mxu0 0
        %3211 = vmatprep.subr.bf16.mxu0 0
        %3212 = vmatpush1.bf16.msra.mxu0 0
        %3213 = vmatprep.subr.bf16.mxu0 0
        %3214 = vmatpush1.bf16.msra.mxu0 0
        %3215 = vmatprep.subr.bf16.mxu0 0
        %3216 = vmatpush1.bf16.msra.mxu0 0
        %3217 = vmatprep.subr.bf16.mxu0 0
        %3218 = vmatpush1.bf16.msra.mxu0 0
        %3219 = vmatprep.subr.bf16.mxu0 0
        %3220 = vmatpush1.bf16.msra.mxu0 0
        %3221 = vmatprep.subr.bf16.mxu0 0
        %3222 = vmatpush1.bf16.msra.mxu0 0
        %3223 = vmatprep.subr.bf16.mxu0 0
        %3224 = vmatpush1.bf16.msra.mxu0 0
        %3225 = vmatprep.subr.bf16.mxu0 0
        %3226 = vmatpush1.bf16.msra.mxu0 0
        %3227 = vmatprep.subr.bf16.mxu0 0
        %3228 = vmatpush1.bf16.msra.mxu0 0
        %3229 = vmatprep.subr.bf16.mxu0 0
        %3230 = vmatpush1.bf16.msra.mxu0 0
        %3231 = vmatprep.subr.bf16.mxu0 0
        %3232 = vmatpush1.bf16.msra.mxu0 0
        %3233 = vmatprep.subr.bf16.mxu0 0
        %3234 = vmatpush1.bf16.msra.mxu0 0
        %3235 = vmatprep.mubr.bf16.mxu0 0
        %3236 = vmatmul.mubr.bf16.gmra.mrb[0].mxu0 %v3192
        %v3237 = vpop.f32.mrb[0].mxu0
        %v3238 = vadd.f32 0.0, %v3237
        %v3239 = vpop.f32.mrb[0].mxu0
        %v3240 = vpop.f32.mrb[0].mxu0
        %v3241 = vadd.f32 0.0, %v3240
        %v3242 = vpop.f32.mrb[0].mxu0
        %3243 = vmatprep.mubr.bf16.mxu0 0
        %3244 = vmatmul.mubr.bf16.gmra.mrb[0].mxu0 %v3195
        %v3245 = vpop.f32.mrb[0].mxu0
        %v3246 = vadd.f32 0.0, %v3245
        %v3247 = vpop.f32.mrb[0].mxu0
        %v3248 = vpop.f32.mrb[0].mxu0
        %v3249 = vadd.f32 0.0, %v3248
        %v3250 = vpop.f32.mrb[0].mxu0
        %3251 = vmatprep.mubr.bf16.mxu0 0
        %3252 = vmatmul.mubr.bf16.gmra.mrb[0].mxu0 %v3198
        %v3253 = vpop.f32.mrb[0].mxu0
        %v3254 = vadd.f32 0.0, %v3253
        %v3255 = vpop.f32.mrb[0].mxu0
        %v3256 = vpop.f32.mrb[0].mxu0
        %v3257 = vadd.f32 0.0, %v3256
        %v3258 = vpop.f32.mrb[0].mxu0
        %3259 = vmatprep.mubr.bf16.mxu0 0
        %3260 = vmatmul.mubr.bf16.gmra.mrb[0].mxu0 %v3201
        %v3261 = vpop.f32.mrb[0].mxu0
        %v3262 = vadd.f32 0.0, %v3261
        %v3263 = vpop.f32.mrb[0].mxu0
        %v3264 = vpop.f32.mrb[0].mxu0
        %v3265 = vadd.f32 0.0, %v3264
        %v3266 = vpop.f32.mrb[0].mxu0
        %3267 = vdwg.mxu0
        %v3269 = vsel %vm1090, %v3162, 0
        %v3272 = vsel %vm1090, %v3163, 0
        %v3275 = vsel %vm1090, %v3164, 0
        %v3278 = vsel %vm1090, %v3165, 0
        %3280 = vmatprep.subr.bf16.mxu0 0
        %3281 = vmatpush1.bf16.msra.mxu0 %v3170
        %3282 = vmatprep.subr.bf16.mxu0 0
        %3283 = vmatpush1.bf16.msra.mxu0 %v3171
        %3284 = vmatprep.subr.bf16.mxu0 0
        %3285 = vmatpush1.bf16.msra.mxu0 0
        %3286 = vmatprep.subr.bf16.mxu0 0
        %3287 = vmatpush1.bf16.msra.mxu0 0
        %3288 = vmatprep.subr.bf16.mxu0 0
        %3289 = vmatpush1.bf16.msra.mxu0 0
        %3290 = vmatprep.subr.bf16.mxu0 0
        %3291 = vmatpush1.bf16.msra.mxu0 0
        %3292 = vmatprep.subr.bf16.mxu0 0
        %3293 = vmatpush1.bf16.msra.mxu0 0
        %3294 = vmatprep.subr.bf16.mxu0 0
        %3295 = vmatpush1.bf16.msra.mxu0 0
        %3296 = vmatprep.subr.bf16.mxu0 0
        %3297 = vmatpush1.bf16.msra.mxu0 0
        %3298 = vmatprep.subr.bf16.mxu0 0
        %3299 = vmatpush1.bf16.msra.mxu0 0
        %3300 = vmatprep.subr.bf16.mxu0 0
        %3301 = vmatpush1.bf16.msra.mxu0 0
        %3302 = vmatprep.subr.bf16.mxu0 0
        %3303 = vmatpush1.bf16.msra.mxu0 0
        %3304 = vmatprep.subr.bf16.mxu0 0
        %3305 = vmatpush1.bf16.msra.mxu0 0
        %3306 = vmatprep.subr.bf16.mxu0 0
        %3307 = vmatpush1.bf16.msra.mxu0 0
        %3308 = vmatprep.subr.bf16.mxu0 0
        %3309 = vmatpush1.bf16.msra.mxu0 0
        %3310 = vmatprep.subr.bf16.mxu0 0
        %3311 = vmatpush1.bf16.msra.mxu0 0
        %3312 = vmatprep.mubr.bf16.mxu0 0
        %3313 = vmatmul.mubr.bf16.gmra.mrb[0].mxu0 %v3269
        %v3314 = vpop.f32.mrb[0].mxu0
        %v3315 = vadd.f32 %v3238, %v3314
        %v3316 = vpop.f32.mrb[0].mxu0
        %v3317 = vpop.f32.mrb[0].mxu0
        %v3318 = vadd.f32 %v3241, %v3317
        %v3319 = vpop.f32.mrb[0].mxu0
        %3320 = vmatprep.mubr.bf16.mxu0 0
        %3321 = vmatmul.mubr.bf16.gmra.mrb[0].mxu0 %v3272
        %v3322 = vpop.f32.mrb[0].mxu0
        %v3323 = vadd.f32 %v3246, %v3322
        %v3324 = vpop.f32.mrb[0].mxu0
        %v3325 = vpop.f32.mrb[0].mxu0
        %v3326 = vadd.f32 %v3249, %v3325
        %v3327 = vpop.f32.mrb[0].mxu0
        %3328 = vmatprep.mubr.bf16.mxu0 0
        %3329 = vmatmul.mubr.bf16.gmra.mrb[0].mxu0 %v3275
        %v3330 = vpop.f32.mrb[0].mxu0
        %v3331 = vadd.f32 %v3254, %v3330
        %v3332 = vpop.f32.mrb[0].mxu0
        %v3333 = vpop.f32.mrb[0].mxu0
        %v3334 = vadd.f32 %v3257, %v3333
        %v3335 = vpop.f32.mrb[0].mxu0
        %3336 = vmatprep.mubr.bf16.mxu0 0
        %3337 = vmatmul.mubr.bf16.gmra.mrb[0].mxu0 %v3278
        %v3338 = vpop.f32.mrb[0].mxu0
        %v3339 = vadd.f32 %v3262, %v3338
        %v3340 = vpop.f32.mrb[0].mxu0
        %v3341 = vpop.f32.mrb[0].mxu0
        %v3342 = vadd.f32 %v3265, %v3341
        %v3343 = vpop.f32.mrb[0].mxu0
        %3344 = vdwg.mxu0
        %v3345 = vld [vmem:[%s2578] sm:$0xff]
        %v3346 = vld [vmem:[%s2578 + $0x8] sm:$0xff]
        %v3347 = vld [vmem:[%s2578 + $0x10] sm:$0xff]
        %v3348 = vld [vmem:[%s2578 + $0x18] sm:$0xff]
        %v3349 = vld [vmem:[%s2578 + $0x20] sm:$0xff]
        %v3350 = vld [vmem:[%s2578 + $0x28] sm:$0xff]
        %v3351 = vld [vmem:[%s2578 + $0x30] sm:$0xff]
        %v3352 = vld [vmem:[%s2578 + $0x38] sm:$0xff]
        %v3353 = vpack.c.bf16 %v3346, %v3345
        %v3354 = vpack.c.bf16 %v3348, %v3347
        %v3355 = vpack.c.bf16 %v3350, %v3349
        %v3356 = vpack.c.bf16 %v3352, %v3351
        %s3357 = scalar_lea.vmem %s19, 64
        %v3358 = vld [vmem:[%s3357] sm:$0xff]
        %v3359 = vld [vmem:[%s3357 + $0x8] sm:$0xff]
        %v3360 = vld [vmem:[%s3357 + $0x10] sm:$0xff]
        %v3361 = vld [vmem:[%s3357 + $0x18] sm:$0xff]
        %v3362 = vpack.c.bf16 %v3359, %v3358
        %v3363 = vpack.c.bf16 %v3361, %v3360
        %v3365 = vsel %vm1090, %v3353, 0
        %v3368 = vsel %vm1090, %v3354, 0
        %v3371 = vsel %vm1090, %v3355, 0
        %v3374 = vsel %vm1090, %v3356, 0
        %3376 = vmatprep.subr.bf16.mxu0 0
        %3377 = vmatpush1.bf16.msra.mxu0 %v3362
        %3378 = vmatprep.subr.bf16.mxu0 0
        %3379 = vmatpush1.bf16.msra.mxu0 %v3363
        %3380 = vmatprep.subr.bf16.mxu0 0
        %3381 = vmatpush1.bf16.msra.mxu0 0
        %3382 = vmatprep.subr.bf16.mxu0 0
        %3383 = vmatpush1.bf16.msra.mxu0 0
        %3384 = vmatprep.subr.bf16.mxu0 0
        %3385 = vmatpush1.bf16.msra.mxu0 0
        %3386 = vmatprep.subr.bf16.mxu0 0
        %3387 = vmatpush1.bf16.msra.mxu0 0
        %3388 = vmatprep.subr.bf16.mxu0 0
        %3389 = vmatpush1.bf16.msra.mxu0 0
        %3390 = vmatprep.subr.bf16.mxu0 0
        %3391 = vmatpush1.bf16.msra.mxu0 0
        %3392 = vmatprep.subr.bf16.mxu0 0
        %3393 = vmatpush1.bf16.msra.mxu0 0
        %3394 = vmatprep.subr.bf16.mxu0 0
        %3395 = vmatpush1.bf16.msra.mxu0 0
        %3396 = vmatprep.subr.bf16.mxu0 0
        %3397 = vmatpush1.bf16.msra.mxu0 0
        %3398 = vmatprep.subr.bf16.mxu0 0
        %3399 = vmatpush1.bf16.msra.mxu0 0
        %3400 = vmatprep.subr.bf16.mxu0 0
        %3401 = vmatpush1.bf16.msra.mxu0 0
        %3402 = vmatprep.subr.bf16.mxu0 0
        %3403 = vmatpush1.bf16.msra.mxu0 0
        %3404 = vmatprep.subr.bf16.mxu0 0
        %3405 = vmatpush1.bf16.msra.mxu0 0
        %3406 = vmatprep.subr.bf16.mxu0 0
        %3407 = vmatpush1.bf16.msra.mxu0 0
        %3408 = vmatprep.mubr.bf16.mxu0 0
        %3409 = vmatmul.mubr.bf16.gmra.mrb[0].mxu0 %v3365
        %v3410 = vpop.f32.mrb[0].mxu0
        %v3411 = vadd.f32 0.0, %v3410
        %v3412 = vpop.f32.mrb[0].mxu0
        %v3413 = vpop.f32.mrb[0].mxu0
        %v3414 = vadd.f32 0.0, %v3413
        %v3415 = vpop.f32.mrb[0].mxu0
        %3416 = vmatprep.mubr.bf16.mxu0 0
        %3417 = vmatmul.mubr.bf16.gmra.mrb[0].mxu0 %v3368
        %v3418 = vpop.f32.mrb[0].mxu0
        %v3419 = vadd.f32 0.0, %v3418
        %v3420 = vpop.f32.mrb[0].mxu0
        %v3421 = vpop.f32.mrb[0].mxu0
        %v3422 = vadd.f32 0.0, %v3421
        %v3423 = vpop.f32.mrb[0].mxu0
        %3424 = vmatprep.mubr.bf16.mxu0 0
        %3425 = vmatmul.mubr.bf16.gmra.mrb[0].mxu0 %v3371
        %v3426 = vpop.f32.mrb[0].mxu0
        %v3427 = vadd.f32 0.0, %v3426
        %v3428 = vpop.f32.mrb[0].mxu0
        %v3429 = vpop.f32.mrb[0].mxu0
        %v3430 = vadd.f32 0.0, %v3429
        %v3431 = vpop.f32.mrb[0].mxu0
        %3432 = vmatprep.mubr.bf16.mxu0 0
        %3433 = vmatmul.mubr.bf16.gmra.mrb[0].mxu0 %v3374
        %v3434 = vpop.f32.mrb[0].mxu0
        %v3435 = vadd.f32 0.0, %v3434
        %v3436 = vpop.f32.mrb[0].mxu0
        %v3437 = vpop.f32.mrb[0].mxu0
        %v3438 = vadd.f32 0.0, %v3437
        %v3439 = vpop.f32.mrb[0].mxu0
        %3440 = vdwg.mxu0
        %v3441 = vadd.f32 %v3315, %v3411
        %v3442 = vadd.f32 %v3318, %v3414
        %v3443 = vadd.f32 %v3323, %v3419
        %v3444 = vadd.f32 %v3326, %v3422
        %v3445 = vadd.f32 %v3331, %v3427
        %v3446 = vadd.f32 %v3334, %v3430
        %v3447 = vadd.f32 %v3339, %v3435
        %v3448 = vadd.f32 %v3342, %v3438
        %v3449 = vld [vmem:[%s2883] sm:$0xff]
        %v3450 = vld [vmem:[%s2883 + $0x8] sm:$0xff]
        %v3451 = vld [vmem:[%s2883 + $0x10] sm:$0xff]
        %v3452 = vld [vmem:[%s2883 + $0x18] sm:$0xff]
        %v3453 = vld [vmem:[%s2883 + $0x20] sm:$0xff]
        %v3454 = vld [vmem:[%s2883 + $0x28] sm:$0xff]
        %v3455 = vld [vmem:[%s2883 + $0x30] sm:$0xff]
        %v3456 = vld [vmem:[%s2883 + $0x38] sm:$0xff]
        %v3457 = vpack.c.bf16 %v3450, %v3449
        %v3458 = vpack.c.bf16 %v3452, %v3451
        %v3459 = vpack.c.bf16 %v3454, %v3453
        %v3460 = vpack.c.bf16 %v3456, %v3455
        %s3461 = scalar_lea.vmem %s19, 96
        %v3462 = vld [vmem:[%s3461] sm:$0xff]
        %v3463 = vld [vmem:[%s3461 + $0x8] sm:$0xff]
        %v3464 = vld [vmem:[%s3461 + $0x10] sm:$0xff]
        %v3465 = vld [vmem:[%s3461 + $0x18] sm:$0xff]
        %v3466 = vpack.c.bf16 %v3463, %v3462
        %v3467 = vpack.c.bf16 %v3465, %v3464
        %v3469 = vsel %vm1090, %v3457, 0
        %v3472 = vsel %vm1090, %v3458, 0
        %v3475 = vsel %vm1090, %v3459, 0
        %v3478 = vsel %vm1090, %v3460, 0
        %3480 = vmatprep.subr.bf16.mxu0 0
        %3481 = vmatpush1.bf16.msra.mxu0 %v3466
        %3482 = vmatprep.subr.bf16.mxu0 0
        %3483 = vmatpush1.bf16.msra.mxu0 %v3467
        %3484 = vmatprep.subr.bf16.mxu0 0
        %3485 = vmatpush1.bf16.msra.mxu0 0
        %3486 = vmatprep.subr.bf16.mxu0 0
        %3487 = vmatpush1.bf16.msra.mxu0 0
        %3488 = vmatprep.subr.bf16.mxu0 0
        %3489 = vmatpush1.bf16.msra.mxu0 0
        %3490 = vmatprep.subr.bf16.mxu0 0
        %3491 = vmatpush1.bf16.msra.mxu0 0
        %3492 = vmatprep.subr.bf16.mxu0 0
        %3493 = vmatpush1.bf16.msra.mxu0 0
        %3494 = vmatprep.subr.bf16.mxu0 0
        %3495 = vmatpush1.bf16.msra.mxu0 0
        %3496 = vmatprep.subr.bf16.mxu0 0
        %3497 = vmatpush1.bf16.msra.mxu0 0
        %3498 = vmatprep.subr.bf16.mxu0 0
        %3499 = vmatpush1.bf16.msra.mxu0 0
        %3500 = vmatprep.subr.bf16.mxu0 0
        %3501 = vmatpush1.bf16.msra.mxu0 0
        %3502 = vmatprep.subr.bf16.mxu0 0
        %3503 = vmatpush1.bf16.msra.mxu0 0
        %3504 = vmatprep.subr.bf16.mxu0 0
        %3505 = vmatpush1.bf16.msra.mxu0 0
        %3506 = vmatprep.subr.bf16.mxu0 0
        %3507 = vmatpush1.bf16.msra.mxu0 0
        %3508 = vmatprep.subr.bf16.mxu0 0
        %3509 = vmatpush1.bf16.msra.mxu0 0
        %3510 = vmatprep.subr.bf16.mxu0 0
        %3511 = vmatpush1.bf16.msra.mxu0 0
        %3512 = vmatprep.mubr.bf16.mxu0 0
        %3513 = vmatmul.mubr.bf16.gmra.mrb[0].mxu0 %v3469
        %v3514 = vpop.f32.mrb[0].mxu0
        %v3515 = vadd.f32 0.0, %v3514
        %v3516 = vpop.f32.mrb[0].mxu0
        %v3517 = vpop.f32.mrb[0].mxu0
        %v3518 = vadd.f32 0.0, %v3517
        %v3519 = vpop.f32.mrb[0].mxu0
        %3520 = vmatprep.mubr.bf16.mxu0 0
        %3521 = vmatmul.mubr.bf16.gmra.mrb[0].mxu0 %v3472
        %v3522 = vpop.f32.mrb[0].mxu0
        %v3523 = vadd.f32 0.0, %v3522
        %v3524 = vpop.f32.mrb[0].mxu0
        %v3525 = vpop.f32.mrb[0].mxu0
        %v3526 = vadd.f32 0.0, %v3525
        %v3527 = vpop.f32.mrb[0].mxu0
        %3528 = vmatprep.mubr.bf16.mxu0 0
        %3529 = vmatmul.mubr.bf16.gmra.mrb[0].mxu0 %v3475
        %v3530 = vpop.f32.mrb[0].mxu0
        %v3531 = vadd.f32 0.0, %v3530
        %v3532 = vpop.f32.mrb[0].mxu0
        %v3533 = vpop.f32.mrb[0].mxu0
        %v3534 = vadd.f32 0.0, %v3533
        %v3535 = vpop.f32.mrb[0].mxu0
        %3536 = vmatprep.mubr.bf16.mxu0 0
        %3537 = vmatmul.mubr.bf16.gmra.mrb[0].mxu0 %v3478
        %v3538 = vpop.f32.mrb[0].mxu0
        %v3539 = vadd.f32 0.0, %v3538
        %v3540 = vpop.f32.mrb[0].mxu0
        %v3541 = vpop.f32.mrb[0].mxu0
        %v3542 = vadd.f32 0.0, %v3541
        %v3543 = vpop.f32.mrb[0].mxu0
        %3544 = vdwg.mxu0
        %v3545 = vadd.f32 %v3441, %v3515
        %v3546 = vadd.f32 %v3442, %v3518
        %v3547 = vadd.f32 %v3443, %v3523
        %v3548 = vadd.f32 %v3444, %v3526
        %v3549 = vadd.f32 %v3445, %v3531
        %v3550 = vadd.f32 %v3446, %v3534
        %v3551 = vadd.f32 %v3447, %v3539
        %v3552 = vadd.f32 %v3448, %v3542
        %v3553 = vld [vmem:[%s2988] sm:$0xff]
        %v3554 = vld [vmem:[%s2988 + $0x8] sm:$0xff]
        %v3555 = vld [vmem:[%s2988 + $0x10] sm:$0xff]
        %v3556 = vld [vmem:[%s2988 + $0x18] sm:$0xff]
        %v3557 = vld [vmem:[%s2988 + $0x20] sm:$0xff]
        %v3558 = vld [vmem:[%s2988 + $0x28] sm:$0xff]
        %v3559 = vld [vmem:[%s2988 + $0x30] sm:$0xff]
        %v3560 = vld [vmem:[%s2988 + $0x38] sm:$0xff]
        %v3561 = vpack.c.bf16 %v3554, %v3553
        %v3562 = vpack.c.bf16 %v3556, %v3555
        %v3563 = vpack.c.bf16 %v3558, %v3557
        %v3564 = vpack.c.bf16 %v3560, %v3559
        %s3565 = scalar_lea.vmem %s19, 128
        %v3566 = vld [vmem:[%s3565] sm:$0xff]
        %v3567 = vld [vmem:[%s3565 + $0x8] sm:$0xff]
        %v3568 = vld [vmem:[%s3565 + $0x10] sm:$0xff]
        %v3569 = vld [vmem:[%s3565 + $0x18] sm:$0xff]
        %v3570 = vpack.c.bf16 %v3567, %v3566
        %v3571 = vpack.c.bf16 %v3569, %v3568
        %v3573 = vsel %vm1090, %v3561, 0
        %v3576 = vsel %vm1090, %v3562, 0
        %v3579 = vsel %vm1090, %v3563, 0
        %v3582 = vsel %vm1090, %v3564, 0
        %3584 = vmatprep.subr.bf16.mxu0 0
        %3585 = vmatpush1.bf16.msra.mxu0 %v3570
        %3586 = vmatprep.subr.bf16.mxu0 0
        %3587 = vmatpush1.bf16.msra.mxu0 %v3571
        %3588 = vmatprep.subr.bf16.mxu0 0
        %3589 = vmatpush1.bf16.msra.mxu0 0
        %3590 = vmatprep.subr.bf16.mxu0 0
        %3591 = vmatpush1.bf16.msra.mxu0 0
        %3592 = vmatprep.subr.bf16.mxu0 0
        %3593 = vmatpush1.bf16.msra.mxu0 0
        %3594 = vmatprep.subr.bf16.mxu0 0
        %3595 = vmatpush1.bf16.msra.mxu0 0
        %3596 = vmatprep.subr.bf16.mxu0 0
        %3597 = vmatpush1.bf16.msra.mxu0 0
        %3598 = vmatprep.subr.bf16.mxu0 0
        %3599 = vmatpush1.bf16.msra.mxu0 0
        %3600 = vmatprep.subr.bf16.mxu0 0
        %3601 = vmatpush1.bf16.msra.mxu0 0
        %3602 = vmatprep.subr.bf16.mxu0 0
        %3603 = vmatpush1.bf16.msra.mxu0 0
        %3604 = vmatprep.subr.bf16.mxu0 0
        %3605 = vmatpush1.bf16.msra.mxu0 0
        %3606 = vmatprep.subr.bf16.mxu0 0
        %3607 = vmatpush1.bf16.msra.mxu0 0
        %3608 = vmatprep.subr.bf16.mxu0 0
        %3609 = vmatpush1.bf16.msra.mxu0 0
        %3610 = vmatprep.subr.bf16.mxu0 0
        %3611 = vmatpush1.bf16.msra.mxu0 0
        %3612 = vmatprep.subr.bf16.mxu0 0
        %3613 = vmatpush1.bf16.msra.mxu0 0
        %3614 = vmatprep.subr.bf16.mxu0 0
        %3615 = vmatpush1.bf16.msra.mxu0 0
        %3616 = vmatprep.mubr.bf16.mxu0 0
        %3617 = vmatmul.mubr.bf16.gmra.mrb[0].mxu0 %v3573
        %v3618 = vpop.f32.mrb[0].mxu0
        %v3619 = vadd.f32 0.0, %v3618
        %v3620 = vpop.f32.mrb[0].mxu0
        %v3621 = vpop.f32.mrb[0].mxu0
        %v3622 = vadd.f32 0.0, %v3621
        %v3623 = vpop.f32.mrb[0].mxu0
        %3624 = vmatprep.mubr.bf16.mxu0 0
        %3625 = vmatmul.mubr.bf16.gmra.mrb[0].mxu0 %v3576
        %v3626 = vpop.f32.mrb[0].mxu0
        %v3627 = vadd.f32 0.0, %v3626
        %v3628 = vpop.f32.mrb[0].mxu0
        %v3629 = vpop.f32.mrb[0].mxu0
        %v3630 = vadd.f32 0.0, %v3629
        %v3631 = vpop.f32.mrb[0].mxu0
        %3632 = vmatprep.mubr.bf16.mxu0 0
        %3633 = vmatmul.mubr.bf16.gmra.mrb[0].mxu0 %v3579
        %v3634 = vpop.f32.mrb[0].mxu0
        %v3635 = vadd.f32 0.0, %v3634
        %v3636 = vpop.f32.mrb[0].mxu0
        %v3637 = vpop.f32.mrb[0].mxu0
        %v3638 = vadd.f32 0.0, %v3637
        %v3639 = vpop.f32.mrb[0].mxu0
        %3640 = vmatprep.mubr.bf16.mxu0 0
        %3641 = vmatmul.mubr.bf16.gmra.mrb[0].mxu0 %v3582
        %v3642 = vpop.f32.mrb[0].mxu0
        %v3643 = vadd.f32 0.0, %v3642
        %v3644 = vpop.f32.mrb[0].mxu0
        %v3645 = vpop.f32.mrb[0].mxu0
        %v3646 = vadd.f32 0.0, %v3645
        %v3647 = vpop.f32.mrb[0].mxu0
        %3648 = vdwg.mxu0
        %v3649 = vadd.f32 %v3545, %v3619
        %v3650 = vadd.f32 %v3546, %v3622
        %v3651 = vadd.f32 %v3547, %v3627
        %v3652 = vadd.f32 %v3548, %v3630
        %v3653 = vadd.f32 %v3549, %v3635
        %v3654 = vadd.f32 %v3550, %v3638
        %v3655 = vadd.f32 %v3551, %v3643
        %v3656 = vadd.f32 %v3552, %v3646
        %v3657 = vld [vmem:[%s20] sm:$0x1]
        %v3659 = vlaneseq
        %v3660 = vshrl.u32 %v3659, 7
        %v3661 = vsub.s32 0, %v3660
        %v3662 = vrot.slane %v3657, %v3661
        %v3664 = vadd.f32 %v3649, %v3662
        %v3665 = vadd.f32 %v3650, %v3662
        %v3666 = vadd.f32 %v3651, %v3662
        %v3667 = vadd.f32 %v3652, %v3662
        %v3668 = vadd.f32 %v3653, %v3662
        %v3669 = vadd.f32 %v3654, %v3662
        %v3670 = vadd.f32 %v3655, %v3662
        %v3671 = vadd.f32 %v3656, %v3662
        %v3672 = vmax.f32 %v3664, 0.0
        %v3673 = vmax.f32 %v3665, 0.0
        %v3674 = vmax.f32 %v3666, 0.0
        %v3675 = vmax.f32 %v3667, 0.0
        %v3676 = vmax.f32 %v3668, 0.0
        %v3677 = vmax.f32 %v3669, 0.0
        %v3678 = vmax.f32 %v3670, 0.0
        %v3679 = vmax.f32 %v3671, 0.0
        %v3680 = vld [vmem:[%s21] sm:$0x1]
        %v3682 = vlaneseq
        %v3683 = vshrl.u32 %v3682, 7
        %v3684 = vsub.s32 0, %v3683
        %v3685 = vrot.slane %v3680, %v3684
        %v3687 = vmul.f32 %v3672, %v3685
        %v3688 = vmul.f32 %v3673, %v3685
        %v3689 = vmul.f32 %v3674, %v3685
        %v3690 = vmul.f32 %v3675, %v3685
        %v3691 = vmul.f32 %v3676, %v3685
        %v3692 = vmul.f32 %v3677, %v3685
        %v3693 = vmul.f32 %v3678, %v3685
        %v3694 = vmul.f32 %v3679, %v3685
        %v3695 = vld [vmem:[%s22] sm:$0x1]
        %v3697 = vlaneseq
        %v3698 = vshrl.u32 %v3697, 7
        %v3699 = vsub.s32 0, %v3698
        %v3700 = vrot.slane %v3695, %v3699
        %v3702 = vadd.f32 %v3687, %v3700
        %v3703 = vadd.f32 %v3688, %v3700
        %v3704 = vadd.f32 %v3689, %v3700
        %v3705 = vadd.f32 %v3690, %v3700
        %v3706 = vadd.f32 %v3691, %v3700
        %v3707 = vadd.f32 %v3692, %v3700
        %v3708 = vadd.f32 %v3693, %v3700
        %v3709 = vadd.f32 %v3694, %v3700
        %v3710 = vld [vmem:[#allocation17] sm:$0xff]
        %v3711 = vld [vmem:[#allocation17 + $0x8] sm:$0xff]
        %v3712 = vld [vmem:[#allocation17 + $0x10] sm:$0xff]
        %v3713 = vld [vmem:[#allocation17 + $0x18] sm:$0xff]
        %v3714 = vpack.c.bf16 %v3711, %v3710
        %v3715 = vpack.c.bf16 %v3713, %v3712
        %v3716 = vpack.c.bf16 %v3703, %v3702
        %v3717 = vpack.c.bf16 %v3705, %v3704
        %v3718 = vpack.c.bf16 %v3707, %v3706
        %v3719 = vpack.c.bf16 %v3709, %v3708
        %v3720 = vld [vmem:[%s24] sm:$0xff]
        %v3721 = vld [vmem:[%s24 + $0x8] sm:$0xff]
        %v3722 = vld [vmem:[%s24 + $0x10] sm:$0xff]
        %v3723 = vld [vmem:[%s24 + $0x18] sm:$0xff]
        %3725 = vset.pattern.permute.xlu0 0
        %3726 = vperm.xlu0 %3725, %v3720
        %v3727 = vpop.permute.xlu0 %3726
        %3730 = vset.pattern.permute.xlu0 0
        %3731 = vperm.xlu0 %3730, %v3721
        %v3732 = vpop.permute.xlu0 %3731
        %3735 = vset.pattern.permute.xlu0 0
        %3736 = vperm.xlu0 %3735, %v3722
        %v3737 = vpop.permute.xlu0 %3736
        %3740 = vset.pattern.permute.xlu0 0
        %3741 = vperm.xlu0 %3740, %v3723
        %v3742 = vpop.permute.xlu0 %3741
        %vm3744 = vcmask 523264
        %v3746 = vsel %vm3744, %v3714, 0
        %v3749 = vsel %vm3744, %v3715, 0
        %3751 = vmatprep.subr.bf16.mxu0 0
        %3752 = vmatpush1.bf16.msra.mxu0 %v3716
        %3753 = vmatprep.subr.bf16.mxu0 0
        %3754 = vmatpush1.bf16.msra.mxu0 %v3717
        %3755 = vmatprep.subr.bf16.mxu0 0
        %3756 = vmatpush1.bf16.msra.mxu0 %v3718
        %3757 = vmatprep.subr.bf16.mxu0 0
        %3758 = vmatpush1.bf16.msra.mxu0 %v3719
        %3759 = vmatprep.subr.bf16.mxu0 0
        %3760 = vmatpush1.bf16.msra.mxu0 0
        %3761 = vmatprep.subr.bf16.mxu0 0
        %3762 = vmatpush1.bf16.msra.mxu0 0
        %3763 = vmatprep.subr.bf16.mxu0 0
        %3764 = vmatpush1.bf16.msra.mxu0 0
        %3765 = vmatprep.subr.bf16.mxu0 0
        %3766 = vmatpush1.bf16.msra.mxu0 0
        %3767 = vmatprep.subr.bf16.mxu0 0
        %3768 = vmatpush1.bf16.msra.mxu0 0
        %3769 = vmatprep.subr.bf16.mxu0 0
        %3770 = vmatpush1.bf16.msra.mxu0 0
        %3771 = vmatprep.subr.bf16.mxu0 0
        %3772 = vmatpush1.bf16.msra.mxu0 0
        %3773 = vmatprep.subr.bf16.mxu0 0
        %3774 = vmatpush1.bf16.msra.mxu0 0
        %3775 = vmatprep.subr.bf16.mxu0 0
        %3776 = vmatpush1.bf16.msra.mxu0 0
        %3777 = vmatprep.subr.bf16.mxu0 0
        %3778 = vmatpush1.bf16.msra.mxu0 0
        %3779 = vmatprep.subr.bf16.mxu0 0
        %3780 = vmatpush1.bf16.msra.mxu0 0
        %3781 = vmatprep.subr.bf16.mxu0 0
        %3782 = vmatpush1.bf16.msra.mxu0 0
        %3783 = vmatprep.mubr.bf16.mxu0 0
        %3784 = vmatmul.mubr.bf16.gmra.mrb[0].mxu0 %v3746
        %v3785 = vpop.f32.mrb[0].mxu0
        %v3786 = vadd.f32 %v3727, %v3785
        %v3787 = vpop.f32.mrb[0].mxu0
        %v3788 = vpop.f32.mrb[0].mxu0
        %v3789 = vadd.f32 %v3732, %v3788
        %v3790 = vpop.f32.mrb[0].mxu0
        %3791 = vmatprep.mubr.bf16.mxu0 0
        %3792 = vmatmul.mubr.bf16.gmra.mrb[0].mxu0 %v3749
        %v3793 = vpop.f32.mrb[0].mxu0
        %v3794 = vadd.f32 %v3737, %v3793
        %v3795 = vpop.f32.mrb[0].mxu0
        %v3796 = vpop.f32.mrb[0].mxu0
        %v3797 = vadd.f32 %v3742, %v3796
        %v3798 = vpop.f32.mrb[0].mxu0
        %3799 = vdwg.mxu0
        %3800 = vst.msk [vmem:[%s940] sm:$0xff] %vm1090, %v3786
        %3801 = vst.msk [vmem:[%s940 + $0x8] sm:$0xff] %vm1090, %v3789
        %3802 = vst.msk [vmem:[%s940 + $0x10] sm:$0xff] %vm1090, %v3794
        %3803 = vst.msk [vmem:[%s940 + $0x18] sm:$0xff] %vm1090, %v3797
        %p3804 = scmp.lt.s32.totalorder %s46, 1
        %s3805 = scalar_select %p3804, %s46, 1
        %s3806 = smul.addr %s3805, 4
        %s3807 = smul.addr %s3806, 8
        %s3808 = scalar_lea.vmem %s25, %s3807
        // Predicated region
        $region161: #{weighted_graph_model_forward.2} parent=119 // pred_check
          %p3809 = pneg %p599
        $region162: #{weighted_graph_model_forward.2} parent=119 // pred_check_branch
          %3811 = sbr.rel (%p3809) target = $region164
        $region163: #{weighted_graph_model_forward.2} parent=119 // pred_region
          _
        $region164: #{weighted_graph_model_forward.2} parent=119 // pred_fallthru
          _
      $region120: #{weighted_graph_model_forward.2} parent=5 // pred_fallthru
        _
      %p3812 = scmp.le.s32.totalorder 2, %s41
      // Predicated region
      $region165: #{weighted_graph_model_forward.2} parent=5 // pred_check
        %p3813 = pneg %p3812
      $region166: #{weighted_graph_model_forward.2} parent=5 // pred_check_branch
        %3815 = sbr.rel (%p3813) target = $region168
      $region167: #{weighted_graph_model_forward.2} parent=5 // pred_region
        %s3816 = ssub.s32 %s41, 2
        // Predicated region
        $region169: #{weighted_graph_model_forward.2} parent=167 // pred_check
          %p3817 = pneg %p605
        $region170: #{weighted_graph_model_forward.2} parent=167 // pred_check_branch
          %3819 = sbr.rel (%p3817) target = $region172
        $region171: #{weighted_graph_model_forward.2} parent=167 // pred_region
          %p3820 = scmp.lt.s32.totalorder %s47, 1
          %s3821 = scalar_select %p3820, %s47, 1
          %s3822 = smul.addr %s3821, 4
          %s3823 = smul.addr %s3822, 8
          %s3824 = scalar_lea.vmem %s25, %s3823
        $region172: #{weighted_graph_model_forward.2} parent=167 // pred_fallthru
          _
      $region168: #{weighted_graph_model_forward.2} parent=5 // pred_fallthru
        _
    $region6: #{weighted_graph_model_forward.2} parent=1 // loop_footer
      %s45 = sadd.s32 1, %s41
    $region7: #{weighted_graph_model_forward.2} parent=1 // loop_footer_branch
      %40 = sbr.rel target = $region3
    $region8: #{weighted_graph_model_forward.2} parent=1 // loop_exit
      _
    %3825 = vsyncpa [#allocation4], 1
    %s3826 = scalar_lea.sflag [#allocation4], 1
    %3827 = vsyncpa %s3826, 1
    %3828 = vsyncpa [#allocation6], 1
    %s3829 = scalar_lea.sflag [#allocation6], 1
    %3830 = vsyncpa %s3829, 1
    %3831 = vsyncpa [#allocation9], 1
    %3832 = vsyncpa [#allocation12], 1
    %3833 = vsyncpa [#allocation15], 1
    %3834 = vsyncpa [#allocation18], 1

</llo_original>
